<compile_context>
chip_gen: v6e
topology: v6e:2x2x1
jax: 0.10.0
libtpu: 0.0.40
codegen_flags: <defaults>
</compile_context>

<pallas_src>
import functools

import jax
import jax.numpy as jnp
from jax.experimental import pallas as pl
from jax.experimental.pallas import tpu as pltpu


# ----------------------------- in-kernel helpers -----------------------------

def _layernorm(x, gamma, beta, eps=1e-5):
    # matches torch.nn.LayerNorm(dim) defaults (eps=1e-5, elementwise affine)
    mean = jnp.mean(x, axis=-1, keepdims=True)
    var = jnp.mean((x - mean) ** 2, axis=-1, keepdims=True)
    return (x - mean) * jax.lax.rsqrt(var + eps) * gamma + beta


def _gelu_tanh(x):
    # tanh-approximation GELU (routes through the EUP transcendental slot).
    c = 0.7978845608028654  # sqrt(2/pi)
    return 0.5 * x * (1.0 + jnp.tanh(c * (x + 0.044715 * x * x * x)))


# --------------------------------- kernel ------------------------------------

def block_kernel(x_ref,
                 g1_ref, b1_ref,
                 wqkv_ref,
                 wproj_ref, bproj_ref,
                 g2_ref, b2_ref,
                 w1_ref, bb1_ref,
                 w2_ref, bb2_ref,
                 out_ref,
                 *, num_heads):
    x = x_ref[...]                       # (N, C) f32 (batch dim squeezed)
    N, C = x.shape
    hd = C // num_heads
    scale = hd ** -0.5                   # default qk_scale = head_dim ** -0.5

    bf16 = jnp.bfloat16
    f32 = jnp.float32

    # ---------------- attention branch ----------------
    xn = _layernorm(x, g1_ref[...], b1_ref[...])

    # qkv = Linear(C, 3C, bias=False); weight pre-transposed to (C, 3C), bf16
    qkv = jnp.dot(xn.astype(bf16), wqkv_ref[...],
                  preferred_element_type=f32)            # (N, 3C) f32
    q = qkv[:, 0 * C:1 * C] * scale
    k = qkv[:, 1 * C:2 * C]
    v = qkv[:, 2 * C:3 * C]

    wproj = wproj_ref[...]               # (C, C) bf16, loaded once

    # Fuse the per-head output with its slice of the projection matrix:
    # acc accumulates attn_out @ Wproj directly (no concatenate).
    acc = jnp.zeros((N, C), f32)
    for h in range(num_heads):           # static unroll over heads
        sl = slice(h * hd, (h + 1) * hd)
        qh = q[:, sl].astype(bf16)
        kh = k[:, sl].astype(bf16)
        vh = v[:, sl].astype(bf16)
        # s = (q*scale) @ k^T  -> (N, N), contract head_dim without transpose
        s = jax.lax.dot_general(qh, kh, (((1,), (1,)), ((), ())),
                                preferred_element_type=f32)
        s = s - jnp.max(s, axis=-1, keepdims=True)
        p = jnp.exp(s)
        p = p * pl.reciprocal(jnp.sum(p, axis=-1, keepdims=True), approx=True)
        oh = jnp.dot(p.astype(bf16), vh, preferred_element_type=f32)  # (N, hd)
        acc = acc + jnp.dot(oh.astype(bf16), wproj[sl, :],
                            preferred_element_type=f32)               # (N, C)

    x1 = x + acc + bproj_ref[...]        # first residual (proj bias included)

    # ------------------- MLP branch --------------------
    x1n = _layernorm(x1, g2_ref[...], b2_ref[...])
    h1 = jnp.dot(x1n.astype(bf16), w1_ref[...],
                 preferred_element_type=f32) + bb1_ref[...]
    h1 = _gelu_tanh(h1)
    y2 = jnp.dot(h1.astype(bf16), w2_ref[...],
                 preferred_element_type=f32) + bb2_ref[...]

    out_ref[...] = x1 + y2               # second residual


# --------------------------------- wrapper -----------------------------------

def block_forward(x, params, num_heads):
    B, N, C = x.shape
    H = params["w1"].shape[1]            # mlp hidden dim
    bf16 = jnp.bfloat16

    # Matmul weights live in VMEM as bf16 (f32 accumulation inside the kernel).
    wqkv = params["wqkv"].astype(bf16)
    wproj = params["wproj"].astype(bf16)
    w1 = params["w1"].astype(bf16)
    w2 = params["w2"].astype(bf16)

    # Grid-invariant operands: whole array resident in VMEM, single-buffered
    # (no pipeline double-buffering of the weight footprint).
    vmem = pl.BlockSpec(memory_space=pltpu.MemorySpace.VMEM)

    in_specs = [
        pl.BlockSpec((None, N, C), lambda b: (b, 0, 0)),   # x (one batch/step)
        vmem, vmem,                                        # norm1 gamma/beta
        vmem,                                              # qkv weight (C,3C)
        vmem, vmem,                                        # proj W, proj b
        vmem, vmem,                                        # norm2 gamma/beta
        vmem, vmem,                                        # fc1 W, b
        vmem, vmem,                                        # fc2 W, b
    ]
    out_specs = pl.BlockSpec((None, N, C), lambda b: (b, 0, 0))

    # --- VMEM budget (bytes): weights x1, x/out tiles x2 buffers, scratch ---
    weight_bytes = (C * 3 * C + C * C + C * H + H * C) * 2 + (6 * C + H) * 4
    act_bytes = N * C * 4 * 4                      # in + out tiles, 2 buffers
    scratch_bytes = (N * 3 * C + N * H + N * N + 2 * N * C) * 4
    est = weight_bytes + act_bytes + scratch_bytes
    vmem_limit = min(max(2 * est, 32 * 1024 * 1024), 64 * 1024 * 1024)

    # --- advisory cost estimate ---
    flops = B * (2 * N * C * 3 * C      # qkv
                 + 4 * N * N * C        # scores + p@v over all heads
                 + 2 * N * C * C        # proj (fused per-head)
                 + 4 * N * C * H)       # fc1 + fc2
    transcendentals = B * (num_heads * N * N + N * H)
    bytes_accessed = 2 * B * N * C * 4 + weight_bytes
    cost = pl.CostEstimate(flops=flops, transcendentals=transcendentals,
                           bytes_accessed=bytes_accessed)

    kernel = functools.partial(block_kernel, num_heads=num_heads)
    return pl.pallas_call(
        kernel,
        out_shape=jax.ShapeDtypeStruct((B, N, C), jnp.float32),
        grid=(B,),
        in_specs=in_specs,
        out_specs=out_specs,
        compiler_params=pltpu.CompilerParams(
            dimension_semantics=("parallel",),
            vmem_limit_bytes=vmem_limit),
        cost_estimate=cost,
    )(x,
      params["g1"], params["b1"],
      wqkv,
      wproj, params["bproj"],
      params["g2"], params["b2"],
      w1, params["bb1"],
      w2, params["bb2"])
    # TODO(synk): for very long sequences add a token-tile grid axis (flash-style
    # Q tiling + tiled MLP) to shrink the (N, 4C) hidden intermediate.


# ---------------------------- pure-JAX reference ------------------------------

def block_reference(x, p, num_heads):
    # f32 reference with exact (erf) GELU, matching the PyTorch module.
    def ln(z, g, b):
        m = z.mean(-1, keepdims=True)
        v = ((z - m) ** 2).mean(-1, keepdims=True)
        return (z - m) / jnp.sqrt(v + 1e-5) * g + b

    B, N, C = x.shape
    hd = C // num_heads
    scale = hd ** -0.5

    xn = ln(x, p["g1"], p["b1"])
    qkv = xn @ p["wqkv"]
    qkv = qkv.reshape(B, N, 3, num_heads, hd).transpose(2, 0, 3, 1, 4)
    q, k, v = qkv[0], qkv[1], qkv[2]                    # (B, H, N, hd)
    attn = (q * scale) @ jnp.swapaxes(k, -2, -1)
    attn = jax.nn.softmax(attn, axis=-1)
    out = (attn @ v).transpose(0, 2, 1, 3).reshape(B, N, C)
    out = out @ p["wproj"] + p["bproj"].reshape(C)
    x1 = x + out

    x1n = ln(x1, p["g2"], p["b2"])
    h = jax.nn.gelu(x1n @ p["w1"] + p["bb1"].reshape(-1), approximate=False)
    y = h @ p["w2"] + p["bb2"].reshape(C)
    return x1 + y


# ----------------------------------- main -------------------------------------

if __name__ == "__main__":
    # Lane-dense shapes (C multiple of 128) so the test exercises real layouts,
    # while staying small.  B=2 keeps the parallel batch axis even for megacore.
    B, N, C = 2, 128, 128
    num_heads = 4
    mlp_hidden = int(C * 4.0)

    key = jax.random.PRNGKey(0)
    keys = jax.random.split(key, 8)

    params = {
        # LayerNorm params
        "g1": jnp.ones((1, C), jnp.float32),
        "b1": jnp.zeros((1, C), jnp.float32),
        "g2": jnp.ones((1, C), jnp.float32),
        "b2": jnp.zeros((1, C), jnp.float32),
        # Attention: qkv (bias=False, default), proj (with bias)
        "wqkv": 0.05 * jax.random.normal(keys[0], (C, 3 * C), jnp.float32),
        "wproj": 0.05 * jax.random.normal(keys[1], (C, C), jnp.float32),
        "bproj": 0.01 * jax.random.normal(keys[2], (1, C), jnp.float32),
        # MLP
        "w1": 0.05 * jax.random.normal(keys[3], (C, mlp_hidden), jnp.float32),
        "bb1": 0.01 * jax.random.normal(keys[4], (1, mlp_hidden), jnp.float32),
        "w2": 0.05 * jax.random.normal(keys[5], (mlp_hidden, C), jnp.float32),
        "bb2": 0.01 * jax.random.normal(keys[6], (1, C), jnp.float32),
    }

    x = jax.random.normal(keys[7], (B, N, C), jnp.float32)

    out = jax.block_until_ready(block_forward(x, params, num_heads))
    ref = jax.block_until_ready(block_reference(x, params, num_heads))

    err = float(jnp.max(jnp.abs(out - ref)))
    # bf16 matmul operands + tanh-GELU vs. exact f32/erf reference -> ~1e-2.
    assert err < 5e-2, f"max abs error too large: {err}"

    print("KERNEL_OK")
</pallas_src>

<mosaic_0001>
module attributes {stable_mosaic.version = 11 : i64} {
  func.func @block_kernel(%arg0: i32, %arg1: memref<1x128x128xf32, #tpu.memory_space<vmem>>, %arg2: memref<1x128xf32, #tpu.memory_space<vmem>>, %arg3: memref<1x128xf32, #tpu.memory_space<vmem>>, %arg4: memref<128x384xbf16, #tpu.memory_space<vmem>>, %arg5: memref<128x128xbf16, #tpu.memory_space<vmem>>, %arg6: memref<1x128xf32, #tpu.memory_space<vmem>>, %arg7: memref<1x128xf32, #tpu.memory_space<vmem>>, %arg8: memref<1x128xf32, #tpu.memory_space<vmem>>, %arg9: memref<128x512xbf16, #tpu.memory_space<vmem>>, %arg10: memref<1x512xf32, #tpu.memory_space<vmem>>, %arg11: memref<512x128xbf16, #tpu.memory_space<vmem>>, %arg12: memref<1x128xf32, #tpu.memory_space<vmem>>, %arg13: memref<1x128x128xf32, #tpu.memory_space<vmem>>) attributes {dimension_semantics = [#tpu.dimension_semantics<parallel>], iteration_bounds = array<i64: 2>, scalar_prefetch = 0 : i64, scratch_operands = 0 : i64, tpu.core_type = #tpu.core_type<tc>, window_params = [{transform_indices = @transform_0, window_bounds = array<i64: 1, 128, 128>}, {pipeline_mode = #tpu.pipeline_mode<synchronous>, transform_indices = @transform_1, window_bounds = array<i64: 1, 128>}, {pipeline_mode = #tpu.pipeline_mode<synchronous>, transform_indices = @transform_2, window_bounds = array<i64: 1, 128>}, {pipeline_mode = #tpu.pipeline_mode<synchronous>, transform_indices = @transform_3, window_bounds = array<i64: 128, 384>}, {pipeline_mode = #tpu.pipeline_mode<synchronous>, transform_indices = @transform_4, window_bounds = array<i64: 128, 128>}, {pipeline_mode = #tpu.pipeline_mode<synchronous>, transform_indices = @transform_5, window_bounds = array<i64: 1, 128>}, {pipeline_mode = #tpu.pipeline_mode<synchronous>, transform_indices = @transform_6, window_bounds = array<i64: 1, 128>}, {pipeline_mode = #tpu.pipeline_mode<synchronous>, transform_indices = @transform_7, window_bounds = array<i64: 1, 128>}, {pipeline_mode = #tpu.pipeline_mode<synchronous>, transform_indices = @transform_8, window_bounds = array<i64: 128, 512>}, {pipeline_mode = #tpu.pipeline_mode<synchronous>, transform_indices = @transform_9, window_bounds = array<i64: 1, 512>}, {pipeline_mode = #tpu.pipeline_mode<synchronous>, transform_indices = @transform_10, window_bounds = array<i64: 512, 128>}, {pipeline_mode = #tpu.pipeline_mode<synchronous>, transform_indices = @transform_11, window_bounds = array<i64: 1, 128>}, {transform_indices = @transform_12, window_bounds = array<i64: 1, 128, 128>}]} {
    %c0 = arith.constant 0 : index
    %c0_0 = arith.constant 0 : index
    %c0_1 = arith.constant 0 : index
    %0 = vector.load %arg1[%c0, %c0_0, %c0_1] : memref<1x128x128xf32, #tpu.memory_space<vmem>>, vector<1x128x128xf32>
    %1 = vector.shape_cast %0 : vector<1x128x128xf32> to vector<128x128xf32>
    %c0_2 = arith.constant 0 : index
    %c0_3 = arith.constant 0 : index
    %2 = vector.load %arg2[%c0_2, %c0_3] : memref<1x128xf32, #tpu.memory_space<vmem>>, vector<1x128xf32>
    %c0_4 = arith.constant 0 : index
    %c0_5 = arith.constant 0 : index
    %3 = vector.load %arg3[%c0_4, %c0_5] : memref<1x128xf32, #tpu.memory_space<vmem>>, vector<1x128xf32>
    %cst = arith.constant dense<0.000000e+00> : vector<128xf32>
    %4 = vector.multi_reduction <add>, %1, %cst [1] : vector<128x128xf32> to vector<128xf32>
    %5 = vector.shape_cast %4 : vector<128xf32> to vector<128x1xf32>
    %cst_6 = arith.constant 1.280000e+02 : f32
    %6 = vector.broadcast %cst_6 : f32 to vector<128x1xf32>
    %7 = arith.divf %5, %6 : vector<128x1xf32>
    %8 = vector.broadcast %7 : vector<128x1xf32> to vector<128x128xf32>
    %9 = arith.subf %1, %8 : vector<128x128xf32>
    %10 = arith.mulf %9, %9 : vector<128x128xf32>
    %cst_7 = arith.constant dense<0.000000e+00> : vector<128xf32>
    %11 = vector.multi_reduction <add>, %10, %cst_7 [1] : vector<128x128xf32> to vector<128xf32>
    %12 = vector.shape_cast %11 : vector<128xf32> to vector<128x1xf32>
    %cst_8 = arith.constant 1.280000e+02 : f32
    %13 = vector.broadcast %cst_8 : f32 to vector<128x1xf32>
    %14 = arith.divf %12, %13 : vector<128x1xf32>
    %15 = vector.broadcast %7 : vector<128x1xf32> to vector<128x128xf32>
    %16 = arith.subf %1, %15 : vector<128x128xf32>
    %cst_9 = arith.constant 9.99999974E-6 : f32
    %17 = vector.broadcast %cst_9 : f32 to vector<128x1xf32>
    %18 = arith.addf %14, %17 : vector<128x1xf32>
    %19 = math.rsqrt %18 : vector<128x1xf32>
    %20 = vector.broadcast %19 : vector<128x1xf32> to vector<128x128xf32>
    %21 = arith.mulf %16, %20 : vector<128x128xf32>
    %22 = vector.broadcast %2 : vector<1x128xf32> to vector<128x128xf32>
    %23 = arith.mulf %21, %22 : vector<128x128xf32>
    %24 = vector.broadcast %3 : vector<1x128xf32> to vector<128x128xf32>
    %25 = arith.addf %23, %24 : vector<128x128xf32>
    %26 = arith.truncf %25 : vector<128x128xf32> to vector<128x128xbf16>
    %c0_10 = arith.constant 0 : index
    %c0_11 = arith.constant 0 : index
    %27 = vector.load %arg4[%c0_10, %c0_11] : memref<128x384xbf16, #tpu.memory_space<vmem>>, vector<128x384xbf16>
    %cst_12 = arith.constant dense<0.000000e+00> : vector<128x384xf32>
    %28 = tpu.matmul %26, %27, %cst_12 {dimension_numbers = #tpu.dot_dimension_numbers<[1], [0], [0], [1], [0, 0, 1, 1], [], []>} : vector<128x128xbf16>, vector<128x384xbf16>, vector<128x384xf32> -> vector<128x384xf32>
    %29 = vector.extract_strided_slice %28 {offsets = [0, 0], sizes = [128, 128], strides = [1, 1]} : vector<128x384xf32> to vector<128x128xf32>
    %cst_13 = arith.constant 0.176776692 : f32
    %30 = vector.broadcast %cst_13 : f32 to vector<128x128xf32>
    %31 = arith.mulf %29, %30 : vector<128x128xf32>
    %32 = vector.extract_strided_slice %28 {offsets = [0, 128], sizes = [128, 128], strides = [1, 1]} : vector<128x384xf32> to vector<128x128xf32>
    %33 = vector.extract_strided_slice %28 {offsets = [0, 256], sizes = [128, 128], strides = [1, 1]} : vector<128x384xf32> to vector<128x128xf32>
    %c0_14 = arith.constant 0 : index
    %c0_15 = arith.constant 0 : index
    %34 = vector.load %arg5[%c0_14, %c0_15] : memref<128x128xbf16, #tpu.memory_space<vmem>>, vector<128x128xbf16>
    %cst_16 = arith.constant 0.000000e+00 : f32
    %35 = vector.broadcast %cst_16 : f32 to vector<128x128xf32>
    %36 = vector.extract_strided_slice %31 {offsets = [0, 0], sizes = [128, 32], strides = [1, 1]} : vector<128x128xf32> to vector<128x32xf32>
    %37 = arith.truncf %36 : vector<128x32xf32> to vector<128x32xbf16>
    %38 = vector.extract_strided_slice %32 {offsets = [0, 0], sizes = [128, 32], strides = [1, 1]} : vector<128x128xf32> to vector<128x32xf32>
    %39 = arith.truncf %38 : vector<128x32xf32> to vector<128x32xbf16>
    %40 = vector.extract_strided_slice %33 {offsets = [0, 0], sizes = [128, 32], strides = [1, 1]} : vector<128x128xf32> to vector<128x32xf32>
    %41 = arith.truncf %40 : vector<128x32xf32> to vector<128x32xbf16>
    %cst_17 = arith.constant dense<0.000000e+00> : vector<128x128xf32>
    %42 = tpu.matmul %37, %39, %cst_17 {dimension_numbers = #tpu.dot_dimension_numbers<[1], [1], [0], [0], [0, 0, 1, 0], [], []>} : vector<128x32xbf16>, vector<128x32xbf16>, vector<128x128xf32> -> vector<128x128xf32>
    %cst_18 = arith.constant dense<0xFF800000> : vector<128xf32>
    %43 = vector.multi_reduction <maximumf>, %42, %cst_18 [1] : vector<128x128xf32> to vector<128xf32>
    %44 = vector.shape_cast %43 : vector<128xf32> to vector<128x1xf32>
    %45 = vector.broadcast %44 : vector<128x1xf32> to vector<128x128xf32>
    %46 = arith.subf %42, %45 : vector<128x128xf32>
    %47 = math.exp %46 : vector<128x128xf32>
    %cst_19 = arith.constant dense<0.000000e+00> : vector<128xf32>
    %48 = vector.multi_reduction <add>, %47, %cst_19 [1] : vector<128x128xf32> to vector<128xf32>
    %49 = vector.shape_cast %48 : vector<128xf32> to vector<128x1xf32>
    %50 = tpu.reciprocal %49 {approx = true} : vector<128x1xf32> -> vector<128x1xf32>
    %51 = vector.broadcast %50 : vector<128x1xf32> to vector<128x128xf32>
    %52 = arith.mulf %47, %51 : vector<128x128xf32>
    %53 = arith.truncf %52 : vector<128x128xf32> to vector<128x128xbf16>
    %cst_20 = arith.constant dense<0.000000e+00> : vector<128x32xf32>
    %54 = tpu.matmul %53, %41, %cst_20 {dimension_numbers = #tpu.dot_dimension_numbers<[1], [0], [0], [1], [0, 0, 1, 1], [], []>} : vector<128x128xbf16>, vector<128x32xbf16>, vector<128x32xf32> -> vector<128x32xf32>
    %55 = arith.truncf %54 : vector<128x32xf32> to vector<128x32xbf16>
    %56 = vector.extract_strided_slice %34 {offsets = [0, 0], sizes = [32, 128], strides = [1, 1]} : vector<128x128xbf16> to vector<32x128xbf16>
    %cst_21 = arith.constant dense<0.000000e+00> : vector<128x128xf32>
    %57 = tpu.matmul %55, %56, %cst_21 {dimension_numbers = #tpu.dot_dimension_numbers<[1], [0], [0], [1], [0, 0, 1, 1], [], []>} : vector<128x32xbf16>, vector<32x128xbf16>, vector<128x128xf32> -> vector<128x128xf32>
    %58 = arith.addf %35, %57 : vector<128x128xf32>
    %59 = vector.extract_strided_slice %31 {offsets = [0, 32], sizes = [128, 32], strides = [1, 1]} : vector<128x128xf32> to vector<128x32xf32>
    %60 = arith.truncf %59 : vector<128x32xf32> to vector<128x32xbf16>
    %61 = vector.extract_strided_slice %32 {offsets = [0, 32], sizes = [128, 32], strides = [1, 1]} : vector<128x128xf32> to vector<128x32xf32>
    %62 = arith.truncf %61 : vector<128x32xf32> to vector<128x32xbf16>
    %63 = vector.extract_strided_slice %33 {offsets = [0, 32], sizes = [128, 32], strides = [1, 1]} : vector<128x128xf32> to vector<128x32xf32>
    %64 = arith.truncf %63 : vector<128x32xf32> to vector<128x32xbf16>
    %cst_22 = arith.constant dense<0.000000e+00> : vector<128x128xf32>
    %65 = tpu.matmul %60, %62, %cst_22 {dimension_numbers = #tpu.dot_dimension_numbers<[1], [1], [0], [0], [0, 0, 1, 0], [], []>} : vector<128x32xbf16>, vector<128x32xbf16>, vector<128x128xf32> -> vector<128x128xf32>
    %cst_23 = arith.constant dense<0xFF800000> : vector<128xf32>
    %66 = vector.multi_reduction <maximumf>, %65, %cst_23 [1] : vector<128x128xf32> to vector<128xf32>
    %67 = vector.shape_cast %66 : vector<128xf32> to vector<128x1xf32>
    %68 = vector.broadcast %67 : vector<128x1xf32> to vector<128x128xf32>
    %69 = arith.subf %65, %68 : vector<128x128xf32>
    %70 = math.exp %69 : vector<128x128xf32>
    %cst_24 = arith.constant dense<0.000000e+00> : vector<128xf32>
    %71 = vector.multi_reduction <add>, %70, %cst_24 [1] : vector<128x128xf32> to vector<128xf32>
    %72 = vector.shape_cast %71 : vector<128xf32> to vector<128x1xf32>
    %73 = tpu.reciprocal %72 {approx = true} : vector<128x1xf32> -> vector<128x1xf32>
    %74 = vector.broadcast %73 : vector<128x1xf32> to vector<128x128xf32>
    %75 = arith.mulf %70, %74 : vector<128x128xf32>
    %76 = arith.truncf %75 : vector<128x128xf32> to vector<128x128xbf16>
    %cst_25 = arith.constant dense<0.000000e+00> : vector<128x32xf32>
    %77 = tpu.matmul %76, %64, %cst_25 {dimension_numbers = #tpu.dot_dimension_numbers<[1], [0], [0], [1], [0, 0, 1, 1], [], []>} : vector<128x128xbf16>, vector<128x32xbf16>, vector<128x32xf32> -> vector<128x32xf32>
    %78 = arith.truncf %77 : vector<128x32xf32> to vector<128x32xbf16>
    %79 = vector.extract_strided_slice %34 {offsets = [32, 0], sizes = [32, 128], strides = [1, 1]} : vector<128x128xbf16> to vector<32x128xbf16>
    %cst_26 = arith.constant dense<0.000000e+00> : vector<128x128xf32>
    %80 = tpu.matmul %78, %79, %cst_26 {dimension_numbers = #tpu.dot_dimension_numbers<[1], [0], [0], [1], [0, 0, 1, 1], [], []>} : vector<128x32xbf16>, vector<32x128xbf16>, vector<128x128xf32> -> vector<128x128xf32>
    %81 = arith.addf %58, %80 : vector<128x128xf32>
    %82 = vector.extract_strided_slice %31 {offsets = [0, 64], sizes = [128, 32], strides = [1, 1]} : vector<128x128xf32> to vector<128x32xf32>
    %83 = arith.truncf %82 : vector<128x32xf32> to vector<128x32xbf16>
    %84 = vector.extract_strided_slice %32 {offsets = [0, 64], sizes = [128, 32], strides = [1, 1]} : vector<128x128xf32> to vector<128x32xf32>
    %85 = arith.truncf %84 : vector<128x32xf32> to vector<128x32xbf16>
    %86 = vector.extract_strided_slice %33 {offsets = [0, 64], sizes = [128, 32], strides = [1, 1]} : vector<128x128xf32> to vector<128x32xf32>
    %87 = arith.truncf %86 : vector<128x32xf32> to vector<128x32xbf16>
    %cst_27 = arith.constant dense<0.000000e+00> : vector<128x128xf32>
    %88 = tpu.matmul %83, %85, %cst_27 {dimension_numbers = #tpu.dot_dimension_numbers<[1], [1], [0], [0], [0, 0, 1, 0], [], []>} : vector<128x32xbf16>, vector<128x32xbf16>, vector<128x128xf32> -> vector<128x128xf32>
    %cst_28 = arith.constant dense<0xFF800000> : vector<128xf32>
    %89 = vector.multi_reduction <maximumf>, %88, %cst_28 [1] : vector<128x128xf32> to vector<128xf32>
    %90 = vector.shape_cast %89 : vector<128xf32> to vector<128x1xf32>
    %91 = vector.broadcast %90 : vector<128x1xf32> to vector<128x128xf32>
    %92 = arith.subf %88, %91 : vector<128x128xf32>
    %93 = math.exp %92 : vector<128x128xf32>
    %cst_29 = arith.constant dense<0.000000e+00> : vector<128xf32>
    %94 = vector.multi_reduction <add>, %93, %cst_29 [1] : vector<128x128xf32> to vector<128xf32>
    %95 = vector.shape_cast %94 : vector<128xf32> to vector<128x1xf32>
    %96 = tpu.reciprocal %95 {approx = true} : vector<128x1xf32> -> vector<128x1xf32>
    %97 = vector.broadcast %96 : vector<128x1xf32> to vector<128x128xf32>
    %98 = arith.mulf %93, %97 : vector<128x128xf32>
    %99 = arith.truncf %98 : vector<128x128xf32> to vector<128x128xbf16>
    %cst_30 = arith.constant dense<0.000000e+00> : vector<128x32xf32>
    %100 = tpu.matmul %99, %87, %cst_30 {dimension_numbers = #tpu.dot_dimension_numbers<[1], [0], [0], [1], [0, 0, 1, 1], [], []>} : vector<128x128xbf16>, vector<128x32xbf16>, vector<128x32xf32> -> vector<128x32xf32>
    %101 = arith.truncf %100 : vector<128x32xf32> to vector<128x32xbf16>
    %102 = vector.extract_strided_slice %34 {offsets = [64, 0], sizes = [32, 128], strides = [1, 1]} : vector<128x128xbf16> to vector<32x128xbf16>
    %cst_31 = arith.constant dense<0.000000e+00> : vector<128x128xf32>
    %103 = tpu.matmul %101, %102, %cst_31 {dimension_numbers = #tpu.dot_dimension_numbers<[1], [0], [0], [1], [0, 0, 1, 1], [], []>} : vector<128x32xbf16>, vector<32x128xbf16>, vector<128x128xf32> -> vector<128x128xf32>
    %104 = arith.addf %81, %103 : vector<128x128xf32>
    %105 = vector.extract_strided_slice %31 {offsets = [0, 96], sizes = [128, 32], strides = [1, 1]} : vector<128x128xf32> to vector<128x32xf32>
    %106 = arith.truncf %105 : vector<128x32xf32> to vector<128x32xbf16>
    %107 = vector.extract_strided_slice %32 {offsets = [0, 96], sizes = [128, 32], strides = [1, 1]} : vector<128x128xf32> to vector<128x32xf32>
    %108 = arith.truncf %107 : vector<128x32xf32> to vector<128x32xbf16>
    %109 = vector.extract_strided_slice %33 {offsets = [0, 96], sizes = [128, 32], strides = [1, 1]} : vector<128x128xf32> to vector<128x32xf32>
    %110 = arith.truncf %109 : vector<128x32xf32> to vector<128x32xbf16>
    %cst_32 = arith.constant dense<0.000000e+00> : vector<128x128xf32>
    %111 = tpu.matmul %106, %108, %cst_32 {dimension_numbers = #tpu.dot_dimension_numbers<[1], [1], [0], [0], [0, 0, 1, 0], [], []>} : vector<128x32xbf16>, vector<128x32xbf16>, vector<128x128xf32> -> vector<128x128xf32>
    %cst_33 = arith.constant dense<0xFF800000> : vector<128xf32>
    %112 = vector.multi_reduction <maximumf>, %111, %cst_33 [1] : vector<128x128xf32> to vector<128xf32>
    %113 = vector.shape_cast %112 : vector<128xf32> to vector<128x1xf32>
    %114 = vector.broadcast %113 : vector<128x1xf32> to vector<128x128xf32>
    %115 = arith.subf %111, %114 : vector<128x128xf32>
    %116 = math.exp %115 : vector<128x128xf32>
    %cst_34 = arith.constant dense<0.000000e+00> : vector<128xf32>
    %117 = vector.multi_reduction <add>, %116, %cst_34 [1] : vector<128x128xf32> to vector<128xf32>
    %118 = vector.shape_cast %117 : vector<128xf32> to vector<128x1xf32>
    %119 = tpu.reciprocal %118 {approx = true} : vector<128x1xf32> -> vector<128x1xf32>
    %120 = vector.broadcast %119 : vector<128x1xf32> to vector<128x128xf32>
    %121 = arith.mulf %116, %120 : vector<128x128xf32>
    %122 = arith.truncf %121 : vector<128x128xf32> to vector<128x128xbf16>
    %cst_35 = arith.constant dense<0.000000e+00> : vector<128x32xf32>
    %123 = tpu.matmul %122, %110, %cst_35 {dimension_numbers = #tpu.dot_dimension_numbers<[1], [0], [0], [1], [0, 0, 1, 1], [], []>} : vector<128x128xbf16>, vector<128x32xbf16>, vector<128x32xf32> -> vector<128x32xf32>
    %124 = arith.truncf %123 : vector<128x32xf32> to vector<128x32xbf16>
    %125 = vector.extract_strided_slice %34 {offsets = [96, 0], sizes = [32, 128], strides = [1, 1]} : vector<128x128xbf16> to vector<32x128xbf16>
    %cst_36 = arith.constant dense<0.000000e+00> : vector<128x128xf32>
    %126 = tpu.matmul %124, %125, %cst_36 {dimension_numbers = #tpu.dot_dimension_numbers<[1], [0], [0], [1], [0, 0, 1, 1], [], []>} : vector<128x32xbf16>, vector<32x128xbf16>, vector<128x128xf32> -> vector<128x128xf32>
    %127 = arith.addf %104, %126 : vector<128x128xf32>
    %128 = arith.addf %1, %127 : vector<128x128xf32>
    %c0_37 = arith.constant 0 : index
    %c0_38 = arith.constant 0 : index
    %129 = vector.load %arg6[%c0_37, %c0_38] : memref<1x128xf32, #tpu.memory_space<vmem>>, vector<1x128xf32>
    %130 = vector.broadcast %129 : vector<1x128xf32> to vector<128x128xf32>
    %131 = arith.addf %128, %130 : vector<128x128xf32>
    %c0_39 = arith.constant 0 : index
    %c0_40 = arith.constant 0 : index
    %132 = vector.load %arg7[%c0_39, %c0_40] : memref<1x128xf32, #tpu.memory_space<vmem>>, vector<1x128xf32>
    %c0_41 = arith.constant 0 : index
    %c0_42 = arith.constant 0 : index
    %133 = vector.load %arg8[%c0_41, %c0_42] : memref<1x128xf32, #tpu.memory_space<vmem>>, vector<1x128xf32>
    %cst_43 = arith.constant dense<0.000000e+00> : vector<128xf32>
    %134 = vector.multi_reduction <add>, %131, %cst_43 [1] : vector<128x128xf32> to vector<128xf32>
    %135 = vector.shape_cast %134 : vector<128xf32> to vector<128x1xf32>
    %cst_44 = arith.constant 1.280000e+02 : f32
    %136 = vector.broadcast %cst_44 : f32 to vector<128x1xf32>
    %137 = arith.divf %135, %136 : vector<128x1xf32>
    %138 = vector.broadcast %137 : vector<128x1xf32> to vector<128x128xf32>
    %139 = arith.subf %131, %138 : vector<128x128xf32>
    %140 = arith.mulf %139, %139 : vector<128x128xf32>
    %cst_45 = arith.constant dense<0.000000e+00> : vector<128xf32>
    %141 = vector.multi_reduction <add>, %140, %cst_45 [1] : vector<128x128xf32> to vector<128xf32>
    %142 = vector.shape_cast %141 : vector<128xf32> to vector<128x1xf32>
    %cst_46 = arith.constant 1.280000e+02 : f32
    %143 = vector.broadcast %cst_46 : f32 to vector<128x1xf32>
    %144 = arith.divf %142, %143 : vector<128x1xf32>
    %145 = vector.broadcast %137 : vector<128x1xf32> to vector<128x128xf32>
    %146 = arith.subf %131, %145 : vector<128x128xf32>
    %cst_47 = arith.constant 9.99999974E-6 : f32
    %147 = vector.broadcast %cst_47 : f32 to vector<128x1xf32>
    %148 = arith.addf %144, %147 : vector<128x1xf32>
    %149 = math.rsqrt %148 : vector<128x1xf32>
    %150 = vector.broadcast %149 : vector<128x1xf32> to vector<128x128xf32>
    %151 = arith.mulf %146, %150 : vector<128x128xf32>
    %152 = vector.broadcast %132 : vector<1x128xf32> to vector<128x128xf32>
    %153 = arith.mulf %151, %152 : vector<128x128xf32>
    %154 = vector.broadcast %133 : vector<1x128xf32> to vector<128x128xf32>
    %155 = arith.addf %153, %154 : vector<128x128xf32>
    %156 = arith.truncf %155 : vector<128x128xf32> to vector<128x128xbf16>
    %c0_48 = arith.constant 0 : index
    %c0_49 = arith.constant 0 : index
    %157 = vector.load %arg9[%c0_48, %c0_49] : memref<128x512xbf16, #tpu.memory_space<vmem>>, vector<128x512xbf16>
    %cst_50 = arith.constant dense<0.000000e+00> : vector<128x512xf32>
    %158 = tpu.matmul %156, %157, %cst_50 {dimension_numbers = #tpu.dot_dimension_numbers<[1], [0], [0], [1], [0, 0, 1, 1], [], []>} : vector<128x128xbf16>, vector<128x512xbf16>, vector<128x512xf32> -> vector<128x512xf32>
    %c0_51 = arith.constant 0 : index
    %c0_52 = arith.constant 0 : index
    %159 = vector.load %arg10[%c0_51, %c0_52] : memref<1x512xf32, #tpu.memory_space<vmem>>, vector<1x512xf32>
    %160 = vector.broadcast %159 : vector<1x512xf32> to vector<128x512xf32>
    %161 = arith.addf %158, %160 : vector<128x512xf32>
    %cst_53 = arith.constant 5.000000e-01 : f32
    %162 = vector.broadcast %cst_53 : f32 to vector<128x512xf32>
    %163 = arith.mulf %162, %161 : vector<128x512xf32>
    %cst_54 = arith.constant 4.471500e-02 : f32
    %164 = vector.broadcast %cst_54 : f32 to vector<128x512xf32>
    %165 = arith.mulf %164, %161 : vector<128x512xf32>
    %166 = arith.mulf %165, %161 : vector<128x512xf32>
    %167 = arith.mulf %166, %161 : vector<128x512xf32>
    %168 = arith.addf %161, %167 : vector<128x512xf32>
    %cst_55 = arith.constant 0.797884583 : f32
    %169 = vector.broadcast %cst_55 : f32 to vector<128x512xf32>
    %170 = arith.mulf %169, %168 : vector<128x512xf32>
    %171 = math.tanh %170 : vector<128x512xf32>
    %cst_56 = arith.constant 1.000000e+00 : f32
    %172 = vector.broadcast %cst_56 : f32 to vector<128x512xf32>
    %173 = arith.addf %172, %171 : vector<128x512xf32>
    %174 = arith.mulf %163, %173 : vector<128x512xf32>
    %175 = arith.truncf %174 : vector<128x512xf32> to vector<128x512xbf16>
    %c0_57 = arith.constant 0 : index
    %c0_58 = arith.constant 0 : index
    %176 = vector.load %arg11[%c0_57, %c0_58] : memref<512x128xbf16, #tpu.memory_space<vmem>>, vector<512x128xbf16>
    %cst_59 = arith.constant dense<0.000000e+00> : vector<128x128xf32>
    %177 = tpu.matmul %175, %176, %cst_59 {dimension_numbers = #tpu.dot_dimension_numbers<[1], [0], [0], [1], [0, 0, 1, 1], [], []>} : vector<128x512xbf16>, vector<512x128xbf16>, vector<128x128xf32> -> vector<128x128xf32>
    %c0_60 = arith.constant 0 : index
    %c0_61 = arith.constant 0 : index
    %178 = vector.load %arg12[%c0_60, %c0_61] : memref<1x128xf32, #tpu.memory_space<vmem>>, vector<1x128xf32>
    %179 = vector.broadcast %178 : vector<1x128xf32> to vector<128x128xf32>
    %180 = arith.addf %177, %179 : vector<128x128xf32>
    %181 = arith.addf %131, %180 : vector<128x128xf32>
    %c0_62 = arith.constant 0 : index
    %c0_63 = arith.constant 0 : index
    %c0_64 = arith.constant 0 : index
    %182 = vector.load %arg13[%c0_62, %c0_63, %c0_64] : memref<1x128x128xf32, #tpu.memory_space<vmem>>, vector<1x128x128xf32>
    %183 = vector.shape_cast %182 : vector<1x128x128xf32> to vector<128x128xf32>
    %184 = vector.shape_cast %181 : vector<128x128xf32> to vector<1x128x128xf32>
    tpu.vector_store %arg13[%c0_62, %c0_63, %c0_64], %184 {strides = array<i32>} : memref<1x128x128xf32, #tpu.memory_space<vmem>>, vector<1x128x128xf32>,
    return
  }
  func.func @transform_0(%arg0: i32) -> (i32, i32, i32) {
    %c0_i32 = arith.constant 0 : i32
    %c0_i32_0 = arith.constant 0 : i32
    %c0_i32_1 = arith.constant 0 : i32
    return %arg0, %c0_i32, %c0_i32_0 : i32, i32, i32
  }
  func.func @transform_1(%arg0: i32) -> (i32, i32) {
    %c0_i32 = arith.constant 0 : i32
    %c0_i32_0 = arith.constant 0 : i32
    %c0_i32_1 = arith.constant 0 : i32
    return %c0_i32, %c0_i32_0 : i32, i32
  }
  func.func @transform_2(%arg0: i32) -> (i32, i32) {
    %c0_i32 = arith.constant 0 : i32
    %c0_i32_0 = arith.constant 0 : i32
    %c0_i32_1 = arith.constant 0 : i32
    return %c0_i32, %c0_i32_0 : i32, i32
  }
  func.func @transform_3(%arg0: i32) -> (i32, i32) {
    %c0_i32 = arith.constant 0 : i32
    %c0_i32_0 = arith.constant 0 : i32
    %c0_i32_1 = arith.constant 0 : i32
    return %c0_i32, %c0_i32_0 : i32, i32
  }
  func.func @transform_4(%arg0: i32) -> (i32, i32) {
    %c0_i32 = arith.constant 0 : i32
    %c0_i32_0 = arith.constant 0 : i32
    %c0_i32_1 = arith.constant 0 : i32
    return %c0_i32, %c0_i32_0 : i32, i32
  }
  func.func @transform_5(%arg0: i32) -> (i32, i32) {
    %c0_i32 = arith.constant 0 : i32
    %c0_i32_0 = arith.constant 0 : i32
    %c0_i32_1 = arith.constant 0 : i32
    return %c0_i32, %c0_i32_0 : i32, i32
  }
  func.func @transform_6(%arg0: i32) -> (i32, i32) {
    %c0_i32 = arith.constant 0 : i32
    %c0_i32_0 = arith.constant 0 : i32
    %c0_i32_1 = arith.constant 0 : i32
    return %c0_i32, %c0_i32_0 : i32, i32
  }
  func.func @transform_7(%arg0: i32) -> (i32, i32) {
    %c0_i32 = arith.constant 0 : i32
    %c0_i32_0 = arith.constant 0 : i32
    %c0_i32_1 = arith.constant 0 : i32
    return %c0_i32, %c0_i32_0 : i32, i32
  }
  func.func @transform_8(%arg0: i32) -> (i32, i32) {
    %c0_i32 = arith.constant 0 : i32
    %c0_i32_0 = arith.constant 0 : i32
    %c0_i32_1 = arith.constant 0 : i32
    return %c0_i32, %c0_i32_0 : i32, i32
  }
  func.func @transform_9(%arg0: i32) -> (i32, i32) {
    %c0_i32 = arith.constant 0 : i32
    %c0_i32_0 = arith.constant 0 : i32
    %c0_i32_1 = arith.constant 0 : i32
    return %c0_i32, %c0_i32_0 : i32, i32
  }
  func.func @transform_10(%arg0: i32) -> (i32, i32) {
    %c0_i32 = arith.constant 0 : i32
    %c0_i32_0 = arith.constant 0 : i32
    %c0_i32_1 = arith.constant 0 : i32
    return %c0_i32, %c0_i32_0 : i32, i32
  }
  func.func @transform_11(%arg0: i32) -> (i32, i32) {
    %c0_i32 = arith.constant 0 : i32
    %c0_i32_0 = arith.constant 0 : i32
    %c0_i32_1 = arith.constant 0 : i32
    return %c0_i32, %c0_i32_0 : i32, i32
  }
  func.func @transform_12(%arg0: i32) -> (i32, i32, i32) {
    %c0_i32 = arith.constant 0 : i32
    %c0_i32_0 = arith.constant 0 : i32
    %c0_i32_1 = arith.constant 0 : i32
    return %arg0, %c0_i32, %c0_i32_0 : i32, i32, i32
  }
}

</mosaic_0001>

<llo_original>
// kernel: tpu_custom_call.1
$region0: #{tpu_custom_call.1}
  #allocation0 [shape = 'u32[]', space=smem, size = 0x4, offset = 0x4, fixed_abs, tag = 'smem constant byte address 0x4 - core index']
  #allocation1 [shape = 'u32[144,128]{1,0:T(1,128)}', space=vmem, size = 0x12000, scoped, tag = 'internal scratch']
  %s0 = inlined_call_operand.hbm [shape: f32[2,128,128], index: 0, kind: input, shape index: {}]
  %s1 = inlined_call_operand.vmem [shape: f32[1,128], index: 1, kind: input, shape index: {}]
  %s2 = inlined_call_operand.vmem [shape: f32[1,128], index: 2, kind: input, shape index: {}]
  %s3 = inlined_call_operand.hbm [shape: bf16[128,384], index: 3, kind: input, shape index: {}]
  %s4 = inlined_call_operand.hbm [shape: bf16[128,128], index: 4, kind: input, shape index: {}]
  %s5 = inlined_call_operand.vmem [shape: f32[1,128], index: 5, kind: input, shape index: {}]
  %s6 = inlined_call_operand.vmem [shape: f32[1,128], index: 6, kind: input, shape index: {}]
  %s7 = inlined_call_operand.vmem [shape: f32[1,128], index: 7, kind: input, shape index: {}]
  %s8 = inlined_call_operand.hbm [shape: bf16[128,512], index: 8, kind: input, shape index: {}]
  %s9 = inlined_call_operand.vmem [shape: f32[1,512], index: 9, kind: input, shape index: {}]
  %s10 = inlined_call_operand.hbm [shape: bf16[512,128], index: 10, kind: input, shape index: {}]
  %s11 = inlined_call_operand.vmem [shape: f32[1,128], index: 11, kind: input, shape index: {}]
  %s12 = inlined_call_operand.hbm [shape: f32[2,128,128], index: 12, kind: output, shape index: {}]
  %s13 = sld [smem:[#allocation0]]
  $region101: #{tpu_custom_call.1} parent=0
    _
  %s15 = ssub.s32 1, %s13
  %s16 = scalar_select 0, %s15, %s13
  $region1: #{tpu_custom_call.1} parent=0
    #allocation2 [shape = 'u8[131072]{0}', space=vmem, size = 0x20000, scoped, tag = 'input window, operand 0']
    #allocation3 [shape = 's32[2]{0}', space=sflag, size = 0x8, scoped, tag = 'scoped memory for tpu_custom_call.1']
    #allocation4 [shape = 's32[2]{0}', space=sflag, size = 0x8, scoped, tag = 'scoped memory for tpu_custom_call.1']
    #allocation5 [shape = 'u8[98304]{0}', space=vmem, size = 0x18000, scoped, tag = 'input window, operand 3, single buffered']
    #allocation6 [shape = 's32[1]{0}', space=sflag, size = 0x4, scoped, tag = 'scoped memory for tpu_custom_call.1']
    #allocation7 [shape = 'u8[32768]{0}', space=vmem, size = 0x8000, scoped, tag = 'input window, operand 4, single buffered']
    #allocation8 [shape = 'u8[131072]{0}', space=vmem, size = 0x20000, scoped, tag = 'input window, operand 8, single buffered']
    #allocation9 [shape = 's32[1]{0}', space=sflag, size = 0x4, scoped, tag = 'scoped memory for tpu_custom_call.1']
    #allocation10 [shape = 'u8[131072]{0}', space=vmem, size = 0x20000, scoped, tag = 'input window, operand 10, single buffered']
    #allocation11 [shape = 'u8[131072]{0}', space=vmem, size = 0x20000, scoped, tag = 'output window, operand 0']
    %17 = vsyncpa [#allocation3], 0
    %s18 = scalar_lea.sflag [#allocation3], 1
    %19 = vsyncpa %s18, 0
    %20 = vsyncpa [#allocation6], 0
    %21 = vsyncpa [#allocation9], 0
    %22 = vsyncpa [#allocation4], 0
    %s23 = scalar_lea.sflag [#allocation4], 1
    %24 = vsyncpa %s23, 0
    loop: start=0, step=1, limit=4
    $region2: #{tpu_custom_call.1} parent=1 // loop_pre_header
      _
    $region3: #{tpu_custom_call.1} parent=1 // loop_header
      %s26 = sphi 0, %s30
      %p27 = scmp.ge.s32.totalorder %s26, 4
      %s36 = sphi 0, %s38
      %s39 = sphi 0, %s36
      %s40 = sphi 0, %s39
      %s56 = sphi 0, %s40
      %s60 = sphi 0, %s60
      %s62 = sphi 0, %s60
      %s63 = sphi 0, %s62
      %s77 = sphi 0, %s63
      %s81 = sphi 0, %s81
      %s83 = sphi 0, %s81
      %s84 = sphi 0, %s83
      %s98 = sphi 0, %s84
      %s102 = sphi 0, %s102
      %s104 = sphi 0, %s102
      %s105 = sphi 0, %s104
      %s119 = sphi 0, %s105
      %s123 = sphi 0, %s123
      %s125 = sphi 0, %s123
      %s126 = sphi 0, %s125
      %s140 = sphi 0, %s126
      %s144 = sphi 0, %s144
      %s146 = sphi 0, %s144
      %s147 = sphi 0, %s146
      %s161 = sphi 0, %s147
      %s165 = sphi 0, %s165
      %s167 = sphi 0, %s165
      %s168 = sphi 0, %s167
      %s182 = sphi 0, %s168
      %s186 = sphi 0, %s186
      %s188 = sphi 0, %s186
      %s189 = sphi 0, %s188
      %s203 = sphi 0, %s189
      %s207 = sphi 0, %s207
      %s209 = sphi 0, %s207
      %s210 = sphi 0, %s209
      %s224 = sphi 0, %s210
      %s228 = sphi 0, %s228
      %s230 = sphi 0, %s228
      %s231 = sphi 0, %s230
      %s245 = sphi 0, %s231
      %s249 = sphi 0, %s249
      %s251 = sphi 0, %s249
      %s252 = sphi 0, %s251
      %s266 = sphi 0, %s252
      %s270 = sphi 0, %s270
      %s272 = sphi 0, %s270
      %s273 = sphi 0, %s272
      %s287 = sphi 0, %s273
      %s293 = sphi 0, %s295
      %s296 = sphi 0, %s293
      %s297 = sphi 0, %s296
      %s313 = sphi 0, %s297
    $region4: #{tpu_custom_call.1} parent=1 // loop_header_branch
      %29 = sbr.rel (%p27) target = $region8
    $region5: #{tpu_custom_call.1} parent=1 // loop_body
      %s31 = ssub.s32 %s26, 1
      %s32 = ssub.s32 %s26, 2
      %s33 = sadd.s32 %s26, 1
      %s34 = ssub.s32 %s26, %s33
      %p35 = scmp.eq.s32.totalorder %s34, 0
      %s37 = sadd.s32 %s36, 1
      %s38 = scalar_select %p35, %s36, %s37
      %p41 = pneg %p35
      %p42 = scmp.eq.s32.totalorder %s26, 1
      %p43 = por %p41, %p42
      %p44 = scmp.ne.s32.totalorder %s36, %s39
      %p45 = scmp.eq.s32.totalorder %s26, 0
      %p46 = por %p44, %p45
      %p47 = scmp.ne.s32.totalorder %s36, %s39
      %p48 = scmp.eq.s32.totalorder %s31, 1
      %p49 = por %p47, %p48
      %p50 = scmp.ne.s32.totalorder %s39, %s40
      %p51 = scmp.eq.s32.totalorder %s31, 0
      %p52 = por %p50, %p51
      %p53 = scmp.ne.s32.totalorder %s39, %s40
      %p54 = scmp.eq.s32.totalorder %s32, 1
      %p55 = por %p53, %p54
      %p57 = scmp.ne.s32.totalorder %s40, %s56
      %p58 = scmp.eq.s32.totalorder %s32, 0
      %p59 = por %p57, %p58
      %s61 = sadd.s32 %s60, 1
      %p64 = scmp.eq.s32.totalorder %s26, 1
      %p65 = scmp.ne.s32.totalorder %s60, %s62
      %p66 = scmp.eq.s32.totalorder %s26, 0
      %p67 = por %p65, %p66
      %p68 = scmp.ne.s32.totalorder %s60, %s62
      %p69 = scmp.eq.s32.totalorder %s31, 1
      %p70 = por %p68, %p69
      %p71 = scmp.ne.s32.totalorder %s62, %s63
      %p72 = scmp.eq.s32.totalorder %s31, 0
      %p73 = por %p71, %p72
      %p74 = scmp.ne.s32.totalorder %s62, %s63
      %p75 = scmp.eq.s32.totalorder %s32, 1
      %p76 = por %p74, %p75
      %p78 = scmp.ne.s32.totalorder %s63, %s77
      %p79 = scmp.eq.s32.totalorder %s32, 0
      %p80 = por %p78, %p79
      %s82 = sadd.s32 %s81, 1
      %p85 = scmp.eq.s32.totalorder %s26, 1
      %p86 = scmp.ne.s32.totalorder %s81, %s83
      %p87 = scmp.eq.s32.totalorder %s26, 0
      %p88 = por %p86, %p87
      %p89 = scmp.ne.s32.totalorder %s81, %s83
      %p90 = scmp.eq.s32.totalorder %s31, 1
      %p91 = por %p89, %p90
      %p92 = scmp.ne.s32.totalorder %s83, %s84
      %p93 = scmp.eq.s32.totalorder %s31, 0
      %p94 = por %p92, %p93
      %p95 = scmp.ne.s32.totalorder %s83, %s84
      %p96 = scmp.eq.s32.totalorder %s32, 1
      %p97 = por %p95, %p96
      %p99 = scmp.ne.s32.totalorder %s84, %s98
      %p100 = scmp.eq.s32.totalorder %s32, 0
      %p101 = por %p99, %p100
      %s103 = sadd.s32 %s102, 1
      %p106 = scmp.eq.s32.totalorder %s26, 1
      %p107 = scmp.ne.s32.totalorder %s102, %s104
      %p108 = scmp.eq.s32.totalorder %s26, 0
      %p109 = por %p107, %p108
      %p110 = scmp.ne.s32.totalorder %s102, %s104
      %p111 = scmp.eq.s32.totalorder %s31, 1
      %p112 = por %p110, %p111
      %p113 = scmp.ne.s32.totalorder %s104, %s105
      %p114 = scmp.eq.s32.totalorder %s31, 0
      %p115 = por %p113, %p114
      %p116 = scmp.ne.s32.totalorder %s104, %s105
      %p117 = scmp.eq.s32.totalorder %s32, 1
      %p118 = por %p116, %p117
      %p120 = scmp.ne.s32.totalorder %s105, %s119
      %p121 = scmp.eq.s32.totalorder %s32, 0
      %p122 = por %p120, %p121
      %s124 = sadd.s32 %s123, 1
      %p127 = scmp.eq.s32.totalorder %s26, 1
      %p128 = scmp.ne.s32.totalorder %s123, %s125
      %p129 = scmp.eq.s32.totalorder %s26, 0
      %p130 = por %p128, %p129
      %p131 = scmp.ne.s32.totalorder %s123, %s125
      %p132 = scmp.eq.s32.totalorder %s31, 1
      %p133 = por %p131, %p132
      %p134 = scmp.ne.s32.totalorder %s125, %s126
      %p135 = scmp.eq.s32.totalorder %s31, 0
      %p136 = por %p134, %p135
      %p137 = scmp.ne.s32.totalorder %s125, %s126
      %p138 = scmp.eq.s32.totalorder %s32, 1
      %p139 = por %p137, %p138
      %p141 = scmp.ne.s32.totalorder %s126, %s140
      %p142 = scmp.eq.s32.totalorder %s32, 0
      %p143 = por %p141, %p142
      %s145 = sadd.s32 %s144, 1
      %p148 = scmp.eq.s32.totalorder %s26, 1
      %p149 = scmp.ne.s32.totalorder %s144, %s146
      %p150 = scmp.eq.s32.totalorder %s26, 0
      %p151 = por %p149, %p150
      %p152 = scmp.ne.s32.totalorder %s144, %s146
      %p153 = scmp.eq.s32.totalorder %s31, 1
      %p154 = por %p152, %p153
      %p155 = scmp.ne.s32.totalorder %s146, %s147
      %p156 = scmp.eq.s32.totalorder %s31, 0
      %p157 = por %p155, %p156
      %p158 = scmp.ne.s32.totalorder %s146, %s147
      %p159 = scmp.eq.s32.totalorder %s32, 1
      %p160 = por %p158, %p159
      %p162 = scmp.ne.s32.totalorder %s147, %s161
      %p163 = scmp.eq.s32.totalorder %s32, 0
      %p164 = por %p162, %p163
      %s166 = sadd.s32 %s165, 1
      %p169 = scmp.eq.s32.totalorder %s26, 1
      %p170 = scmp.ne.s32.totalorder %s165, %s167
      %p171 = scmp.eq.s32.totalorder %s26, 0
      %p172 = por %p170, %p171
      %p173 = scmp.ne.s32.totalorder %s165, %s167
      %p174 = scmp.eq.s32.totalorder %s31, 1
      %p175 = por %p173, %p174
      %p176 = scmp.ne.s32.totalorder %s167, %s168
      %p177 = scmp.eq.s32.totalorder %s31, 0
      %p178 = por %p176, %p177
      %p179 = scmp.ne.s32.totalorder %s167, %s168
      %p180 = scmp.eq.s32.totalorder %s32, 1
      %p181 = por %p179, %p180
      %p183 = scmp.ne.s32.totalorder %s168, %s182
      %p184 = scmp.eq.s32.totalorder %s32, 0
      %p185 = por %p183, %p184
      %s187 = sadd.s32 %s186, 1
      %p190 = scmp.eq.s32.totalorder %s26, 1
      %p191 = scmp.ne.s32.totalorder %s186, %s188
      %p192 = scmp.eq.s32.totalorder %s26, 0
      %p193 = por %p191, %p192
      %p194 = scmp.ne.s32.totalorder %s186, %s188
      %p195 = scmp.eq.s32.totalorder %s31, 1
      %p196 = por %p194, %p195
      %p197 = scmp.ne.s32.totalorder %s188, %s189
      %p198 = scmp.eq.s32.totalorder %s31, 0
      %p199 = por %p197, %p198
      %p200 = scmp.ne.s32.totalorder %s188, %s189
      %p201 = scmp.eq.s32.totalorder %s32, 1
      %p202 = por %p200, %p201
      %p204 = scmp.ne.s32.totalorder %s189, %s203
      %p205 = scmp.eq.s32.totalorder %s32, 0
      %p206 = por %p204, %p205
      %s208 = sadd.s32 %s207, 1
      %p211 = scmp.eq.s32.totalorder %s26, 1
      %p212 = scmp.ne.s32.totalorder %s207, %s209
      %p213 = scmp.eq.s32.totalorder %s26, 0
      %p214 = por %p212, %p213
      %p215 = scmp.ne.s32.totalorder %s207, %s209
      %p216 = scmp.eq.s32.totalorder %s31, 1
      %p217 = por %p215, %p216
      %p218 = scmp.ne.s32.totalorder %s209, %s210
      %p219 = scmp.eq.s32.totalorder %s31, 0
      %p220 = por %p218, %p219
      %p221 = scmp.ne.s32.totalorder %s209, %s210
      %p222 = scmp.eq.s32.totalorder %s32, 1
      %p223 = por %p221, %p222
      %p225 = scmp.ne.s32.totalorder %s210, %s224
      %p226 = scmp.eq.s32.totalorder %s32, 0
      %p227 = por %p225, %p226
      %s229 = sadd.s32 %s228, 1
      %p232 = scmp.eq.s32.totalorder %s26, 1
      %p233 = scmp.ne.s32.totalorder %s228, %s230
      %p234 = scmp.eq.s32.totalorder %s26, 0
      %p235 = por %p233, %p234
      %p236 = scmp.ne.s32.totalorder %s228, %s230
      %p237 = scmp.eq.s32.totalorder %s31, 1
      %p238 = por %p236, %p237
      %p239 = scmp.ne.s32.totalorder %s230, %s231
      %p240 = scmp.eq.s32.totalorder %s31, 0
      %p241 = por %p239, %p240
      %p242 = scmp.ne.s32.totalorder %s230, %s231
      %p243 = scmp.eq.s32.totalorder %s32, 1
      %p244 = por %p242, %p243
      %p246 = scmp.ne.s32.totalorder %s231, %s245
      %p247 = scmp.eq.s32.totalorder %s32, 0
      %p248 = por %p246, %p247
      %s250 = sadd.s32 %s249, 1
      %p253 = scmp.eq.s32.totalorder %s26, 1
      %p254 = scmp.ne.s32.totalorder %s249, %s251
      %p255 = scmp.eq.s32.totalorder %s26, 0
      %p256 = por %p254, %p255
      %p257 = scmp.ne.s32.totalorder %s249, %s251
      %p258 = scmp.eq.s32.totalorder %s31, 1
      %p259 = por %p257, %p258
      %p260 = scmp.ne.s32.totalorder %s251, %s252
      %p261 = scmp.eq.s32.totalorder %s31, 0
      %p262 = por %p260, %p261
      %p263 = scmp.ne.s32.totalorder %s251, %s252
      %p264 = scmp.eq.s32.totalorder %s32, 1
      %p265 = por %p263, %p264
      %p267 = scmp.ne.s32.totalorder %s252, %s266
      %p268 = scmp.eq.s32.totalorder %s32, 0
      %p269 = por %p267, %p268
      %s271 = sadd.s32 %s270, 1
      %p274 = scmp.eq.s32.totalorder %s26, 1
      %p275 = scmp.ne.s32.totalorder %s270, %s272
      %p276 = scmp.eq.s32.totalorder %s26, 0
      %p277 = por %p275, %p276
      %p278 = scmp.ne.s32.totalorder %s270, %s272
      %p279 = scmp.eq.s32.totalorder %s31, 1
      %p280 = por %p278, %p279
      %p281 = scmp.ne.s32.totalorder %s272, %s273
      %p282 = scmp.eq.s32.totalorder %s31, 0
      %p283 = por %p281, %p282
      %p284 = scmp.ne.s32.totalorder %s272, %s273
      %p285 = scmp.eq.s32.totalorder %s32, 1
      %p286 = por %p284, %p285
      %p288 = scmp.ne.s32.totalorder %s273, %s287
      %p289 = scmp.eq.s32.totalorder %s32, 0
      %p290 = por %p288, %p289
      %s291 = ssub.s32 %s26, %s33
      %p292 = scmp.eq.s32.totalorder %s291, 0
      %s294 = sadd.s32 %s293, 1
      %s295 = scalar_select %p292, %s293, %s294
      %p298 = pneg %p292
      %p299 = scmp.eq.s32.totalorder %s26, 1
      %p300 = por %p298, %p299
      %p301 = scmp.ne.s32.totalorder %s293, %s296
      %p302 = scmp.eq.s32.totalorder %s26, 0
      %p303 = por %p301, %p302
      %p304 = scmp.ne.s32.totalorder %s293, %s296
      %p305 = scmp.eq.s32.totalorder %s31, 1
      %p306 = por %p304, %p305
      %p307 = scmp.ne.s32.totalorder %s296, %s297
      %p308 = scmp.eq.s32.totalorder %s31, 0
      %p309 = por %p307, %p308
      %p310 = scmp.ne.s32.totalorder %s296, %s297
      %p311 = scmp.eq.s32.totalorder %s32, 1
      %p312 = por %p310, %p311
      %p314 = scmp.ne.s32.totalorder %s297, %s313
      %p315 = scmp.eq.s32.totalorder %s32, 0
      %p316 = por %p314, %p315
      %p317 = scmp.le.s32.totalorder 1, %s26
      %p318 = scmp.lt.s32.totalorder %s26, 3
      %p319 = pnand %p317, %p318
      %p320 = pneg %p319
      // Predicated region
      $region9: #{tpu_custom_call.1} parent=5 // pred_check
        _
      $region10: #{tpu_custom_call.1} parent=5 // pred_check_branch
        %322 = sbr.rel (%p319) target = $region12
      $region11: #{tpu_custom_call.1} parent=5 // pred_region
        %s323 = ssub.s32 %s26, 1
        // Predicated region
        $region13: #{tpu_custom_call.1} parent=11 // pred_check
          %p324 = pneg %p73
        $region14: #{tpu_custom_call.1} parent=11 // pred_check_branch
          %326 = sbr.rel (%p324) target = $region16
        $region15: #{tpu_custom_call.1} parent=11 // pred_region
          _
        $region16: #{tpu_custom_call.1} parent=11 // pred_fallthru
          _
        // Predicated region
        $region17: #{tpu_custom_call.1} parent=11 // pred_check
          %p327 = pneg %p94
        $region18: #{tpu_custom_call.1} parent=11 // pred_check_branch
          %329 = sbr.rel (%p327) target = $region20
        $region19: #{tpu_custom_call.1} parent=11 // pred_region
          _
        $region20: #{tpu_custom_call.1} parent=11 // pred_fallthru
          _
        // Predicated region
        $region21: #{tpu_custom_call.1} parent=11 // pred_check
          %p330 = pneg %p115
        $region22: #{tpu_custom_call.1} parent=11 // pred_check_branch
          %332 = sbr.rel (%p330) target = $region24
        $region23: #{tpu_custom_call.1} parent=11 // pred_region
          %s334 = ssub.s32 3072, 3072
          %335 = vsyncadd [#allocation6], %s334
          %s336 = sshll.u32 [#allocation5], 4
          %s337 = int_to_ptr.vmem [resolvable:$true] %s336
          %342 = dma.hbm_to_vmem [thread:$0]  %s3, 3072, %s337, [#allocation6], 192, 192, 12
        $region24: #{tpu_custom_call.1} parent=11 // pred_fallthru
          _
        // Predicated region
        $region25: #{tpu_custom_call.1} parent=11 // pred_check
          %p343 = pneg %p136
        $region26: #{tpu_custom_call.1} parent=11 // pred_check_branch
          %345 = sbr.rel (%p343) target = $region28
        $region27: #{tpu_custom_call.1} parent=11 // pred_region
          %s347 = ssub.s32 1024, 1024
          %348 = vsyncadd [#allocation6], %s347
          %s349 = sshll.u32 [#allocation7], 4
          %s350 = int_to_ptr.vmem [resolvable:$true] %s349
          %355 = dma.hbm_to_vmem [thread:$0]  %s4, 1024, %s350, [#allocation6], 64, 64, 4
        $region28: #{tpu_custom_call.1} parent=11 // pred_fallthru
          _
        // Predicated region
        $region29: #{tpu_custom_call.1} parent=11 // pred_check
          %p356 = pneg %p157
        $region30: #{tpu_custom_call.1} parent=11 // pred_check_branch
          %358 = sbr.rel (%p356) target = $region32
        $region31: #{tpu_custom_call.1} parent=11 // pred_region
          _
        $region32: #{tpu_custom_call.1} parent=11 // pred_fallthru
          _
        // Predicated region
        $region33: #{tpu_custom_call.1} parent=11 // pred_check
          %p359 = pneg %p178
        $region34: #{tpu_custom_call.1} parent=11 // pred_check_branch
          %361 = sbr.rel (%p359) target = $region36
        $region35: #{tpu_custom_call.1} parent=11 // pred_region
          _
        $region36: #{tpu_custom_call.1} parent=11 // pred_fallthru
          _
        // Predicated region
        $region37: #{tpu_custom_call.1} parent=11 // pred_check
          %p362 = pneg %p199
        $region38: #{tpu_custom_call.1} parent=11 // pred_check_branch
          %364 = sbr.rel (%p362) target = $region40
        $region39: #{tpu_custom_call.1} parent=11 // pred_region
          _
        $region40: #{tpu_custom_call.1} parent=11 // pred_fallthru
          _
        // Predicated region
        $region41: #{tpu_custom_call.1} parent=11 // pred_check
          %p365 = pneg %p220
        $region42: #{tpu_custom_call.1} parent=11 // pred_check_branch
          %367 = sbr.rel (%p365) target = $region44
        $region43: #{tpu_custom_call.1} parent=11 // pred_region
          %s369 = ssub.s32 4096, 4096
          %370 = vsyncadd [#allocation9], %s369
          %s371 = sshll.u32 [#allocation8], 4
          %s372 = int_to_ptr.vmem [resolvable:$true] %s371
          %377 = dma.hbm_to_vmem [thread:$0]  %s8, 4096, %s372, [#allocation9], 256, 256, 16
        $region44: #{tpu_custom_call.1} parent=11 // pred_fallthru
          _
        // Predicated region
        $region45: #{tpu_custom_call.1} parent=11 // pred_check
          %p378 = pneg %p241
        $region46: #{tpu_custom_call.1} parent=11 // pred_check_branch
          %380 = sbr.rel (%p378) target = $region48
        $region47: #{tpu_custom_call.1} parent=11 // pred_region
          _
        $region48: #{tpu_custom_call.1} parent=11 // pred_fallthru
          _
        // Predicated region
        $region49: #{tpu_custom_call.1} parent=11 // pred_check
          %p381 = pneg %p262
        $region50: #{tpu_custom_call.1} parent=11 // pred_check_branch
          %383 = sbr.rel (%p381) target = $region52
        $region51: #{tpu_custom_call.1} parent=11 // pred_region
          %s385 = ssub.s32 4096, 4096
          %386 = vsyncadd [#allocation9], %s385
          %s387 = sshll.u32 [#allocation10], 4
          %s388 = int_to_ptr.vmem [resolvable:$true] %s387
          %393 = dma.hbm_to_vmem [thread:$0]  %s10, 4096, %s388, [#allocation9], 64, 64, 4
        $region52: #{tpu_custom_call.1} parent=11 // pred_fallthru
          _
        // Predicated region
        $region53: #{tpu_custom_call.1} parent=11 // pred_check
          %p394 = pneg %p283
        $region54: #{tpu_custom_call.1} parent=11 // pred_check_branch
          %396 = sbr.rel (%p394) target = $region56
        $region55: #{tpu_custom_call.1} parent=11 // pred_region
          _
        $region56: #{tpu_custom_call.1} parent=11 // pred_fallthru
          _
      $region12: #{tpu_custom_call.1} parent=5 // pred_fallthru
        _
      %p397 = scmp.lt.s32.totalorder %s26, 2
      // Predicated region
      $region57: #{tpu_custom_call.1} parent=5 // pred_check
        %p398 = pneg %p397
      $region58: #{tpu_custom_call.1} parent=5 // pred_check_branch
        %400 = sbr.rel (%p398) target = $region60
      $region59: #{tpu_custom_call.1} parent=5 // pred_region
        // Predicated region
        $region61: #{tpu_custom_call.1} parent=59 // pred_check
          %p401 = pneg %p46
        $region62: #{tpu_custom_call.1} parent=59 // pred_check_branch
          %403 = sbr.rel (%p401) target = $region64
        $region63: #{tpu_custom_call.1} parent=59 // pred_region
          %s404 = sand.u32 %s36, 1
          %s405 = scalar_lea.sflag [#allocation3], %s404
          %s406 = sand.u32 %s36, 1
          %s407 = smul.addr %s406, 128
          %s408 = scalar_lea.vmem [#allocation2], %s407
          %s410 = ssub.s32 2048, 2048
          %411 = vsyncadd %s405, %s410
          %s412 = smul.addr %s26, 16
          %s413 = smul.addr %s412, 128
          %s414 = scalar_lea.hbm %s0, %s413
          %s415 = sshll.u32 %s408, 4
          %s416 = int_to_ptr.vmem [resolvable:$true] %s415
          %421 = dma.hbm_to_vmem [thread:$0]  %s414, 2048, %s416, %s405, 128, 128, 8
        $region64: #{tpu_custom_call.1} parent=59 // pred_fallthru
          _
      $region60: #{tpu_custom_call.1} parent=5 // pred_fallthru
        _
      %p422 = scmp.le.s32.totalorder 1, %s26
      %p423 = scmp.lt.s32.totalorder %s26, 3
      %p424 = pnand %p422, %p423
      %p425 = pneg %p424
      // Predicated region
      $region65: #{tpu_custom_call.1} parent=5 // pred_check
        _
      $region66: #{tpu_custom_call.1} parent=5 // pred_check_branch
        %427 = sbr.rel (%p424) target = $region68
      $region67: #{tpu_custom_call.1} parent=5 // pred_region
        %s428 = ssub.s32 %s26, 1
        %s429 = sand.u32 %s39, 1
        %s430 = scalar_lea.sflag [#allocation3], %s429
        %s431 = sand.u32 %s39, 1
        %s432 = smul.addr %s431, 128
        %s433 = scalar_lea.vmem [#allocation2], %s432
        // Predicated region
        $region69: #{tpu_custom_call.1} parent=67 // pred_check
          %p434 = pneg %p52
        $region70: #{tpu_custom_call.1} parent=67 // pred_check_branch
          %436 = sbr.rel (%p434) target = $region72
        $region71: #{tpu_custom_call.1} parent=67 // pred_region
          %437 = dma.done %s430, 2048
        $region72: #{tpu_custom_call.1} parent=67 // pred_fallthru
          _
        // Predicated region
        $region73: #{tpu_custom_call.1} parent=67 // pred_check
          %p438 = pneg %p115
        $region74: #{tpu_custom_call.1} parent=67 // pred_check_branch
          %440 = sbr.rel (%p438) target = $region76
        $region75: #{tpu_custom_call.1} parent=67 // pred_region
          %441 = dma.done [#allocation6], 3072
        $region76: #{tpu_custom_call.1} parent=67 // pred_fallthru
          _
        // Predicated region
        $region77: #{tpu_custom_call.1} parent=67 // pred_check
          %p442 = pneg %p136
        $region78: #{tpu_custom_call.1} parent=67 // pred_check_branch
          %444 = sbr.rel (%p442) target = $region80
        $region79: #{tpu_custom_call.1} parent=67 // pred_region
          %445 = dma.done [#allocation6], 1024
        $region80: #{tpu_custom_call.1} parent=67 // pred_fallthru
          _
        // Predicated region
        $region81: #{tpu_custom_call.1} parent=67 // pred_check
          %p446 = pneg %p220
        $region82: #{tpu_custom_call.1} parent=67 // pred_check_branch
          %448 = sbr.rel (%p446) target = $region84
        $region83: #{tpu_custom_call.1} parent=67 // pred_region
          %449 = dma.done [#allocation9], 4096
        $region84: #{tpu_custom_call.1} parent=67 // pred_fallthru
          _
        // Predicated region
        $region85: #{tpu_custom_call.1} parent=67 // pred_check
          %p450 = pneg %p262
        $region86: #{tpu_custom_call.1} parent=67 // pred_check_branch
          %452 = sbr.rel (%p450) target = $region88
        $region87: #{tpu_custom_call.1} parent=67 // pred_region
          %453 = dma.done [#allocation9], 4096
        $region88: #{tpu_custom_call.1} parent=67 // pred_fallthru
          _
        %s454 = sand.u32 %s39, 1
        %s455 = scalar_lea.sflag [#allocation3], %s454
        %s456 = sand.u32 %s39, 1
        %s457 = smul.addr %s456, 128
        %s458 = scalar_lea.vmem [#allocation2], %s457
        %p459 = pneg %p52
        %p460 = pneg %p49
        %p461 = pneg %p73
        %p462 = pneg %p70
        %p463 = pneg %p94
        %p464 = pneg %p91
        %p465 = pneg %p115
        %p466 = pneg %p112
        %p467 = pneg %p136
        %p468 = pneg %p133
        %p469 = pneg %p157
        %p470 = pneg %p154
        %p471 = pneg %p178
        %p472 = pneg %p175
        %p473 = pneg %p199
        %p474 = pneg %p196
        %p475 = pneg %p220
        %p476 = pneg %p217
        %p477 = pneg %p241
        %p478 = pneg %p238
        %p479 = pneg %p262
        %p480 = pneg %p259
        %p481 = pneg %p283
        %p482 = pneg %p280
        %p483 = pneg %p309
        %p484 = pneg %p306
        %s485 = sand.u32 %s296, 1
        %s486 = scalar_lea.sflag [#allocation4], %s485
        %s487 = sand.u32 %s296, 1
        %s488 = smul.addr %s487, 128
        %s489 = scalar_lea.vmem [#allocation11], %s488
        %v491 = vld [vmem:[%s433] sm:$0xff]
        %v492 = vld [vmem:[%s433 + $0x8] sm:$0xff]
        %v493 = vld [vmem:[%s433 + $0x10] sm:$0xff]
        %v494 = vld [vmem:[%s433 + $0x18] sm:$0xff]
        %v495 = vld [vmem:[%s433 + $0x20] sm:$0xff]
        %v496 = vld [vmem:[%s433 + $0x28] sm:$0xff]
        %v497 = vld [vmem:[%s433 + $0x30] sm:$0xff]
        %v498 = vld [vmem:[%s433 + $0x38] sm:$0xff]
        %v499 = vld [vmem:[%s433 + $0x40] sm:$0xff]
        %v500 = vld [vmem:[%s433 + $0x48] sm:$0xff]
        %v501 = vld [vmem:[%s433 + $0x50] sm:$0xff]
        %v502 = vld [vmem:[%s433 + $0x58] sm:$0xff]
        %v503 = vld [vmem:[%s433 + $0x60] sm:$0xff]
        %v504 = vld [vmem:[%s433 + $0x68] sm:$0xff]
        %v505 = vld [vmem:[%s433 + $0x70] sm:$0xff]
        %v506 = vld [vmem:[%s433 + $0x78] sm:$0xff]
        %v507 = vld [vmem:[%s1] sm:$0x1]
        %v508 = vld [vmem:[%s2] sm:$0x1]
        %509 = vadd.xlane.f32.xlu0 %v491
        %v510 = vpop.xlane.xlu0 %509
        %511 = vadd.xlane.f32.xlu0 %v492
        %v512 = vpop.xlane.xlu0 %511
        %513 = vadd.xlane.f32.xlu0 %v493
        %v514 = vpop.xlane.xlu0 %513
        %515 = vadd.xlane.f32.xlu0 %v494
        %v516 = vpop.xlane.xlu0 %515
        %517 = vadd.xlane.f32.xlu0 %v495
        %v518 = vpop.xlane.xlu0 %517
        %519 = vadd.xlane.f32.xlu0 %v496
        %v520 = vpop.xlane.xlu0 %519
        %521 = vadd.xlane.f32.xlu0 %v497
        %v522 = vpop.xlane.xlu0 %521
        %523 = vadd.xlane.f32.xlu0 %v498
        %v524 = vpop.xlane.xlu0 %523
        %525 = vadd.xlane.f32.xlu0 %v499
        %v526 = vpop.xlane.xlu0 %525
        %527 = vadd.xlane.f32.xlu0 %v500
        %v528 = vpop.xlane.xlu0 %527
        %529 = vadd.xlane.f32.xlu0 %v501
        %v530 = vpop.xlane.xlu0 %529
        %531 = vadd.xlane.f32.xlu0 %v502
        %v532 = vpop.xlane.xlu0 %531
        %533 = vadd.xlane.f32.xlu0 %v503
        %v534 = vpop.xlane.xlu0 %533
        %535 = vadd.xlane.f32.xlu0 %v504
        %v536 = vpop.xlane.xlu0 %535
        %537 = vadd.xlane.f32.xlu0 %v505
        %v538 = vpop.xlane.xlu0 %537
        %539 = vadd.xlane.f32.xlu0 %v506
        %v540 = vpop.xlane.xlu0 %539
        %v541 = vrcp.pop 128.0
        %v542 = vmul.f32 %v510, %v541
        %v543 = vmul.f32 %v512, %v541
        %v544 = vmul.f32 %v514, %v541
        %v545 = vmul.f32 %v516, %v541
        %v546 = vmul.f32 %v518, %v541
        %v547 = vmul.f32 %v520, %v541
        %v548 = vmul.f32 %v522, %v541
        %v549 = vmul.f32 %v524, %v541
        %v550 = vmul.f32 %v526, %v541
        %v551 = vmul.f32 %v528, %v541
        %v552 = vmul.f32 %v530, %v541
        %v553 = vmul.f32 %v532, %v541
        %v554 = vmul.f32 %v534, %v541
        %v555 = vmul.f32 %v536, %v541
        %v556 = vmul.f32 %v538, %v541
        %v557 = vmul.f32 %v540, %v541
        %v558 = vsub.f32 %v491, %v542
        %v559 = vsub.f32 %v492, %v543
        %v560 = vsub.f32 %v493, %v544
        %v561 = vsub.f32 %v494, %v545
        %v562 = vsub.f32 %v495, %v546
        %v563 = vsub.f32 %v496, %v547
        %v564 = vsub.f32 %v497, %v548
        %v565 = vsub.f32 %v498, %v549
        %v566 = vsub.f32 %v499, %v550
        %v567 = vsub.f32 %v500, %v551
        %v568 = vsub.f32 %v501, %v552
        %v569 = vsub.f32 %v502, %v553
        %v570 = vsub.f32 %v503, %v554
        %v571 = vsub.f32 %v504, %v555
        %v572 = vsub.f32 %v505, %v556
        %v573 = vsub.f32 %v506, %v557
        %v574 = vmul.f32 %v558, %v558
        %v575 = vmul.f32 %v559, %v559
        %v576 = vmul.f32 %v560, %v560
        %v577 = vmul.f32 %v561, %v561
        %v578 = vmul.f32 %v562, %v562
        %v579 = vmul.f32 %v563, %v563
        %v580 = vmul.f32 %v564, %v564
        %v581 = vmul.f32 %v565, %v565
        %v582 = vmul.f32 %v566, %v566
        %v583 = vmul.f32 %v567, %v567
        %v584 = vmul.f32 %v568, %v568
        %v585 = vmul.f32 %v569, %v569
        %v586 = vmul.f32 %v570, %v570
        %v587 = vmul.f32 %v571, %v571
        %v588 = vmul.f32 %v572, %v572
        %v589 = vmul.f32 %v573, %v573
        %590 = vadd.xlane.f32.xlu0 %v574
        %v591 = vpop.xlane.xlu0 %590
        %592 = vadd.xlane.f32.xlu0 %v575
        %v593 = vpop.xlane.xlu0 %592
        %594 = vadd.xlane.f32.xlu0 %v576
        %v595 = vpop.xlane.xlu0 %594
        %596 = vadd.xlane.f32.xlu0 %v577
        %v597 = vpop.xlane.xlu0 %596
        %598 = vadd.xlane.f32.xlu0 %v578
        %v599 = vpop.xlane.xlu0 %598
        %600 = vadd.xlane.f32.xlu0 %v579
        %v601 = vpop.xlane.xlu0 %600
        %602 = vadd.xlane.f32.xlu0 %v580
        %v603 = vpop.xlane.xlu0 %602
        %604 = vadd.xlane.f32.xlu0 %v581
        %v605 = vpop.xlane.xlu0 %604
        %606 = vadd.xlane.f32.xlu0 %v582
        %v607 = vpop.xlane.xlu0 %606
        %608 = vadd.xlane.f32.xlu0 %v583
        %v609 = vpop.xlane.xlu0 %608
        %610 = vadd.xlane.f32.xlu0 %v584
        %v611 = vpop.xlane.xlu0 %610
        %612 = vadd.xlane.f32.xlu0 %v585
        %v613 = vpop.xlane.xlu0 %612
        %614 = vadd.xlane.f32.xlu0 %v586
        %v615 = vpop.xlane.xlu0 %614
        %616 = vadd.xlane.f32.xlu0 %v587
        %v617 = vpop.xlane.xlu0 %616
        %618 = vadd.xlane.f32.xlu0 %v588
        %v619 = vpop.xlane.xlu0 %618
        %620 = vadd.xlane.f32.xlu0 %v589
        %v621 = vpop.xlane.xlu0 %620
        %v622 = vmul.f32 %v591, %v541
        %v623 = vmul.f32 %v593, %v541
        %v624 = vmul.f32 %v595, %v541
        %v625 = vmul.f32 %v597, %v541
        %v626 = vmul.f32 %v599, %v541
        %v627 = vmul.f32 %v601, %v541
        %v628 = vmul.f32 %v603, %v541
        %v629 = vmul.f32 %v605, %v541
        %v630 = vmul.f32 %v607, %v541
        %v631 = vmul.f32 %v609, %v541
        %v632 = vmul.f32 %v611, %v541
        %v633 = vmul.f32 %v613, %v541
        %v634 = vmul.f32 %v615, %v541
        %v635 = vmul.f32 %v617, %v541
        %v636 = vmul.f32 %v619, %v541
        %v637 = vmul.f32 %v621, %v541
        %v638 = vadd.f32 %v622, 1e-05
        %v639 = vadd.f32 %v623, 1e-05
        %v640 = vadd.f32 %v624, 1e-05
        %v641 = vadd.f32 %v625, 1e-05
        %v642 = vadd.f32 %v626, 1e-05
        %v643 = vadd.f32 %v627, 1e-05
        %v644 = vadd.f32 %v628, 1e-05
        %v645 = vadd.f32 %v629, 1e-05
        %v646 = vadd.f32 %v630, 1e-05
        %v647 = vadd.f32 %v631, 1e-05
        %v648 = vadd.f32 %v632, 1e-05
        %v649 = vadd.f32 %v633, 1e-05
        %v650 = vadd.f32 %v634, 1e-05
        %v651 = vadd.f32 %v635, 1e-05
        %v652 = vadd.f32 %v636, 1e-05
        %v653 = vadd.f32 %v637, 1e-05
        %v654 = vrsqrt.pop %v638
        %v655 = vrsqrt.pop %v639
        %v656 = vrsqrt.pop %v640
        %v657 = vrsqrt.pop %v641
        %v658 = vrsqrt.pop %v642
        %v659 = vrsqrt.pop %v643
        %v660 = vrsqrt.pop %v644
        %v661 = vrsqrt.pop %v645
        %v662 = vrsqrt.pop %v646
        %v663 = vrsqrt.pop %v647
        %v664 = vrsqrt.pop %v648
        %v665 = vrsqrt.pop %v649
        %v666 = vrsqrt.pop %v650
        %v667 = vrsqrt.pop %v651
        %v668 = vrsqrt.pop %v652
        %v669 = vrsqrt.pop %v653
        %v670 = vmul.f32 %v558, %v654
        %v671 = vmul.f32 %v559, %v655
        %v672 = vmul.f32 %v560, %v656
        %v673 = vmul.f32 %v561, %v657
        %v674 = vmul.f32 %v562, %v658
        %v675 = vmul.f32 %v563, %v659
        %v676 = vmul.f32 %v564, %v660
        %v677 = vmul.f32 %v565, %v661
        %v678 = vmul.f32 %v566, %v662
        %v679 = vmul.f32 %v567, %v663
        %v680 = vmul.f32 %v568, %v664
        %v681 = vmul.f32 %v569, %v665
        %v682 = vmul.f32 %v570, %v666
        %v683 = vmul.f32 %v571, %v667
        %v684 = vmul.f32 %v572, %v668
        %v685 = vmul.f32 %v573, %v669
        %v687 = vlaneseq
        %v688 = vshrl.u32 %v687, 7
        %v689 = vsub.s32 0, %v688
        %v690 = vrot.slane %v507, %v689
        %v692 = vmul.f32 %v670, %v690
        %v693 = vmul.f32 %v671, %v690
        %v694 = vmul.f32 %v672, %v690
        %v695 = vmul.f32 %v673, %v690
        %v696 = vmul.f32 %v674, %v690
        %v697 = vmul.f32 %v675, %v690
        %v698 = vmul.f32 %v676, %v690
        %v699 = vmul.f32 %v677, %v690
        %v700 = vmul.f32 %v678, %v690
        %v701 = vmul.f32 %v679, %v690
        %v702 = vmul.f32 %v680, %v690
        %v703 = vmul.f32 %v681, %v690
        %v704 = vmul.f32 %v682, %v690
        %v705 = vmul.f32 %v683, %v690
        %v706 = vmul.f32 %v684, %v690
        %v707 = vmul.f32 %v685, %v690
        %v709 = vlaneseq
        %v710 = vshrl.u32 %v709, 7
        %v711 = vsub.s32 0, %v710
        %v712 = vrot.slane %v508, %v711
        %v714 = vadd.f32 %v692, %v712
        %v715 = vadd.f32 %v693, %v712
        %v716 = vadd.f32 %v694, %v712
        %v717 = vadd.f32 %v695, %v712
        %v718 = vadd.f32 %v696, %v712
        %v719 = vadd.f32 %v697, %v712
        %v720 = vadd.f32 %v698, %v712
        %v721 = vadd.f32 %v699, %v712
        %v722 = vadd.f32 %v700, %v712
        %v723 = vadd.f32 %v701, %v712
        %v724 = vadd.f32 %v702, %v712
        %v725 = vadd.f32 %v703, %v712
        %v726 = vadd.f32 %v704, %v712
        %v727 = vadd.f32 %v705, %v712
        %v728 = vadd.f32 %v706, %v712
        %v729 = vadd.f32 %v707, %v712
        %v730 = vpack.c.bf16 %v715, %v714
        %v731 = vpack.c.bf16 %v717, %v716
        %v732 = vpack.c.bf16 %v719, %v718
        %v733 = vpack.c.bf16 %v721, %v720
        %v734 = vpack.c.bf16 %v723, %v722
        %v735 = vpack.c.bf16 %v725, %v724
        %v736 = vpack.c.bf16 %v727, %v726
        %v737 = vpack.c.bf16 %v729, %v728
        %v738 = vld [vmem:[#allocation5] sm:$0xff]
        %v739 = vld [vmem:[#allocation5 + $0x8] sm:$0xf]
        %v740 = vld [vmem:[#allocation5 + $0xc] sm:$0xff]
        %v741 = vld [vmem:[#allocation5 + $0x14] sm:$0xf]
        %v742 = vld [vmem:[#allocation5 + $0x18] sm:$0xff]
        %v743 = vld [vmem:[#allocation5 + $0x20] sm:$0xf]
        %v744 = vld [vmem:[#allocation5 + $0x24] sm:$0xff]
        %v745 = vld [vmem:[#allocation5 + $0x2c] sm:$0xf]
        %v746 = vld [vmem:[#allocation5 + $0x30] sm:$0xff]
        %v747 = vld [vmem:[#allocation5 + $0x38] sm:$0xf]
        %v748 = vld [vmem:[#allocation5 + $0x3c] sm:$0xff]
        %v749 = vld [vmem:[#allocation5 + $0x44] sm:$0xf]
        %v750 = vld [vmem:[#allocation5 + $0x48] sm:$0xff]
        %v751 = vld [vmem:[#allocation5 + $0x50] sm:$0xf]
        %v752 = vld [vmem:[#allocation5 + $0x54] sm:$0xff]
        %v753 = vld [vmem:[#allocation5 + $0x5c] sm:$0xf]
        %v754 = vld [vmem:[#allocation5 + $0x60] sm:$0xff]
        %v755 = vld [vmem:[#allocation5 + $0x68] sm:$0xf]
        %v756 = vld [vmem:[#allocation5 + $0x6c] sm:$0xff]
        %v757 = vld [vmem:[#allocation5 + $0x74] sm:$0xf]
        %v758 = vld [vmem:[#allocation5 + $0x78] sm:$0xff]
        %v759 = vld [vmem:[#allocation5 + $0x80] sm:$0xf]
        %v760 = vld [vmem:[#allocation5 + $0x84] sm:$0xff]
        %v761 = vld [vmem:[#allocation5 + $0x8c] sm:$0xf]
        %v762 = vld [vmem:[#allocation5 + $0x90] sm:$0xff]
        %v763 = vld [vmem:[#allocation5 + $0x98] sm:$0xf]
        %v764 = vld [vmem:[#allocation5 + $0x9c] sm:$0xff]
        %v765 = vld [vmem:[#allocation5 + $0xa4] sm:$0xf]
        %v766 = vld [vmem:[#allocation5 + $0xa8] sm:$0xff]
        %v767 = vld [vmem:[#allocation5 + $0xb0] sm:$0xf]
        %v768 = vld [vmem:[#allocation5 + $0xb4] sm:$0xff]
        %v769 = vld [vmem:[#allocation5 + $0xbc] sm:$0xf]
        %v802 = vunpack.c.l.b16 %v738
        %v803 = vunpack.c.h.b16 %v738
        %v804 = vunpack.c.l.b16 %v739
        %v805 = vunpack.c.l.b16 %v740
        %v806 = vunpack.c.h.b16 %v740
        %v807 = vunpack.c.l.b16 %v741
        %v808 = vunpack.c.l.b16 %v742
        %v809 = vunpack.c.h.b16 %v742
        %v810 = vunpack.c.l.b16 %v743
        %v811 = vunpack.c.l.b16 %v744
        %v812 = vunpack.c.h.b16 %v744
        %v813 = vunpack.c.l.b16 %v745
        %v814 = vunpack.c.l.b16 %v746
        %v815 = vunpack.c.h.b16 %v746
        %v816 = vunpack.c.l.b16 %v747
        %v817 = vunpack.c.l.b16 %v748
        %v818 = vunpack.c.h.b16 %v748
        %v819 = vunpack.c.l.b16 %v749
        %v820 = vunpack.c.l.b16 %v750
        %v821 = vunpack.c.h.b16 %v750
        %v822 = vunpack.c.l.b16 %v751
        %v823 = vunpack.c.l.b16 %v752
        %v824 = vunpack.c.h.b16 %v752
        %v825 = vunpack.c.l.b16 %v753
        %v826 = vunpack.c.l.b16 %v754
        %v827 = vunpack.c.h.b16 %v754
        %v828 = vunpack.c.l.b16 %v755
        %v829 = vunpack.c.l.b16 %v756
        %v830 = vunpack.c.h.b16 %v756
        %v831 = vunpack.c.l.b16 %v757
        %v832 = vunpack.c.l.b16 %v758
        %v833 = vunpack.c.h.b16 %v758
        %v834 = vunpack.c.l.b16 %v759
        %v835 = vunpack.c.l.b16 %v760
        %v836 = vunpack.c.h.b16 %v760
        %v837 = vunpack.c.l.b16 %v761
        %v838 = vunpack.c.l.b16 %v762
        %v839 = vunpack.c.h.b16 %v762
        %v840 = vunpack.c.l.b16 %v763
        %v841 = vunpack.c.l.b16 %v764
        %v842 = vunpack.c.h.b16 %v764
        %v843 = vunpack.c.l.b16 %v765
        %v844 = vunpack.c.l.b16 %v766
        %v845 = vunpack.c.h.b16 %v766
        %v846 = vunpack.c.l.b16 %v767
        %v847 = vunpack.c.l.b16 %v768
        %v848 = vunpack.c.h.b16 %v768
        %v849 = vunpack.c.l.b16 %v769
        %v850 = vpack.c.b16 %v805, %v802
        %v851 = vpack.c.b16 %v806, %v803
        %v852 = vpack.c.b16 %v807, %v804
        %v853 = vpack.c.b16 %v811, %v808
        %v854 = vpack.c.b16 %v812, %v809
        %v855 = vpack.c.b16 %v813, %v810
        %v856 = vpack.c.b16 %v817, %v814
        %v857 = vpack.c.b16 %v818, %v815
        %v858 = vpack.c.b16 %v819, %v816
        %v859 = vpack.c.b16 %v823, %v820
        %v860 = vpack.c.b16 %v824, %v821
        %v861 = vpack.c.b16 %v825, %v822
        %v862 = vpack.c.b16 %v829, %v826
        %v863 = vpack.c.b16 %v830, %v827
        %v864 = vpack.c.b16 %v831, %v828
        %v865 = vpack.c.b16 %v835, %v832
        %v866 = vpack.c.b16 %v836, %v833
        %v867 = vpack.c.b16 %v837, %v834
        %v868 = vpack.c.b16 %v841, %v838
        %v869 = vpack.c.b16 %v842, %v839
        %v870 = vpack.c.b16 %v843, %v840
        %v871 = vpack.c.b16 %v847, %v844
        %v872 = vpack.c.b16 %v848, %v845
        %v873 = vpack.c.b16 %v849, %v846
        %898 = vmatprep.subr.bf16.mxu0 %v872
        %899 = vmatpush1.bf16.msra.mxu0 %v871
        %900 = vmatprep.subr.bf16.mxu0 %v869
        %901 = vmatpush1.bf16.msra.mxu0 %v868
        %902 = vmatprep.subr.bf16.mxu0 %v866
        %903 = vmatpush1.bf16.msra.mxu0 %v865
        %904 = vmatprep.subr.bf16.mxu0 %v863
        %905 = vmatpush1.bf16.msra.mxu0 %v862
        %906 = vmatprep.subr.bf16.mxu0 %v860
        %907 = vmatpush1.bf16.msra.mxu0 %v859
        %908 = vmatprep.subr.bf16.mxu0 %v857
        %909 = vmatpush1.bf16.msra.mxu0 %v856
        %910 = vmatprep.subr.bf16.mxu0 %v854
        %911 = vmatpush1.bf16.msra.mxu0 %v853
        %912 = vmatprep.subr.bf16.mxu0 %v851
        %913 = vmatpush1.bf16.msra.mxu0 %v850
        %914 = vmatprep.subr.bf16.mxu0 0
        %915 = vmatpush2.bf16.msra.mxu0 0
        %916 = vmatprep.subr.bf16.mxu0 0
        %917 = vmatpush2.bf16.msra.mxu0 0
        %918 = vmatprep.subr.bf16.mxu0 0
        %919 = vmatpush2.bf16.msra.mxu0 0
        %920 = vmatprep.subr.bf16.mxu0 0
        %921 = vmatpush2.bf16.msra.mxu0 0
        %922 = vmatprep.subr.bf16.mxu0 0
        %923 = vmatpush2.bf16.msra.mxu0 0
        %924 = vmatprep.subr.bf16.mxu0 0
        %925 = vmatpush2.bf16.msra.mxu0 0
        %926 = vmatprep.subr.bf16.mxu0 0
        %927 = vmatpush2.bf16.msra.mxu0 0
        %928 = vmatprep.subr.bf16.mxu0 0
        %929 = vmatpush2.bf16.msra.mxu0 0
        %930 = vmatprep.mubr.bf16.mxu0 0
        %931 = vmatmul.mubr.bf16.gmra.mxu0 %v730
        %v932 = vpop.f32.mrf.mxu0
        %v933 = vadd.f32 0.0, %v932
        %v934 = vpop.f32.mrf.mxu0
        %v935 = vadd.f32 0.0, %v934
        %v936 = vpop.f32.mrf.mxu0
        %v937 = vadd.f32 0.0, %v936
        %v938 = vpop.f32.mrf.mxu0
        %v939 = vadd.f32 0.0, %v938
        %940 = vmatprep.mubr.bf16.mxu0 0
        %941 = vmatmul.mubr.bf16.gmra.mxu0 %v731
        %v942 = vpop.f32.mrf.mxu0
        %v943 = vadd.f32 0.0, %v942
        %v944 = vpop.f32.mrf.mxu0
        %v945 = vadd.f32 0.0, %v944
        %v946 = vpop.f32.mrf.mxu0
        %v947 = vadd.f32 0.0, %v946
        %v948 = vpop.f32.mrf.mxu0
        %v949 = vadd.f32 0.0, %v948
        %950 = vmatprep.mubr.bf16.mxu0 0
        %951 = vmatmul.mubr.bf16.gmra.mxu0 %v732
        %v952 = vpop.f32.mrf.mxu0
        %v953 = vadd.f32 0.0, %v952
        %v954 = vpop.f32.mrf.mxu0
        %v955 = vadd.f32 0.0, %v954
        %v956 = vpop.f32.mrf.mxu0
        %v957 = vadd.f32 0.0, %v956
        %v958 = vpop.f32.mrf.mxu0
        %v959 = vadd.f32 0.0, %v958
        %960 = vmatprep.mubr.bf16.mxu0 0
        %961 = vmatmul.mubr.bf16.gmra.mxu0 %v733
        %v962 = vpop.f32.mrf.mxu0
        %v963 = vadd.f32 0.0, %v962
        %v964 = vpop.f32.mrf.mxu0
        %v965 = vadd.f32 0.0, %v964
        %v966 = vpop.f32.mrf.mxu0
        %v967 = vadd.f32 0.0, %v966
        %v968 = vpop.f32.mrf.mxu0
        %v969 = vadd.f32 0.0, %v968
        %970 = vmatprep.mubr.bf16.mxu0 0
        %971 = vmatmul.mubr.bf16.gmra.mxu0 %v734
        %v972 = vpop.f32.mrf.mxu0
        %v973 = vadd.f32 0.0, %v972
        %v974 = vpop.f32.mrf.mxu0
        %v975 = vadd.f32 0.0, %v974
        %v976 = vpop.f32.mrf.mxu0
        %v977 = vadd.f32 0.0, %v976
        %v978 = vpop.f32.mrf.mxu0
        %v979 = vadd.f32 0.0, %v978
        %980 = vmatprep.mubr.bf16.mxu0 0
        %981 = vmatmul.mubr.bf16.gmra.mxu0 %v735
        %v982 = vpop.f32.mrf.mxu0
        %v983 = vadd.f32 0.0, %v982
        %v984 = vpop.f32.mrf.mxu0
        %v985 = vadd.f32 0.0, %v984
        %v986 = vpop.f32.mrf.mxu0
        %v987 = vadd.f32 0.0, %v986
        %v988 = vpop.f32.mrf.mxu0
        %v989 = vadd.f32 0.0, %v988
        %990 = vmatprep.mubr.bf16.mxu0 0
        %991 = vmatmul.mubr.bf16.gmra.mxu0 %v736
        %v992 = vpop.f32.mrf.mxu0
        %v993 = vadd.f32 0.0, %v992
        %v994 = vpop.f32.mrf.mxu0
        %v995 = vadd.f32 0.0, %v994
        %v996 = vpop.f32.mrf.mxu0
        %v997 = vadd.f32 0.0, %v996
        %v998 = vpop.f32.mrf.mxu0
        %v999 = vadd.f32 0.0, %v998
        %1000 = vmatprep.mubr.bf16.mxu0 0
        %1001 = vmatmul.mubr.bf16.gmra.mxu0 %v737
        %v1002 = vpop.f32.mrf.mxu0
        %v1003 = vadd.f32 0.0, %v1002
        %v1004 = vpop.f32.mrf.mxu0
        %v1005 = vadd.f32 0.0, %v1004
        %v1006 = vpop.f32.mrf.mxu0
        %v1007 = vadd.f32 0.0, %v1006
        %v1008 = vpop.f32.mrf.mxu0
        %v1009 = vadd.f32 0.0, %v1008
        %1010 = vdwg.mxu0
        %1011 = vmatprep.subr.bf16.mxu0 0
        %1012 = vmatpush1.bf16.msra.mxu0 %v873
        %1013 = vmatprep.subr.bf16.mxu0 0
        %1014 = vmatpush1.bf16.msra.mxu0 %v870
        %1015 = vmatprep.subr.bf16.mxu0 0
        %1016 = vmatpush1.bf16.msra.mxu0 %v867
        %1017 = vmatprep.subr.bf16.mxu0 0
        %1018 = vmatpush1.bf16.msra.mxu0 %v864
        %1019 = vmatprep.subr.bf16.mxu0 0
        %1020 = vmatpush1.bf16.msra.mxu0 %v861
        %1021 = vmatprep.subr.bf16.mxu0 0
        %1022 = vmatpush1.bf16.msra.mxu0 %v858
        %1023 = vmatprep.subr.bf16.mxu0 0
        %1024 = vmatpush1.bf16.msra.mxu0 %v855
        %1025 = vmatprep.subr.bf16.mxu0 0
        %1026 = vmatpush1.bf16.msra.mxu0 %v852
        %1027 = vmatprep.subr.bf16.mxu0 0
        %1028 = vmatpush2.bf16.msra.mxu0 0
        %1029 = vmatprep.subr.bf16.mxu0 0
        %1030 = vmatpush2.bf16.msra.mxu0 0
        %1031 = vmatprep.subr.bf16.mxu0 0
        %1032 = vmatpush2.bf16.msra.mxu0 0
        %1033 = vmatprep.subr.bf16.mxu0 0
        %1034 = vmatpush2.bf16.msra.mxu0 0
        %1035 = vmatprep.subr.bf16.mxu0 0
        %1036 = vmatpush2.bf16.msra.mxu0 0
        %1037 = vmatprep.subr.bf16.mxu0 0
        %1038 = vmatpush2.bf16.msra.mxu0 0
        %1039 = vmatprep.subr.bf16.mxu0 0
        %1040 = vmatpush2.bf16.msra.mxu0 0
        %1041 = vmatprep.subr.bf16.mxu0 0
        %1042 = vmatpush2.bf16.msra.mxu0 0
        %1043 = vmatprep.mubr.bf16.mxu0 0
        %1044 = vmatmul.mubr.bf16.gmra.mxu0 %v730
        %v1045 = vpop.f32.mrf.mxu0
        %v1046 = vadd.f32 0.0, %v1045
        %v1047 = vpop.f32.mrf.mxu0
        %v1048 = vpop.f32.mrf.mxu0
        %v1049 = vadd.f32 0.0, %v1048
        %v1050 = vpop.f32.mrf.mxu0
        %1051 = vmatprep.mubr.bf16.mxu0 0
        %1052 = vmatmul.mubr.bf16.gmra.mxu0 %v731
        %v1053 = vpop.f32.mrf.mxu0
        %v1054 = vadd.f32 0.0, %v1053
        %v1055 = vpop.f32.mrf.mxu0
        %v1056 = vpop.f32.mrf.mxu0
        %v1057 = vadd.f32 0.0, %v1056
        %v1058 = vpop.f32.mrf.mxu0
        %1059 = vmatprep.mubr.bf16.mxu0 0
        %1060 = vmatmul.mubr.bf16.gmra.mxu0 %v732
        %v1061 = vpop.f32.mrf.mxu0
        %v1062 = vadd.f32 0.0, %v1061
        %v1063 = vpop.f32.mrf.mxu0
        %v1064 = vpop.f32.mrf.mxu0
        %v1065 = vadd.f32 0.0, %v1064
        %v1066 = vpop.f32.mrf.mxu0
        %1067 = vmatprep.mubr.bf16.mxu0 0
        %1068 = vmatmul.mubr.bf16.gmra.mxu0 %v733
        %v1069 = vpop.f32.mrf.mxu0
        %v1070 = vadd.f32 0.0, %v1069
        %v1071 = vpop.f32.mrf.mxu0
        %v1072 = vpop.f32.mrf.mxu0
        %v1073 = vadd.f32 0.0, %v1072
        %v1074 = vpop.f32.mrf.mxu0
        %1075 = vmatprep.mubr.bf16.mxu0 0
        %1076 = vmatmul.mubr.bf16.gmra.mxu0 %v734
        %v1077 = vpop.f32.mrf.mxu0
        %v1078 = vadd.f32 0.0, %v1077
        %v1079 = vpop.f32.mrf.mxu0
        %v1080 = vpop.f32.mrf.mxu0
        %v1081 = vadd.f32 0.0, %v1080
        %v1082 = vpop.f32.mrf.mxu0
        %1083 = vmatprep.mubr.bf16.mxu0 0
        %1084 = vmatmul.mubr.bf16.gmra.mxu0 %v735
        %v1085 = vpop.f32.mrf.mxu0
        %v1086 = vadd.f32 0.0, %v1085
        %v1087 = vpop.f32.mrf.mxu0
        %v1088 = vpop.f32.mrf.mxu0
        %v1089 = vadd.f32 0.0, %v1088
        %v1090 = vpop.f32.mrf.mxu0
        %1091 = vmatprep.mubr.bf16.mxu0 0
        %1092 = vmatmul.mubr.bf16.gmra.mxu0 %v736
        %v1093 = vpop.f32.mrf.mxu0
        %v1094 = vadd.f32 0.0, %v1093
        %v1095 = vpop.f32.mrf.mxu0
        %v1096 = vpop.f32.mrf.mxu0
        %v1097 = vadd.f32 0.0, %v1096
        %v1098 = vpop.f32.mrf.mxu0
        %1099 = vmatprep.mubr.bf16.mxu0 0
        %1100 = vmatmul.mubr.bf16.gmra.mxu0 %v737
        %v1101 = vpop.f32.mrf.mxu0
        %v1102 = vadd.f32 0.0, %v1101
        %v1103 = vpop.f32.mrf.mxu0
        %v1104 = vpop.f32.mrf.mxu0
        %v1105 = vadd.f32 0.0, %v1104
        %v1106 = vpop.f32.mrf.mxu0
        %1107 = vdwg.mxu0
        %v1108 = vmul.f32 %v933, 0.17677669
        %v1109 = vmul.f32 %v937, 0.17677669
        %v1110 = vmul.f32 %v943, 0.17677669
        %v1111 = vmul.f32 %v947, 0.17677669
        %v1112 = vmul.f32 %v953, 0.17677669
        %v1113 = vmul.f32 %v957, 0.17677669
        %v1114 = vmul.f32 %v963, 0.17677669
        %v1115 = vmul.f32 %v967, 0.17677669
        %v1116 = vmul.f32 %v973, 0.17677669
        %v1117 = vmul.f32 %v977, 0.17677669
        %v1118 = vmul.f32 %v983, 0.17677669
        %v1119 = vmul.f32 %v987, 0.17677669
        %v1120 = vmul.f32 %v993, 0.17677669
        %v1121 = vmul.f32 %v997, 0.17677669
        %v1122 = vmul.f32 %v1003, 0.17677669
        %v1123 = vmul.f32 %v1007, 0.17677669
        %v1124 = vld [vmem:[#allocation7] sm:$0xf]
        %v1125 = vld [vmem:[#allocation7 + $0x4] sm:$0xf]
        %v1126 = vld [vmem:[#allocation7 + $0x8] sm:$0xf]
        %v1127 = vld [vmem:[#allocation7 + $0xc] sm:$0xf]
        %v1128 = vld [vmem:[#allocation7 + $0x10] sm:$0xf]
        %v1129 = vld [vmem:[#allocation7 + $0x14] sm:$0xf]
        %v1130 = vld [vmem:[#allocation7 + $0x18] sm:$0xf]
        %v1131 = vld [vmem:[#allocation7 + $0x1c] sm:$0xf]
        %v1132 = vld [vmem:[#allocation7 + $0x20] sm:$0xf]
        %v1133 = vld [vmem:[#allocation7 + $0x24] sm:$0xf]
        %v1134 = vld [vmem:[#allocation7 + $0x28] sm:$0xf]
        %v1135 = vld [vmem:[#allocation7 + $0x2c] sm:$0xf]
        %v1136 = vld [vmem:[#allocation7 + $0x30] sm:$0xf]
        %v1137 = vld [vmem:[#allocation7 + $0x34] sm:$0xf]
        %v1138 = vld [vmem:[#allocation7 + $0x38] sm:$0xf]
        %v1139 = vld [vmem:[#allocation7 + $0x3c] sm:$0xf]
        %v1140 = vpack.c.bf16 %v1109, %v1108
        %v1141 = vpack.c.bf16 %v1111, %v1110
        %v1142 = vpack.c.bf16 %v1113, %v1112
        %v1143 = vpack.c.bf16 %v1115, %v1114
        %v1144 = vpack.c.bf16 %v1117, %v1116
        %v1145 = vpack.c.bf16 %v1119, %v1118
        %v1146 = vpack.c.bf16 %v1121, %v1120
        %v1147 = vpack.c.bf16 %v1123, %v1122
        %v1148 = vpack.c.bf16 %v939, %v935
        %v1149 = vpack.c.bf16 %v949, %v945
        %v1150 = vpack.c.bf16 %v959, %v955
        %v1151 = vpack.c.bf16 %v969, %v965
        %v1152 = vpack.c.bf16 %v979, %v975
        %v1153 = vpack.c.bf16 %v989, %v985
        %v1154 = vpack.c.bf16 %v999, %v995
        %v1155 = vpack.c.bf16 %v1009, %v1005
        %v1156 = vpack.c.bf16 %v1049, %v1046
        %v1157 = vpack.c.bf16 %v1057, %v1054
        %v1158 = vpack.c.bf16 %v1065, %v1062
        %v1159 = vpack.c.bf16 %v1073, %v1070
        %v1160 = vpack.c.bf16 %v1081, %v1078
        %v1161 = vpack.c.bf16 %v1089, %v1086
        %v1162 = vpack.c.bf16 %v1097, %v1094
        %v1163 = vpack.c.bf16 %v1105, %v1102
        %vm1164 = vcmask 261120
        %v1166 = vsel %vm1164, %v1140, 0
        %v1169 = vsel %vm1164, %v1141, 0
        %v1172 = vsel %vm1164, %v1142, 0
        %v1175 = vsel %vm1164, %v1143, 0
        %v1178 = vsel %vm1164, %v1144, 0
        %v1181 = vsel %vm1164, %v1145, 0
        %v1184 = vsel %vm1164, %v1146, 0
        %v1187 = vsel %vm1164, %v1147, 0
        %v1190 = vsel %vm1164, %v1148, 0
        %v1193 = vsel %vm1164, %v1149, 0
        %v1196 = vsel %vm1164, %v1150, 0
        %v1199 = vsel %vm1164, %v1151, 0
        %v1202 = vsel %vm1164, %v1152, 0
        %v1205 = vsel %vm1164, %v1153, 0
        %v1208 = vsel %vm1164, %v1154, 0
        %v1211 = vsel %vm1164, %v1155, 0
        %1213 = vmatprep.subr.bf16.mxu0 0
        %1214 = vmatpush1.bf16.xpose.msra.mxu0 %v1211
        %1215 = vmatprep.subr.bf16.mxu0 0
        %1216 = vmatpush1.bf16.xpose.msra.mxu0 %v1208
        %1217 = vmatprep.subr.bf16.mxu0 0
        %1218 = vmatpush1.bf16.xpose.msra.mxu0 %v1205
        %1219 = vmatprep.subr.bf16.mxu0 0
        %1220 = vmatpush1.bf16.xpose.msra.mxu0 %v1202
        %1221 = vmatprep.subr.bf16.mxu0 0
        %1222 = vmatpush1.bf16.xpose.msra.mxu0 %v1199
        %1223 = vmatprep.subr.bf16.mxu0 0
        %1224 = vmatpush1.bf16.xpose.msra.mxu0 %v1196
        %1225 = vmatprep.subr.bf16.mxu0 0
        %1226 = vmatpush1.bf16.xpose.msra.mxu0 %v1193
        %1227 = vmatprep.subr.bf16.mxu0 0
        %1228 = vmatpush1.bf16.xpose.msra.mxu0 %v1190
        %1229 = vmatprep.subr.bf16.mxu0 0
        %1230 = vmatpush2.bf16.xpose.msra.mxu0 0
        %1231 = vmatprep.subr.bf16.mxu0 0
        %1232 = vmatpush2.bf16.xpose.msra.mxu0 0
        %1233 = vmatprep.subr.bf16.mxu0 0
        %1234 = vmatpush2.bf16.xpose.msra.mxu0 0
        %1235 = vmatprep.subr.bf16.mxu0 0
        %1236 = vmatpush2.bf16.xpose.msra.mxu0 0
        %1237 = vmatprep.subr.bf16.mxu0 0
        %1238 = vmatpush2.bf16.xpose.msra.mxu0 0
        %1239 = vmatprep.subr.bf16.mxu0 0
        %1240 = vmatpush2.bf16.xpose.msra.mxu0 0
        %1241 = vmatprep.subr.bf16.mxu0 0
        %1242 = vmatpush2.bf16.xpose.msra.mxu0 0
        %1243 = vmatprep.subr.bf16.mxu0 0
        %1244 = vmatpush2.bf16.xpose.msra.mxu0 0
        %1245 = vmatprep.mubr.bf16.mxu0 0
        %1246 = vmatmul.mubr.bf16.gmra.mxu0 %v1166
        %v1247 = vpop.f32.mrf.mxu0
        %v1248 = vadd.f32 0.0, %v1247
        %v1249 = vpop.f32.mrf.mxu0
        %v1250 = vpop.f32.mrf.mxu0
        %v1251 = vadd.f32 0.0, %v1250
        %v1252 = vpop.f32.mrf.mxu0
        %1253 = vmatprep.mubr.bf16.mxu0 0
        %1254 = vmatmul.mubr.bf16.gmra.mxu0 %v1169
        %v1255 = vpop.f32.mrf.mxu0
        %v1256 = vadd.f32 0.0, %v1255
        %v1257 = vpop.f32.mrf.mxu0
        %v1258 = vpop.f32.mrf.mxu0
        %v1259 = vadd.f32 0.0, %v1258
        %v1260 = vpop.f32.mrf.mxu0
        %1261 = vmatprep.mubr.bf16.mxu0 0
        %1262 = vmatmul.mubr.bf16.gmra.mxu0 %v1172
        %v1263 = vpop.f32.mrf.mxu0
        %v1264 = vadd.f32 0.0, %v1263
        %v1265 = vpop.f32.mrf.mxu0
        %v1266 = vpop.f32.mrf.mxu0
        %v1267 = vadd.f32 0.0, %v1266
        %v1268 = vpop.f32.mrf.mxu0
        %1269 = vmatprep.mubr.bf16.mxu0 0
        %1270 = vmatmul.mubr.bf16.gmra.mxu0 %v1175
        %v1271 = vpop.f32.mrf.mxu0
        %v1272 = vadd.f32 0.0, %v1271
        %v1273 = vpop.f32.mrf.mxu0
        %v1274 = vpop.f32.mrf.mxu0
        %v1275 = vadd.f32 0.0, %v1274
        %v1276 = vpop.f32.mrf.mxu0
        %1277 = vmatprep.mubr.bf16.mxu0 0
        %1278 = vmatmul.mubr.bf16.gmra.mxu0 %v1178
        %v1279 = vpop.f32.mrf.mxu0
        %v1280 = vadd.f32 0.0, %v1279
        %v1281 = vpop.f32.mrf.mxu0
        %v1282 = vpop.f32.mrf.mxu0
        %v1283 = vadd.f32 0.0, %v1282
        %v1284 = vpop.f32.mrf.mxu0
        %1285 = vmatprep.mubr.bf16.mxu0 0
        %1286 = vmatmul.mubr.bf16.gmra.mxu0 %v1181
        %v1287 = vpop.f32.mrf.mxu0
        %v1288 = vadd.f32 0.0, %v1287
        %v1289 = vpop.f32.mrf.mxu0
        %v1290 = vpop.f32.mrf.mxu0
        %v1291 = vadd.f32 0.0, %v1290
        %v1292 = vpop.f32.mrf.mxu0
        %1293 = vmatprep.mubr.bf16.mxu0 0
        %1294 = vmatmul.mubr.bf16.gmra.mxu0 %v1184
        %v1295 = vpop.f32.mrf.mxu0
        %v1296 = vadd.f32 0.0, %v1295
        %v1297 = vpop.f32.mrf.mxu0
        %v1298 = vpop.f32.mrf.mxu0
        %v1299 = vadd.f32 0.0, %v1298
        %v1300 = vpop.f32.mrf.mxu0
        %1301 = vmatprep.mubr.bf16.mxu0 0
        %1302 = vmatmul.mubr.bf16.gmra.mxu0 %v1187
        %v1303 = vpop.f32.mrf.mxu0
        %v1304 = vadd.f32 0.0, %v1303
        %v1305 = vpop.f32.mrf.mxu0
        %v1306 = vpop.f32.mrf.mxu0
        %v1307 = vadd.f32 0.0, %v1306
        %v1308 = vpop.f32.mrf.mxu0
        %1309 = vdwg.mxu0
        %1310 = vmax.xlane.f32.xlu0 %v1248
        %v1311 = vpop.xlane.xlu0 %1310
        %1312 = vmax.xlane.f32.xlu0 %v1251
        %v1313 = vpop.xlane.xlu0 %1312
        %1314 = vmax.xlane.f32.xlu0 %v1256
        %v1315 = vpop.xlane.xlu0 %1314
        %1316 = vmax.xlane.f32.xlu0 %v1259
        %v1317 = vpop.xlane.xlu0 %1316
        %1318 = vmax.xlane.f32.xlu0 %v1264
        %v1319 = vpop.xlane.xlu0 %1318
        %1320 = vmax.xlane.f32.xlu0 %v1267
        %v1321 = vpop.xlane.xlu0 %1320
        %1322 = vmax.xlane.f32.xlu0 %v1272
        %v1323 = vpop.xlane.xlu0 %1322
        %1324 = vmax.xlane.f32.xlu0 %v1275
        %v1325 = vpop.xlane.xlu0 %1324
        %1326 = vmax.xlane.f32.xlu0 %v1280
        %v1327 = vpop.xlane.xlu0 %1326
        %1328 = vmax.xlane.f32.xlu0 %v1283
        %v1329 = vpop.xlane.xlu0 %1328
        %1330 = vmax.xlane.f32.xlu0 %v1288
        %v1331 = vpop.xlane.xlu0 %1330
        %1332 = vmax.xlane.f32.xlu0 %v1291
        %v1333 = vpop.xlane.xlu0 %1332
        %1334 = vmax.xlane.f32.xlu0 %v1296
        %v1335 = vpop.xlane.xlu0 %1334
        %1336 = vmax.xlane.f32.xlu0 %v1299
        %v1337 = vpop.xlane.xlu0 %1336
        %1338 = vmax.xlane.f32.xlu0 %v1304
        %v1339 = vpop.xlane.xlu0 %1338
        %1340 = vmax.xlane.f32.xlu0 %v1307
        %v1341 = vpop.xlane.xlu0 %1340
        %v1342 = vsub.f32 %v1248, %v1311
        %v1343 = vsub.f32 %v1251, %v1313
        %v1344 = vsub.f32 %v1256, %v1315
        %v1345 = vsub.f32 %v1259, %v1317
        %v1346 = vsub.f32 %v1264, %v1319
        %v1347 = vsub.f32 %v1267, %v1321
        %v1348 = vsub.f32 %v1272, %v1323
        %v1349 = vsub.f32 %v1275, %v1325
        %v1350 = vsub.f32 %v1280, %v1327
        %v1351 = vsub.f32 %v1283, %v1329
        %v1352 = vsub.f32 %v1288, %v1331
        %v1353 = vsub.f32 %v1291, %v1333
        %v1354 = vsub.f32 %v1296, %v1335
        %v1355 = vsub.f32 %v1299, %v1337
        %v1356 = vsub.f32 %v1304, %v1339
        %v1357 = vsub.f32 %v1307, %v1341
        %v1358 = vmul.f32 %v1342, 1.442695
        %v1359 = vpow.pop %v1358
        %v1360 = vmul.f32 %v1343, 1.442695
        %v1361 = vpow.pop %v1360
        %v1362 = vmul.f32 %v1344, 1.442695
        %v1363 = vpow.pop %v1362
        %v1364 = vmul.f32 %v1345, 1.442695
        %v1365 = vpow.pop %v1364
        %v1366 = vmul.f32 %v1346, 1.442695
        %v1367 = vpow.pop %v1366
        %v1368 = vmul.f32 %v1347, 1.442695
        %v1369 = vpow.pop %v1368
        %v1370 = vmul.f32 %v1348, 1.442695
        %v1371 = vpow.pop %v1370
        %v1372 = vmul.f32 %v1349, 1.442695
        %v1373 = vpow.pop %v1372
        %v1374 = vmul.f32 %v1350, 1.442695
        %v1375 = vpow.pop %v1374
        %v1376 = vmul.f32 %v1351, 1.442695
        %v1377 = vpow.pop %v1376
        %v1378 = vmul.f32 %v1352, 1.442695
        %v1379 = vpow.pop %v1378
        %v1380 = vmul.f32 %v1353, 1.442695
        %v1381 = vpow.pop %v1380
        %v1382 = vmul.f32 %v1354, 1.442695
        %v1383 = vpow.pop %v1382
        %v1384 = vmul.f32 %v1355, 1.442695
        %v1385 = vpow.pop %v1384
        %v1386 = vmul.f32 %v1356, 1.442695
        %v1387 = vpow.pop %v1386
        %v1388 = vmul.f32 %v1357, 1.442695
        %v1389 = vpow.pop %v1388
        %1390 = vadd.xlane.f32.xlu0 %v1359
        %v1391 = vpop.xlane.xlu0 %1390
        %1392 = vadd.xlane.f32.xlu0 %v1361
        %v1393 = vpop.xlane.xlu0 %1392
        %1394 = vadd.xlane.f32.xlu0 %v1363
        %v1395 = vpop.xlane.xlu0 %1394
        %1396 = vadd.xlane.f32.xlu0 %v1365
        %v1397 = vpop.xlane.xlu0 %1396
        %1398 = vadd.xlane.f32.xlu0 %v1367
        %v1399 = vpop.xlane.xlu0 %1398
        %1400 = vadd.xlane.f32.xlu0 %v1369
        %v1401 = vpop.xlane.xlu0 %1400
        %1402 = vadd.xlane.f32.xlu0 %v1371
        %v1403 = vpop.xlane.xlu0 %1402
        %1404 = vadd.xlane.f32.xlu0 %v1373
        %v1405 = vpop.xlane.xlu0 %1404
        %1406 = vadd.xlane.f32.xlu0 %v1375
        %v1407 = vpop.xlane.xlu0 %1406
        %1408 = vadd.xlane.f32.xlu0 %v1377
        %v1409 = vpop.xlane.xlu0 %1408
        %1410 = vadd.xlane.f32.xlu0 %v1379
        %v1411 = vpop.xlane.xlu0 %1410
        %1412 = vadd.xlane.f32.xlu0 %v1381
        %v1413 = vpop.xlane.xlu0 %1412
        %1414 = vadd.xlane.f32.xlu0 %v1383
        %v1415 = vpop.xlane.xlu0 %1414
        %1416 = vadd.xlane.f32.xlu0 %v1385
        %v1417 = vpop.xlane.xlu0 %1416
        %1418 = vadd.xlane.f32.xlu0 %v1387
        %v1419 = vpop.xlane.xlu0 %1418
        %1420 = vadd.xlane.f32.xlu0 %v1389
        %v1421 = vpop.xlane.xlu0 %1420
        %v1422 = vrcp.pop %v1391
        %v1423 = vrcp.pop %v1393
        %v1424 = vrcp.pop %v1395
        %v1425 = vrcp.pop %v1397
        %v1426 = vrcp.pop %v1399
        %v1427 = vrcp.pop %v1401
        %v1428 = vrcp.pop %v1403
        %v1429 = vrcp.pop %v1405
        %v1430 = vrcp.pop %v1407
        %v1431 = vrcp.pop %v1409
        %v1432 = vrcp.pop %v1411
        %v1433 = vrcp.pop %v1413
        %v1434 = vrcp.pop %v1415
        %v1435 = vrcp.pop %v1417
        %v1436 = vrcp.pop %v1419
        %v1437 = vrcp.pop %v1421
        %v1438 = vmul.f32 %v1359, %v1422
        %v1439 = vmul.f32 %v1361, %v1423
        %v1440 = vmul.f32 %v1363, %v1424
        %v1441 = vmul.f32 %v1365, %v1425
        %v1442 = vmul.f32 %v1367, %v1426
        %v1443 = vmul.f32 %v1369, %v1427
        %v1444 = vmul.f32 %v1371, %v1428
        %v1445 = vmul.f32 %v1373, %v1429
        %v1446 = vmul.f32 %v1375, %v1430
        %v1447 = vmul.f32 %v1377, %v1431
        %v1448 = vmul.f32 %v1379, %v1432
        %v1449 = vmul.f32 %v1381, %v1433
        %v1450 = vmul.f32 %v1383, %v1434
        %v1451 = vmul.f32 %v1385, %v1435
        %v1452 = vmul.f32 %v1387, %v1436
        %v1453 = vmul.f32 %v1389, %v1437
        %v1454 = vpack.c.bf16 %v1439, %v1438
        %v1455 = vpack.c.bf16 %v1441, %v1440
        %v1456 = vpack.c.bf16 %v1443, %v1442
        %v1457 = vpack.c.bf16 %v1445, %v1444
        %v1458 = vpack.c.bf16 %v1447, %v1446
        %v1459 = vpack.c.bf16 %v1449, %v1448
        %v1460 = vpack.c.bf16 %v1451, %v1450
        %v1461 = vpack.c.bf16 %v1453, %v1452
        %1462 = vmatprep.subr.bf16.mxu0 0
        %1463 = vmatpush1.bf16.msra.mxu0 %v1163
        %1464 = vmatprep.subr.bf16.mxu0 0
        %1465 = vmatpush1.bf16.msra.mxu0 %v1162
        %1466 = vmatprep.subr.bf16.mxu0 0
        %1467 = vmatpush1.bf16.msra.mxu0 %v1161
        %1468 = vmatprep.subr.bf16.mxu0 0
        %1469 = vmatpush1.bf16.msra.mxu0 %v1160
        %1470 = vmatprep.subr.bf16.mxu0 0
        %1471 = vmatpush1.bf16.msra.mxu0 %v1159
        %1472 = vmatprep.subr.bf16.mxu0 0
        %1473 = vmatpush1.bf16.msra.mxu0 %v1158
        %1474 = vmatprep.subr.bf16.mxu0 0
        %1475 = vmatpush1.bf16.msra.mxu0 %v1157
        %1476 = vmatprep.subr.bf16.mxu0 0
        %1477 = vmatpush1.bf16.msra.mxu0 %v1156
        %1478 = vmatprep.subr.bf16.mxu0 0
        %1479 = vmatpush2.bf16.msra.mxu0 0
        %1480 = vmatprep.subr.bf16.mxu0 0
        %1481 = vmatpush2.bf16.msra.mxu0 0
        %1482 = vmatprep.subr.bf16.mxu0 0
        %1483 = vmatpush2.bf16.msra.mxu0 0
        %1484 = vmatprep.subr.bf16.mxu0 0
        %1485 = vmatpush2.bf16.msra.mxu0 0
        %1486 = vmatprep.subr.bf16.mxu0 0
        %1487 = vmatpush2.bf16.msra.mxu0 0
        %1488 = vmatprep.subr.bf16.mxu0 0
        %1489 = vmatpush2.bf16.msra.mxu0 0
        %1490 = vmatprep.subr.bf16.mxu0 0
        %1491 = vmatpush2.bf16.msra.mxu0 0
        %1492 = vmatprep.subr.bf16.mxu0 0
        %1493 = vmatpush2.bf16.msra.mxu0 0
        %1494 = vmatprep.mubr.bf16.mxu0 0
        %1495 = vmatmul.mubr.bf16.gmra.mxu0 %v1454
        %v1496 = vpop.f32.mrf.mxu0
        %v1497 = vadd.f32 0.0, %v1496
        %v1498 = vpop.f32.mrf.mxu0
        %v1499 = vpop.f32.mrf.mxu0
        %v1500 = vadd.f32 0.0, %v1499
        %v1501 = vpop.f32.mrf.mxu0
        %1502 = vmatprep.mubr.bf16.mxu0 0
        %1503 = vmatmul.mubr.bf16.gmra.mxu0 %v1455
        %v1504 = vpop.f32.mrf.mxu0
        %v1505 = vadd.f32 0.0, %v1504
        %v1506 = vpop.f32.mrf.mxu0
        %v1507 = vpop.f32.mrf.mxu0
        %v1508 = vadd.f32 0.0, %v1507
        %v1509 = vpop.f32.mrf.mxu0
        %1510 = vmatprep.mubr.bf16.mxu0 0
        %1511 = vmatmul.mubr.bf16.gmra.mxu0 %v1456
        %v1512 = vpop.f32.mrf.mxu0
        %v1513 = vadd.f32 0.0, %v1512
        %v1514 = vpop.f32.mrf.mxu0
        %v1515 = vpop.f32.mrf.mxu0
        %v1516 = vadd.f32 0.0, %v1515
        %v1517 = vpop.f32.mrf.mxu0
        %1518 = vmatprep.mubr.bf16.mxu0 0
        %1519 = vmatmul.mubr.bf16.gmra.mxu0 %v1457
        %v1520 = vpop.f32.mrf.mxu0
        %v1521 = vadd.f32 0.0, %v1520
        %v1522 = vpop.f32.mrf.mxu0
        %v1523 = vpop.f32.mrf.mxu0
        %v1524 = vadd.f32 0.0, %v1523
        %v1525 = vpop.f32.mrf.mxu0
        %1526 = vmatprep.mubr.bf16.mxu0 0
        %1527 = vmatmul.mubr.bf16.gmra.mxu0 %v1458
        %v1528 = vpop.f32.mrf.mxu0
        %v1529 = vadd.f32 0.0, %v1528
        %v1530 = vpop.f32.mrf.mxu0
        %v1531 = vpop.f32.mrf.mxu0
        %v1532 = vadd.f32 0.0, %v1531
        %v1533 = vpop.f32.mrf.mxu0
        %1534 = vmatprep.mubr.bf16.mxu0 0
        %1535 = vmatmul.mubr.bf16.gmra.mxu0 %v1459
        %v1536 = vpop.f32.mrf.mxu0
        %v1537 = vadd.f32 0.0, %v1536
        %v1538 = vpop.f32.mrf.mxu0
        %v1539 = vpop.f32.mrf.mxu0
        %v1540 = vadd.f32 0.0, %v1539
        %v1541 = vpop.f32.mrf.mxu0
        %1542 = vmatprep.mubr.bf16.mxu0 0
        %1543 = vmatmul.mubr.bf16.gmra.mxu0 %v1460
        %v1544 = vpop.f32.mrf.mxu0
        %v1545 = vadd.f32 0.0, %v1544
        %v1546 = vpop.f32.mrf.mxu0
        %v1547 = vpop.f32.mrf.mxu0
        %v1548 = vadd.f32 0.0, %v1547
        %v1549 = vpop.f32.mrf.mxu0
        %1550 = vmatprep.mubr.bf16.mxu0 0
        %1551 = vmatmul.mubr.bf16.gmra.mxu0 %v1461
        %v1552 = vpop.f32.mrf.mxu0
        %v1553 = vadd.f32 0.0, %v1552
        %v1554 = vpop.f32.mrf.mxu0
        %v1555 = vpop.f32.mrf.mxu0
        %v1556 = vadd.f32 0.0, %v1555
        %v1557 = vpop.f32.mrf.mxu0
        %1558 = vdwg.mxu0
        %v1559 = vpack.c.bf16 %v1500, %v1497
        %v1560 = vpack.c.bf16 %v1508, %v1505
        %v1561 = vpack.c.bf16 %v1516, %v1513
        %v1562 = vpack.c.bf16 %v1524, %v1521
        %v1563 = vpack.c.bf16 %v1532, %v1529
        %v1564 = vpack.c.bf16 %v1540, %v1537
        %v1565 = vpack.c.bf16 %v1548, %v1545
        %v1566 = vpack.c.bf16 %v1556, %v1553
        %1575 = vrot.lane.b32.xlu0 %v1140, 96
        %v1576 = vpop.permute.xlu0 %1575
        %1577 = vrot.lane.b32.xlu0 %v1141, 96
        %v1578 = vpop.permute.xlu0 %1577
        %1579 = vrot.lane.b32.xlu0 %v1142, 96
        %v1580 = vpop.permute.xlu0 %1579
        %1581 = vrot.lane.b32.xlu0 %v1143, 96
        %v1582 = vpop.permute.xlu0 %1581
        %1583 = vrot.lane.b32.xlu0 %v1144, 96
        %v1584 = vpop.permute.xlu0 %1583
        %1585 = vrot.lane.b32.xlu0 %v1145, 96
        %v1586 = vpop.permute.xlu0 %1585
        %1587 = vrot.lane.b32.xlu0 %v1146, 96
        %v1588 = vpop.permute.xlu0 %1587
        %1589 = vrot.lane.b32.xlu0 %v1147, 96
        %v1590 = vpop.permute.xlu0 %1589
        %1599 = vrot.lane.b32.xlu0 %v1148, 96
        %v1600 = vpop.permute.xlu0 %1599
        %1601 = vrot.lane.b32.xlu0 %v1149, 96
        %v1602 = vpop.permute.xlu0 %1601
        %1603 = vrot.lane.b32.xlu0 %v1150, 96
        %v1604 = vpop.permute.xlu0 %1603
        %1605 = vrot.lane.b32.xlu0 %v1151, 96
        %v1606 = vpop.permute.xlu0 %1605
        %1607 = vrot.lane.b32.xlu0 %v1152, 96
        %v1608 = vpop.permute.xlu0 %1607
        %1609 = vrot.lane.b32.xlu0 %v1153, 96
        %v1610 = vpop.permute.xlu0 %1609
        %1611 = vrot.lane.b32.xlu0 %v1154, 96
        %v1612 = vpop.permute.xlu0 %1611
        %1613 = vrot.lane.b32.xlu0 %v1155, 96
        %v1614 = vpop.permute.xlu0 %1613
        %v1616 = vsel %vm1164, %v1576, 0
        %v1619 = vsel %vm1164, %v1578, 0
        %v1622 = vsel %vm1164, %v1580, 0
        %v1625 = vsel %vm1164, %v1582, 0
        %v1628 = vsel %vm1164, %v1584, 0
        %v1631 = vsel %vm1164, %v1586, 0
        %v1634 = vsel %vm1164, %v1588, 0
        %v1637 = vsel %vm1164, %v1590, 0
        %v1640 = vsel %vm1164, %v1600, 0
        %v1643 = vsel %vm1164, %v1602, 0
        %v1646 = vsel %vm1164, %v1604, 0
        %v1649 = vsel %vm1164, %v1606, 0
        %v1652 = vsel %vm1164, %v1608, 0
        %v1655 = vsel %vm1164, %v1610, 0
        %v1658 = vsel %vm1164, %v1612, 0
        %v1661 = vsel %vm1164, %v1614, 0
        %1663 = vmatprep.subr.bf16.mxu0 0
        %1664 = vmatpush1.bf16.xpose.msra.mxu0 %v1661
        %1665 = vmatprep.subr.bf16.mxu0 0
        %1666 = vmatpush1.bf16.xpose.msra.mxu0 %v1658
        %1667 = vmatprep.subr.bf16.mxu0 0
        %1668 = vmatpush1.bf16.xpose.msra.mxu0 %v1655
        %1669 = vmatprep.subr.bf16.mxu0 0
        %1670 = vmatpush1.bf16.xpose.msra.mxu0 %v1652
        %1671 = vmatprep.subr.bf16.mxu0 0
        %1672 = vmatpush1.bf16.xpose.msra.mxu0 %v1649
        %1673 = vmatprep.subr.bf16.mxu0 0
        %1674 = vmatpush1.bf16.xpose.msra.mxu0 %v1646
        %1675 = vmatprep.subr.bf16.mxu0 0
        %1676 = vmatpush1.bf16.xpose.msra.mxu0 %v1643
        %1677 = vmatprep.subr.bf16.mxu0 0
        %1678 = vmatpush1.bf16.xpose.msra.mxu0 %v1640
        %1679 = vmatprep.subr.bf16.mxu0 0
        %1680 = vmatpush2.bf16.xpose.msra.mxu0 0
        %1681 = vmatprep.subr.bf16.mxu0 0
        %1682 = vmatpush2.bf16.xpose.msra.mxu0 0
        %1683 = vmatprep.subr.bf16.mxu0 0
        %1684 = vmatpush2.bf16.xpose.msra.mxu0 0
        %1685 = vmatprep.subr.bf16.mxu0 0
        %1686 = vmatpush2.bf16.xpose.msra.mxu0 0
        %1687 = vmatprep.subr.bf16.mxu0 0
        %1688 = vmatpush2.bf16.xpose.msra.mxu0 0
        %1689 = vmatprep.subr.bf16.mxu0 0
        %1690 = vmatpush2.bf16.xpose.msra.mxu0 0
        %1691 = vmatprep.subr.bf16.mxu0 0
        %1692 = vmatpush2.bf16.xpose.msra.mxu0 0
        %1693 = vmatprep.subr.bf16.mxu0 0
        %1694 = vmatpush2.bf16.xpose.msra.mxu0 0
        %1695 = vmatprep.mubr.bf16.mxu0 0
        %1696 = vmatmul.mubr.bf16.gmra.mxu0 %v1616
        %v1697 = vpop.f32.mrf.mxu0
        %v1698 = vadd.f32 0.0, %v1697
        %v1699 = vpop.f32.mrf.mxu0
        %v1700 = vpop.f32.mrf.mxu0
        %v1701 = vadd.f32 0.0, %v1700
        %v1702 = vpop.f32.mrf.mxu0
        %1703 = vmatprep.mubr.bf16.mxu0 0
        %1704 = vmatmul.mubr.bf16.gmra.mxu0 %v1619
        %v1705 = vpop.f32.mrf.mxu0
        %v1706 = vadd.f32 0.0, %v1705
        %v1707 = vpop.f32.mrf.mxu0
        %v1708 = vpop.f32.mrf.mxu0
        %v1709 = vadd.f32 0.0, %v1708
        %v1710 = vpop.f32.mrf.mxu0
        %1711 = vmatprep.mubr.bf16.mxu0 0
        %1712 = vmatmul.mubr.bf16.gmra.mxu0 %v1622
        %v1713 = vpop.f32.mrf.mxu0
        %v1714 = vadd.f32 0.0, %v1713
        %v1715 = vpop.f32.mrf.mxu0
        %v1716 = vpop.f32.mrf.mxu0
        %v1717 = vadd.f32 0.0, %v1716
        %v1718 = vpop.f32.mrf.mxu0
        %1719 = vmatprep.mubr.bf16.mxu0 0
        %1720 = vmatmul.mubr.bf16.gmra.mxu0 %v1625
        %v1721 = vpop.f32.mrf.mxu0
        %v1722 = vadd.f32 0.0, %v1721
        %v1723 = vpop.f32.mrf.mxu0
        %v1724 = vpop.f32.mrf.mxu0
        %v1725 = vadd.f32 0.0, %v1724
        %v1726 = vpop.f32.mrf.mxu0
        %1727 = vmatprep.mubr.bf16.mxu0 0
        %1728 = vmatmul.mubr.bf16.gmra.mxu0 %v1628
        %v1729 = vpop.f32.mrf.mxu0
        %v1730 = vadd.f32 0.0, %v1729
        %v1731 = vpop.f32.mrf.mxu0
        %v1732 = vpop.f32.mrf.mxu0
        %v1733 = vadd.f32 0.0, %v1732
        %v1734 = vpop.f32.mrf.mxu0
        %1735 = vmatprep.mubr.bf16.mxu0 0
        %1736 = vmatmul.mubr.bf16.gmra.mxu0 %v1631
        %v1737 = vpop.f32.mrf.mxu0
        %v1738 = vadd.f32 0.0, %v1737
        %v1739 = vpop.f32.mrf.mxu0
        %v1740 = vpop.f32.mrf.mxu0
        %v1741 = vadd.f32 0.0, %v1740
        %v1742 = vpop.f32.mrf.mxu0
        %1743 = vmatprep.mubr.bf16.mxu0 0
        %1744 = vmatmul.mubr.bf16.gmra.mxu0 %v1634
        %v1745 = vpop.f32.mrf.mxu0
        %v1746 = vadd.f32 0.0, %v1745
        %v1747 = vpop.f32.mrf.mxu0
        %v1748 = vpop.f32.mrf.mxu0
        %v1749 = vadd.f32 0.0, %v1748
        %v1750 = vpop.f32.mrf.mxu0
        %1751 = vmatprep.mubr.bf16.mxu0 0
        %1752 = vmatmul.mubr.bf16.gmra.mxu0 %v1637
        %v1753 = vpop.f32.mrf.mxu0
        %v1754 = vadd.f32 0.0, %v1753
        %v1755 = vpop.f32.mrf.mxu0
        %v1756 = vpop.f32.mrf.mxu0
        %v1757 = vadd.f32 0.0, %v1756
        %v1758 = vpop.f32.mrf.mxu0
        %1759 = vdwg.mxu0
        %1760 = vmax.xlane.f32.xlu0 %v1698
        %v1761 = vpop.xlane.xlu0 %1760
        %1762 = vmax.xlane.f32.xlu0 %v1701
        %v1763 = vpop.xlane.xlu0 %1762
        %1764 = vmax.xlane.f32.xlu0 %v1706
        %v1765 = vpop.xlane.xlu0 %1764
        %1766 = vmax.xlane.f32.xlu0 %v1709
        %v1767 = vpop.xlane.xlu0 %1766
        %1768 = vmax.xlane.f32.xlu0 %v1714
        %v1769 = vpop.xlane.xlu0 %1768
        %1770 = vmax.xlane.f32.xlu0 %v1717
        %v1771 = vpop.xlane.xlu0 %1770
        %1772 = vmax.xlane.f32.xlu0 %v1722
        %v1773 = vpop.xlane.xlu0 %1772
        %1774 = vmax.xlane.f32.xlu0 %v1725
        %v1775 = vpop.xlane.xlu0 %1774
        %1776 = vmax.xlane.f32.xlu0 %v1730
        %v1777 = vpop.xlane.xlu0 %1776
        %1778 = vmax.xlane.f32.xlu0 %v1733
        %v1779 = vpop.xlane.xlu0 %1778
        %1780 = vmax.xlane.f32.xlu0 %v1738
        %v1781 = vpop.xlane.xlu0 %1780
        %1782 = vmax.xlane.f32.xlu0 %v1741
        %v1783 = vpop.xlane.xlu0 %1782
        %1784 = vmax.xlane.f32.xlu0 %v1746
        %v1785 = vpop.xlane.xlu0 %1784
        %1786 = vmax.xlane.f32.xlu0 %v1749
        %v1787 = vpop.xlane.xlu0 %1786
        %1788 = vmax.xlane.f32.xlu0 %v1754
        %v1789 = vpop.xlane.xlu0 %1788
        %1790 = vmax.xlane.f32.xlu0 %v1757
        %v1791 = vpop.xlane.xlu0 %1790
        %v1792 = vsub.f32 %v1698, %v1761
        %v1793 = vsub.f32 %v1701, %v1763
        %v1794 = vsub.f32 %v1706, %v1765
        %v1795 = vsub.f32 %v1709, %v1767
        %v1796 = vsub.f32 %v1714, %v1769
        %v1797 = vsub.f32 %v1717, %v1771
        %v1798 = vsub.f32 %v1722, %v1773
        %v1799 = vsub.f32 %v1725, %v1775
        %v1800 = vsub.f32 %v1730, %v1777
        %v1801 = vsub.f32 %v1733, %v1779
        %v1802 = vsub.f32 %v1738, %v1781
        %v1803 = vsub.f32 %v1741, %v1783
        %v1804 = vsub.f32 %v1746, %v1785
        %v1805 = vsub.f32 %v1749, %v1787
        %v1806 = vsub.f32 %v1754, %v1789
        %v1807 = vsub.f32 %v1757, %v1791
        %v1808 = vmul.f32 %v1792, 1.442695
        %v1809 = vpow.pop %v1808
        %v1810 = vmul.f32 %v1793, 1.442695
        %v1811 = vpow.pop %v1810
        %v1812 = vmul.f32 %v1794, 1.442695
        %v1813 = vpow.pop %v1812
        %v1814 = vmul.f32 %v1795, 1.442695
        %v1815 = vpow.pop %v1814
        %v1816 = vmul.f32 %v1796, 1.442695
        %v1817 = vpow.pop %v1816
        %v1818 = vmul.f32 %v1797, 1.442695
        %v1819 = vpow.pop %v1818
        %v1820 = vmul.f32 %v1798, 1.442695
        %v1821 = vpow.pop %v1820
        %v1822 = vmul.f32 %v1799, 1.442695
        %v1823 = vpow.pop %v1822
        %v1824 = vmul.f32 %v1800, 1.442695
        %v1825 = vpow.pop %v1824
        %v1826 = vmul.f32 %v1801, 1.442695
        %v1827 = vpow.pop %v1826
        %v1828 = vmul.f32 %v1802, 1.442695
        %v1829 = vpow.pop %v1828
        %v1830 = vmul.f32 %v1803, 1.442695
        %v1831 = vpow.pop %v1830
        %v1832 = vmul.f32 %v1804, 1.442695
        %v1833 = vpow.pop %v1832
        %v1834 = vmul.f32 %v1805, 1.442695
        %v1835 = vpow.pop %v1834
        %v1836 = vmul.f32 %v1806, 1.442695
        %v1837 = vpow.pop %v1836
        %v1838 = vmul.f32 %v1807, 1.442695
        %v1839 = vpow.pop %v1838
        %1840 = vadd.xlane.f32.xlu0 %v1809
        %v1841 = vpop.xlane.xlu0 %1840
        %1842 = vadd.xlane.f32.xlu0 %v1811
        %v1843 = vpop.xlane.xlu0 %1842
        %1844 = vadd.xlane.f32.xlu0 %v1813
        %v1845 = vpop.xlane.xlu0 %1844
        %1846 = vadd.xlane.f32.xlu0 %v1815
        %v1847 = vpop.xlane.xlu0 %1846
        %1848 = vadd.xlane.f32.xlu0 %v1817
        %v1849 = vpop.xlane.xlu0 %1848
        %1850 = vadd.xlane.f32.xlu0 %v1819
        %v1851 = vpop.xlane.xlu0 %1850
        %1852 = vadd.xlane.f32.xlu0 %v1821
        %v1853 = vpop.xlane.xlu0 %1852
        %1854 = vadd.xlane.f32.xlu0 %v1823
        %v1855 = vpop.xlane.xlu0 %1854
        %1856 = vadd.xlane.f32.xlu0 %v1825
        %v1857 = vpop.xlane.xlu0 %1856
        %1858 = vadd.xlane.f32.xlu0 %v1827
        %v1859 = vpop.xlane.xlu0 %1858
        %1860 = vadd.xlane.f32.xlu0 %v1829
        %v1861 = vpop.xlane.xlu0 %1860
        %1862 = vadd.xlane.f32.xlu0 %v1831
        %v1863 = vpop.xlane.xlu0 %1862
        %1864 = vadd.xlane.f32.xlu0 %v1833
        %v1865 = vpop.xlane.xlu0 %1864
        %1866 = vadd.xlane.f32.xlu0 %v1835
        %v1867 = vpop.xlane.xlu0 %1866
        %1868 = vadd.xlane.f32.xlu0 %v1837
        %v1869 = vpop.xlane.xlu0 %1868
        %1870 = vadd.xlane.f32.xlu0 %v1839
        %v1871 = vpop.xlane.xlu0 %1870
        %v1872 = vrcp.pop %v1841
        %v1873 = vrcp.pop %v1843
        %v1874 = vrcp.pop %v1845
        %v1875 = vrcp.pop %v1847
        %v1876 = vrcp.pop %v1849
        %v1877 = vrcp.pop %v1851
        %v1878 = vrcp.pop %v1853
        %v1879 = vrcp.pop %v1855
        %v1880 = vrcp.pop %v1857
        %v1881 = vrcp.pop %v1859
        %v1882 = vrcp.pop %v1861
        %v1883 = vrcp.pop %v1863
        %v1884 = vrcp.pop %v1865
        %v1885 = vrcp.pop %v1867
        %v1886 = vrcp.pop %v1869
        %v1887 = vrcp.pop %v1871
        %v1888 = vmul.f32 %v1809, %v1872
        %v1889 = vmul.f32 %v1811, %v1873
        %v1890 = vmul.f32 %v1813, %v1874
        %v1891 = vmul.f32 %v1815, %v1875
        %v1892 = vmul.f32 %v1817, %v1876
        %v1893 = vmul.f32 %v1819, %v1877
        %v1894 = vmul.f32 %v1821, %v1878
        %v1895 = vmul.f32 %v1823, %v1879
        %v1896 = vmul.f32 %v1825, %v1880
        %v1897 = vmul.f32 %v1827, %v1881
        %v1898 = vmul.f32 %v1829, %v1882
        %v1899 = vmul.f32 %v1831, %v1883
        %v1900 = vmul.f32 %v1833, %v1884
        %v1901 = vmul.f32 %v1835, %v1885
        %v1902 = vmul.f32 %v1837, %v1886
        %v1903 = vmul.f32 %v1839, %v1887
        %v1904 = vpack.c.bf16 %v1889, %v1888
        %v1905 = vpack.c.bf16 %v1891, %v1890
        %v1906 = vpack.c.bf16 %v1893, %v1892
        %v1907 = vpack.c.bf16 %v1895, %v1894
        %v1908 = vpack.c.bf16 %v1897, %v1896
        %v1909 = vpack.c.bf16 %v1899, %v1898
        %v1910 = vpack.c.bf16 %v1901, %v1900
        %v1911 = vpack.c.bf16 %v1903, %v1902
        %1920 = vrot.lane.b32.xlu0 %v1156, 96
        %v1921 = vpop.permute.xlu0 %1920
        %1922 = vrot.lane.b32.xlu0 %v1157, 96
        %v1923 = vpop.permute.xlu0 %1922
        %1924 = vrot.lane.b32.xlu0 %v1158, 96
        %v1925 = vpop.permute.xlu0 %1924
        %1926 = vrot.lane.b32.xlu0 %v1159, 96
        %v1927 = vpop.permute.xlu0 %1926
        %1928 = vrot.lane.b32.xlu0 %v1160, 96
        %v1929 = vpop.permute.xlu0 %1928
        %1930 = vrot.lane.b32.xlu0 %v1161, 96
        %v1931 = vpop.permute.xlu0 %1930
        %1932 = vrot.lane.b32.xlu0 %v1162, 96
        %v1933 = vpop.permute.xlu0 %1932
        %1934 = vrot.lane.b32.xlu0 %v1163, 96
        %v1935 = vpop.permute.xlu0 %1934
        %1944 = vmatprep.subr.bf16.mxu0 0
        %1945 = vmatpush1.bf16.msra.mxu0 %v1935
        %1946 = vmatprep.subr.bf16.mxu0 0
        %1947 = vmatpush1.bf16.msra.mxu0 %v1933
        %1948 = vmatprep.subr.bf16.mxu0 0
        %1949 = vmatpush1.bf16.msra.mxu0 %v1931
        %1950 = vmatprep.subr.bf16.mxu0 0
        %1951 = vmatpush1.bf16.msra.mxu0 %v1929
        %1952 = vmatprep.subr.bf16.mxu0 0
        %1953 = vmatpush1.bf16.msra.mxu0 %v1927
        %1954 = vmatprep.subr.bf16.mxu0 0
        %1955 = vmatpush1.bf16.msra.mxu0 %v1925
        %1956 = vmatprep.subr.bf16.mxu0 0
        %1957 = vmatpush1.bf16.msra.mxu0 %v1923
        %1958 = vmatprep.subr.bf16.mxu0 0
        %1959 = vmatpush1.bf16.msra.mxu0 %v1921
        %1960 = vmatprep.subr.bf16.mxu0 0
        %1961 = vmatpush2.bf16.msra.mxu0 0
        %1962 = vmatprep.subr.bf16.mxu0 0
        %1963 = vmatpush2.bf16.msra.mxu0 0
        %1964 = vmatprep.subr.bf16.mxu0 0
        %1965 = vmatpush2.bf16.msra.mxu0 0
        %1966 = vmatprep.subr.bf16.mxu0 0
        %1967 = vmatpush2.bf16.msra.mxu0 0
        %1968 = vmatprep.subr.bf16.mxu0 0
        %1969 = vmatpush2.bf16.msra.mxu0 0
        %1970 = vmatprep.subr.bf16.mxu0 0
        %1971 = vmatpush2.bf16.msra.mxu0 0
        %1972 = vmatprep.subr.bf16.mxu0 0
        %1973 = vmatpush2.bf16.msra.mxu0 0
        %1974 = vmatprep.subr.bf16.mxu0 0
        %1975 = vmatpush2.bf16.msra.mxu0 0
        %1976 = vmatprep.mubr.bf16.mxu0 0
        %1977 = vmatmul.mubr.bf16.gmra.mxu0 %v1904
        %v1978 = vpop.f32.mrf.mxu0
        %v1979 = vadd.f32 0.0, %v1978
        %v1980 = vpop.f32.mrf.mxu0
        %v1981 = vpop.f32.mrf.mxu0
        %v1982 = vadd.f32 0.0, %v1981
        %v1983 = vpop.f32.mrf.mxu0
        %1984 = vmatprep.mubr.bf16.mxu0 0
        %1985 = vmatmul.mubr.bf16.gmra.mxu0 %v1905
        %v1986 = vpop.f32.mrf.mxu0
        %v1987 = vadd.f32 0.0, %v1986
        %v1988 = vpop.f32.mrf.mxu0
        %v1989 = vpop.f32.mrf.mxu0
        %v1990 = vadd.f32 0.0, %v1989
        %v1991 = vpop.f32.mrf.mxu0
        %1992 = vmatprep.mubr.bf16.mxu0 0
        %1993 = vmatmul.mubr.bf16.gmra.mxu0 %v1906
        %v1994 = vpop.f32.mrf.mxu0
        %v1995 = vadd.f32 0.0, %v1994
        %v1996 = vpop.f32.mrf.mxu0
        %v1997 = vpop.f32.mrf.mxu0
        %v1998 = vadd.f32 0.0, %v1997
        %v1999 = vpop.f32.mrf.mxu0
        %2000 = vmatprep.mubr.bf16.mxu0 0
        %2001 = vmatmul.mubr.bf16.gmra.mxu0 %v1907
        %v2002 = vpop.f32.mrf.mxu0
        %v2003 = vadd.f32 0.0, %v2002
        %v2004 = vpop.f32.mrf.mxu0
        %v2005 = vpop.f32.mrf.mxu0
        %v2006 = vadd.f32 0.0, %v2005
        %v2007 = vpop.f32.mrf.mxu0
        %2008 = vmatprep.mubr.bf16.mxu0 0
        %2009 = vmatmul.mubr.bf16.gmra.mxu0 %v1908
        %v2010 = vpop.f32.mrf.mxu0
        %v2011 = vadd.f32 0.0, %v2010
        %v2012 = vpop.f32.mrf.mxu0
        %v2013 = vpop.f32.mrf.mxu0
        %v2014 = vadd.f32 0.0, %v2013
        %v2015 = vpop.f32.mrf.mxu0
        %2016 = vmatprep.mubr.bf16.mxu0 0
        %2017 = vmatmul.mubr.bf16.gmra.mxu0 %v1909
        %v2018 = vpop.f32.mrf.mxu0
        %v2019 = vadd.f32 0.0, %v2018
        %v2020 = vpop.f32.mrf.mxu0
        %v2021 = vpop.f32.mrf.mxu0
        %v2022 = vadd.f32 0.0, %v2021
        %v2023 = vpop.f32.mrf.mxu0
        %2024 = vmatprep.mubr.bf16.mxu0 0
        %2025 = vmatmul.mubr.bf16.gmra.mxu0 %v1910
        %v2026 = vpop.f32.mrf.mxu0
        %v2027 = vadd.f32 0.0, %v2026
        %v2028 = vpop.f32.mrf.mxu0
        %v2029 = vpop.f32.mrf.mxu0
        %v2030 = vadd.f32 0.0, %v2029
        %v2031 = vpop.f32.mrf.mxu0
        %2032 = vmatprep.mubr.bf16.mxu0 0
        %2033 = vmatmul.mubr.bf16.gmra.mxu0 %v1911
        %v2034 = vpop.f32.mrf.mxu0
        %v2035 = vadd.f32 0.0, %v2034
        %v2036 = vpop.f32.mrf.mxu0
        %v2037 = vpop.f32.mrf.mxu0
        %v2038 = vadd.f32 0.0, %v2037
        %v2039 = vpop.f32.mrf.mxu0
        %2040 = vdwg.mxu0
        %v2041 = vpack.c.bf16 %v1982, %v1979
        %v2042 = vpack.c.bf16 %v1990, %v1987
        %v2043 = vpack.c.bf16 %v1998, %v1995
        %v2044 = vpack.c.bf16 %v2006, %v2003
        %v2045 = vpack.c.bf16 %v2014, %v2011
        %v2046 = vpack.c.bf16 %v2022, %v2019
        %v2047 = vpack.c.bf16 %v2030, %v2027
        %v2048 = vpack.c.bf16 %v2038, %v2035
        %v2053 = vunpack.c.l.b16 %v1128
        %v2054 = vunpack.c.l.b16 %v1129
        %v2055 = vunpack.c.l.b16 %v1130
        %v2056 = vunpack.c.l.b16 %v1131
        %v2057 = vpack.c.b16 %v2054, %v2053
        %v2058 = vpack.c.b16 %v2056, %v2055
        %v2062 = vsel %vm1164, %v2041, 0
        %v2065 = vsel %vm1164, %v2042, 0
        %v2068 = vsel %vm1164, %v2043, 0
        %v2071 = vsel %vm1164, %v2044, 0
        %v2074 = vsel %vm1164, %v2045, 0
        %v2077 = vsel %vm1164, %v2046, 0
        %v2080 = vsel %vm1164, %v2047, 0
        %v2083 = vsel %vm1164, %v2048, 0
        %2085 = vmatprep.subr.bf16.mxu0 0
        %2086 = vmatpush1.bf16.msra.mxu0 0
        %2087 = vmatprep.subr.bf16.mxu0 0
        %2088 = vmatpush1.bf16.msra.mxu0 0
        %2089 = vmatprep.subr.bf16.mxu0 0
        %2090 = vmatpush1.bf16.msra.mxu0 0
        %2091 = vmatprep.subr.bf16.mxu0 0
        %2092 = vmatpush1.bf16.msra.mxu0 0
        %2093 = vmatprep.subr.bf16.mxu0 0
        %2094 = vmatpush1.bf16.msra.mxu0 0
        %2095 = vmatprep.subr.bf16.mxu0 0
        %2096 = vmatpush1.bf16.msra.mxu0 0
        %2097 = vmatprep.subr.bf16.mxu0 0
        %2098 = vmatpush1.bf16.msra.mxu0 %v2058
        %2099 = vmatprep.subr.bf16.mxu0 0
        %2100 = vmatpush1.bf16.msra.mxu0 %v2057
        %2101 = vmatprep.subr.bf16.mxu0 0
        %2102 = vmatpush2.bf16.msra.mxu0 0
        %2103 = vmatprep.subr.bf16.mxu0 0
        %2104 = vmatpush2.bf16.msra.mxu0 0
        %2105 = vmatprep.subr.bf16.mxu0 0
        %2106 = vmatpush2.bf16.msra.mxu0 0
        %2107 = vmatprep.subr.bf16.mxu0 0
        %2108 = vmatpush2.bf16.msra.mxu0 0
        %2109 = vmatprep.subr.bf16.mxu0 0
        %2110 = vmatpush2.bf16.msra.mxu0 0
        %2111 = vmatprep.subr.bf16.mxu0 0
        %2112 = vmatpush2.bf16.msra.mxu0 0
        %2113 = vmatprep.subr.bf16.mxu0 0
        %2114 = vmatpush2.bf16.msra.mxu0 0
        %2115 = vmatprep.subr.bf16.mxu0 0
        %2116 = vmatpush2.bf16.msra.mxu0 0
        %2117 = vmatprep.mubr.bf16.mxu0 0
        %2118 = vmatmul.mubr.bf16.gmra.mxu0 %v2062
        %v2119 = vpop.f32.mrf.mxu0
        %v2120 = vadd.f32 0.0, %v2119
        %v2121 = vpop.f32.mrf.mxu0
        %v2122 = vpop.f32.mrf.mxu0
        %v2123 = vadd.f32 0.0, %v2122
        %v2124 = vpop.f32.mrf.mxu0
        %2125 = vmatprep.mubr.bf16.mxu0 0
        %2126 = vmatmul.mubr.bf16.gmra.mxu0 %v2065
        %v2127 = vpop.f32.mrf.mxu0
        %v2128 = vadd.f32 0.0, %v2127
        %v2129 = vpop.f32.mrf.mxu0
        %v2130 = vpop.f32.mrf.mxu0
        %v2131 = vadd.f32 0.0, %v2130
        %v2132 = vpop.f32.mrf.mxu0
        %2133 = vmatprep.mubr.bf16.mxu0 0
        %2134 = vmatmul.mubr.bf16.gmra.mxu0 %v2068
        %v2135 = vpop.f32.mrf.mxu0
        %v2136 = vadd.f32 0.0, %v2135
        %v2137 = vpop.f32.mrf.mxu0
        %v2138 = vpop.f32.mrf.mxu0
        %v2139 = vadd.f32 0.0, %v2138
        %v2140 = vpop.f32.mrf.mxu0
        %2141 = vmatprep.mubr.bf16.mxu0 0
        %2142 = vmatmul.mubr.bf16.gmra.mxu0 %v2071
        %v2143 = vpop.f32.mrf.mxu0
        %v2144 = vadd.f32 0.0, %v2143
        %v2145 = vpop.f32.mrf.mxu0
        %v2146 = vpop.f32.mrf.mxu0
        %v2147 = vadd.f32 0.0, %v2146
        %v2148 = vpop.f32.mrf.mxu0
        %2149 = vmatprep.mubr.bf16.mxu0 0
        %2150 = vmatmul.mubr.bf16.gmra.mxu0 %v2074
        %v2151 = vpop.f32.mrf.mxu0
        %v2152 = vadd.f32 0.0, %v2151
        %v2153 = vpop.f32.mrf.mxu0
        %v2154 = vpop.f32.mrf.mxu0
        %v2155 = vadd.f32 0.0, %v2154
        %v2156 = vpop.f32.mrf.mxu0
        %2157 = vmatprep.mubr.bf16.mxu0 0
        %2158 = vmatmul.mubr.bf16.gmra.mxu0 %v2077
        %v2159 = vpop.f32.mrf.mxu0
        %v2160 = vadd.f32 0.0, %v2159
        %v2161 = vpop.f32.mrf.mxu0
        %v2162 = vpop.f32.mrf.mxu0
        %v2163 = vadd.f32 0.0, %v2162
        %v2164 = vpop.f32.mrf.mxu0
        %2165 = vmatprep.mubr.bf16.mxu0 0
        %2166 = vmatmul.mubr.bf16.gmra.mxu0 %v2080
        %v2167 = vpop.f32.mrf.mxu0
        %v2168 = vadd.f32 0.0, %v2167
        %v2169 = vpop.f32.mrf.mxu0
        %v2170 = vpop.f32.mrf.mxu0
        %v2171 = vadd.f32 0.0, %v2170
        %v2172 = vpop.f32.mrf.mxu0
        %2173 = vmatprep.mubr.bf16.mxu0 0
        %2174 = vmatmul.mubr.bf16.gmra.mxu0 %v2083
        %v2175 = vpop.f32.mrf.mxu0
        %v2176 = vadd.f32 0.0, %v2175
        %v2177 = vpop.f32.mrf.mxu0
        %v2178 = vpop.f32.mrf.mxu0
        %v2179 = vadd.f32 0.0, %v2178
        %v2180 = vpop.f32.mrf.mxu0
        %2181 = vdwg.mxu0
        %v2186 = vunpack.c.l.b16 %v1124
        %v2187 = vunpack.c.l.b16 %v1125
        %v2188 = vunpack.c.l.b16 %v1126
        %v2189 = vunpack.c.l.b16 %v1127
        %v2190 = vpack.c.b16 %v2187, %v2186
        %v2191 = vpack.c.b16 %v2189, %v2188
        %v2195 = vsel %vm1164, %v1559, 0
        %v2198 = vsel %vm1164, %v1560, 0
        %v2201 = vsel %vm1164, %v1561, 0
        %v2204 = vsel %vm1164, %v1562, 0
        %v2207 = vsel %vm1164, %v1563, 0
        %v2210 = vsel %vm1164, %v1564, 0
        %v2213 = vsel %vm1164, %v1565, 0
        %v2216 = vsel %vm1164, %v1566, 0
        %2218 = vmatprep.subr.bf16.mxu0 0
        %2219 = vmatpush1.bf16.msra.mxu0 0
        %2220 = vmatprep.subr.bf16.mxu0 0
        %2221 = vmatpush1.bf16.msra.mxu0 0
        %2222 = vmatprep.subr.bf16.mxu0 0
        %2223 = vmatpush1.bf16.msra.mxu0 0
        %2224 = vmatprep.subr.bf16.mxu0 0
        %2225 = vmatpush1.bf16.msra.mxu0 0
        %2226 = vmatprep.subr.bf16.mxu0 0
        %2227 = vmatpush1.bf16.msra.mxu0 0
        %2228 = vmatprep.subr.bf16.mxu0 0
        %2229 = vmatpush1.bf16.msra.mxu0 0
        %2230 = vmatprep.subr.bf16.mxu0 0
        %2231 = vmatpush1.bf16.msra.mxu0 %v2191
        %2232 = vmatprep.subr.bf16.mxu0 0
        %2233 = vmatpush1.bf16.msra.mxu0 %v2190
        %2234 = vmatprep.subr.bf16.mxu0 0
        %2235 = vmatpush2.bf16.msra.mxu0 0
        %2236 = vmatprep.subr.bf16.mxu0 0
        %2237 = vmatpush2.bf16.msra.mxu0 0
        %2238 = vmatprep.subr.bf16.mxu0 0
        %2239 = vmatpush2.bf16.msra.mxu0 0
        %2240 = vmatprep.subr.bf16.mxu0 0
        %2241 = vmatpush2.bf16.msra.mxu0 0
        %2242 = vmatprep.subr.bf16.mxu0 0
        %2243 = vmatpush2.bf16.msra.mxu0 0
        %2244 = vmatprep.subr.bf16.mxu0 0
        %2245 = vmatpush2.bf16.msra.mxu0 0
        %2246 = vmatprep.subr.bf16.mxu0 0
        %2247 = vmatpush2.bf16.msra.mxu0 0
        %2248 = vmatprep.subr.bf16.mxu0 0
        %2249 = vmatpush2.bf16.msra.mxu0 0
        %2250 = vmatprep.mubr.bf16.mxu0 0
        %2251 = vmatmul.mubr.bf16.gmra.mxu0 %v2195
        %v2252 = vpop.f32.mrf.mxu0
        %v2253 = vadd.f32 %v2120, %v2252
        %v2254 = vpop.f32.mrf.mxu0
        %v2255 = vpop.f32.mrf.mxu0
        %v2256 = vadd.f32 %v2123, %v2255
        %v2257 = vpop.f32.mrf.mxu0
        %2258 = vmatprep.mubr.bf16.mxu0 0
        %2259 = vmatmul.mubr.bf16.gmra.mxu0 %v2198
        %v2260 = vpop.f32.mrf.mxu0
        %v2261 = vadd.f32 %v2128, %v2260
        %v2262 = vpop.f32.mrf.mxu0
        %v2263 = vpop.f32.mrf.mxu0
        %v2264 = vadd.f32 %v2131, %v2263
        %v2265 = vpop.f32.mrf.mxu0
        %2266 = vmatprep.mubr.bf16.mxu0 0
        %2267 = vmatmul.mubr.bf16.gmra.mxu0 %v2201
        %v2268 = vpop.f32.mrf.mxu0
        %v2269 = vadd.f32 %v2136, %v2268
        %v2270 = vpop.f32.mrf.mxu0
        %v2271 = vpop.f32.mrf.mxu0
        %v2272 = vadd.f32 %v2139, %v2271
        %v2273 = vpop.f32.mrf.mxu0
        %2274 = vmatprep.mubr.bf16.mxu0 0
        %2275 = vmatmul.mubr.bf16.gmra.mxu0 %v2204
        %v2276 = vpop.f32.mrf.mxu0
        %v2277 = vadd.f32 %v2144, %v2276
        %v2278 = vpop.f32.mrf.mxu0
        %v2279 = vpop.f32.mrf.mxu0
        %v2280 = vadd.f32 %v2147, %v2279
        %v2281 = vpop.f32.mrf.mxu0
        %2282 = vmatprep.mubr.bf16.mxu0 0
        %2283 = vmatmul.mubr.bf16.gmra.mxu0 %v2207
        %v2284 = vpop.f32.mrf.mxu0
        %v2285 = vadd.f32 %v2152, %v2284
        %v2286 = vpop.f32.mrf.mxu0
        %v2287 = vpop.f32.mrf.mxu0
        %v2288 = vadd.f32 %v2155, %v2287
        %v2289 = vpop.f32.mrf.mxu0
        %2290 = vmatprep.mubr.bf16.mxu0 0
        %2291 = vmatmul.mubr.bf16.gmra.mxu0 %v2210
        %v2292 = vpop.f32.mrf.mxu0
        %v2293 = vadd.f32 %v2160, %v2292
        %v2294 = vpop.f32.mrf.mxu0
        %v2295 = vpop.f32.mrf.mxu0
        %v2296 = vadd.f32 %v2163, %v2295
        %v2297 = vpop.f32.mrf.mxu0
        %2298 = vmatprep.mubr.bf16.mxu0 0
        %2299 = vmatmul.mubr.bf16.gmra.mxu0 %v2213
        %v2300 = vpop.f32.mrf.mxu0
        %v2301 = vadd.f32 %v2168, %v2300
        %v2302 = vpop.f32.mrf.mxu0
        %v2303 = vpop.f32.mrf.mxu0
        %v2304 = vadd.f32 %v2171, %v2303
        %v2305 = vpop.f32.mrf.mxu0
        %2306 = vmatprep.mubr.bf16.mxu0 0
        %2307 = vmatmul.mubr.bf16.gmra.mxu0 %v2216
        %v2308 = vpop.f32.mrf.mxu0
        %v2309 = vadd.f32 %v2176, %v2308
        %v2310 = vpop.f32.mrf.mxu0
        %v2311 = vpop.f32.mrf.mxu0
        %v2312 = vadd.f32 %v2179, %v2311
        %v2313 = vpop.f32.mrf.mxu0
        %2314 = vdwg.mxu0
        %2315 = vrot.lane.b32.xlu0 %v1140, 64
        %v2316 = vpop.permute.xlu0 %2315
        %2317 = vrot.lane.b32.xlu0 %v1141, 64
        %v2318 = vpop.permute.xlu0 %2317
        %2319 = vrot.lane.b32.xlu0 %v1142, 64
        %v2320 = vpop.permute.xlu0 %2319
        %2321 = vrot.lane.b32.xlu0 %v1143, 64
        %v2322 = vpop.permute.xlu0 %2321
        %2323 = vrot.lane.b32.xlu0 %v1144, 64
        %v2324 = vpop.permute.xlu0 %2323
        %2325 = vrot.lane.b32.xlu0 %v1145, 64
        %v2326 = vpop.permute.xlu0 %2325
        %2327 = vrot.lane.b32.xlu0 %v1146, 64
        %v2328 = vpop.permute.xlu0 %2327
        %2329 = vrot.lane.b32.xlu0 %v1147, 64
        %v2330 = vpop.permute.xlu0 %2329
        %2331 = vrot.lane.b32.xlu0 %v1148, 64
        %v2332 = vpop.permute.xlu0 %2331
        %2333 = vrot.lane.b32.xlu0 %v1149, 64
        %v2334 = vpop.permute.xlu0 %2333
        %2335 = vrot.lane.b32.xlu0 %v1150, 64
        %v2336 = vpop.permute.xlu0 %2335
        %2337 = vrot.lane.b32.xlu0 %v1151, 64
        %v2338 = vpop.permute.xlu0 %2337
        %2339 = vrot.lane.b32.xlu0 %v1152, 64
        %v2340 = vpop.permute.xlu0 %2339
        %2341 = vrot.lane.b32.xlu0 %v1153, 64
        %v2342 = vpop.permute.xlu0 %2341
        %2343 = vrot.lane.b32.xlu0 %v1154, 64
        %v2344 = vpop.permute.xlu0 %2343
        %2345 = vrot.lane.b32.xlu0 %v1155, 64
        %v2346 = vpop.permute.xlu0 %2345
        %v2348 = vsel %vm1164, %v2316, 0
        %v2351 = vsel %vm1164, %v2318, 0
        %v2354 = vsel %vm1164, %v2320, 0
        %v2357 = vsel %vm1164, %v2322, 0
        %v2360 = vsel %vm1164, %v2324, 0
        %v2363 = vsel %vm1164, %v2326, 0
        %v2366 = vsel %vm1164, %v2328, 0
        %v2369 = vsel %vm1164, %v2330, 0
        %v2372 = vsel %vm1164, %v2332, 0
        %v2375 = vsel %vm1164, %v2334, 0
        %v2378 = vsel %vm1164, %v2336, 0
        %v2381 = vsel %vm1164, %v2338, 0
        %v2384 = vsel %vm1164, %v2340, 0
        %v2387 = vsel %vm1164, %v2342, 0
        %v2390 = vsel %vm1164, %v2344, 0
        %v2393 = vsel %vm1164, %v2346, 0
        %2395 = vmatprep.subr.bf16.mxu0 0
        %2396 = vmatpush1.bf16.xpose.msra.mxu0 %v2393
        %2397 = vmatprep.subr.bf16.mxu0 0
        %2398 = vmatpush1.bf16.xpose.msra.mxu0 %v2390
        %2399 = vmatprep.subr.bf16.mxu0 0
        %2400 = vmatpush1.bf16.xpose.msra.mxu0 %v2387
        %2401 = vmatprep.subr.bf16.mxu0 0
        %2402 = vmatpush1.bf16.xpose.msra.mxu0 %v2384
        %2403 = vmatprep.subr.bf16.mxu0 0
        %2404 = vmatpush1.bf16.xpose.msra.mxu0 %v2381
        %2405 = vmatprep.subr.bf16.mxu0 0
        %2406 = vmatpush1.bf16.xpose.msra.mxu0 %v2378
        %2407 = vmatprep.subr.bf16.mxu0 0
        %2408 = vmatpush1.bf16.xpose.msra.mxu0 %v2375
        %2409 = vmatprep.subr.bf16.mxu0 0
        %2410 = vmatpush1.bf16.xpose.msra.mxu0 %v2372
        %2411 = vmatprep.subr.bf16.mxu0 0
        %2412 = vmatpush2.bf16.xpose.msra.mxu0 0
        %2413 = vmatprep.subr.bf16.mxu0 0
        %2414 = vmatpush2.bf16.xpose.msra.mxu0 0
        %2415 = vmatprep.subr.bf16.mxu0 0
        %2416 = vmatpush2.bf16.xpose.msra.mxu0 0
        %2417 = vmatprep.subr.bf16.mxu0 0
        %2418 = vmatpush2.bf16.xpose.msra.mxu0 0
        %2419 = vmatprep.subr.bf16.mxu0 0
        %2420 = vmatpush2.bf16.xpose.msra.mxu0 0
        %2421 = vmatprep.subr.bf16.mxu0 0
        %2422 = vmatpush2.bf16.xpose.msra.mxu0 0
        %2423 = vmatprep.subr.bf16.mxu0 0
        %2424 = vmatpush2.bf16.xpose.msra.mxu0 0
        %2425 = vmatprep.subr.bf16.mxu0 0
        %2426 = vmatpush2.bf16.xpose.msra.mxu0 0
        %2427 = vmatprep.mubr.bf16.mxu0 0
        %2428 = vmatmul.mubr.bf16.gmra.mxu0 %v2348
        %v2429 = vpop.f32.mrf.mxu0
        %v2430 = vadd.f32 0.0, %v2429
        %v2431 = vpop.f32.mrf.mxu0
        %v2432 = vpop.f32.mrf.mxu0
        %v2433 = vadd.f32 0.0, %v2432
        %v2434 = vpop.f32.mrf.mxu0
        %2435 = vmatprep.mubr.bf16.mxu0 0
        %2436 = vmatmul.mubr.bf16.gmra.mxu0 %v2351
        %v2437 = vpop.f32.mrf.mxu0
        %v2438 = vadd.f32 0.0, %v2437
        %v2439 = vpop.f32.mrf.mxu0
        %v2440 = vpop.f32.mrf.mxu0
        %v2441 = vadd.f32 0.0, %v2440
        %v2442 = vpop.f32.mrf.mxu0
        %2443 = vmatprep.mubr.bf16.mxu0 0
        %2444 = vmatmul.mubr.bf16.gmra.mxu0 %v2354
        %v2445 = vpop.f32.mrf.mxu0
        %v2446 = vadd.f32 0.0, %v2445
        %v2447 = vpop.f32.mrf.mxu0
        %v2448 = vpop.f32.mrf.mxu0
        %v2449 = vadd.f32 0.0, %v2448
        %v2450 = vpop.f32.mrf.mxu0
        %2451 = vmatprep.mubr.bf16.mxu0 0
        %2452 = vmatmul.mubr.bf16.gmra.mxu0 %v2357
        %v2453 = vpop.f32.mrf.mxu0
        %v2454 = vadd.f32 0.0, %v2453
        %v2455 = vpop.f32.mrf.mxu0
        %v2456 = vpop.f32.mrf.mxu0
        %v2457 = vadd.f32 0.0, %v2456
        %v2458 = vpop.f32.mrf.mxu0
        %2459 = vmatprep.mubr.bf16.mxu0 0
        %2460 = vmatmul.mubr.bf16.gmra.mxu0 %v2360
        %v2461 = vpop.f32.mrf.mxu0
        %v2462 = vadd.f32 0.0, %v2461
        %v2463 = vpop.f32.mrf.mxu0
        %v2464 = vpop.f32.mrf.mxu0
        %v2465 = vadd.f32 0.0, %v2464
        %v2466 = vpop.f32.mrf.mxu0
        %2467 = vmatprep.mubr.bf16.mxu0 0
        %2468 = vmatmul.mubr.bf16.gmra.mxu0 %v2363
        %v2469 = vpop.f32.mrf.mxu0
        %v2470 = vadd.f32 0.0, %v2469
        %v2471 = vpop.f32.mrf.mxu0
        %v2472 = vpop.f32.mrf.mxu0
        %v2473 = vadd.f32 0.0, %v2472
        %v2474 = vpop.f32.mrf.mxu0
        %2475 = vmatprep.mubr.bf16.mxu0 0
        %2476 = vmatmul.mubr.bf16.gmra.mxu0 %v2366
        %v2477 = vpop.f32.mrf.mxu0
        %v2478 = vadd.f32 0.0, %v2477
        %v2479 = vpop.f32.mrf.mxu0
        %v2480 = vpop.f32.mrf.mxu0
        %v2481 = vadd.f32 0.0, %v2480
        %v2482 = vpop.f32.mrf.mxu0
        %2483 = vmatprep.mubr.bf16.mxu0 0
        %2484 = vmatmul.mubr.bf16.gmra.mxu0 %v2369
        %v2485 = vpop.f32.mrf.mxu0
        %v2486 = vadd.f32 0.0, %v2485
        %v2487 = vpop.f32.mrf.mxu0
        %v2488 = vpop.f32.mrf.mxu0
        %v2489 = vadd.f32 0.0, %v2488
        %v2490 = vpop.f32.mrf.mxu0
        %2491 = vdwg.mxu0
        %2492 = vmax.xlane.f32.xlu0 %v2430
        %v2493 = vpop.xlane.xlu0 %2492
        %2494 = vmax.xlane.f32.xlu0 %v2433
        %v2495 = vpop.xlane.xlu0 %2494
        %2496 = vmax.xlane.f32.xlu0 %v2438
        %v2497 = vpop.xlane.xlu0 %2496
        %2498 = vmax.xlane.f32.xlu0 %v2441
        %v2499 = vpop.xlane.xlu0 %2498
        %2500 = vmax.xlane.f32.xlu0 %v2446
        %v2501 = vpop.xlane.xlu0 %2500
        %2502 = vmax.xlane.f32.xlu0 %v2449
        %v2503 = vpop.xlane.xlu0 %2502
        %2504 = vmax.xlane.f32.xlu0 %v2454
        %v2505 = vpop.xlane.xlu0 %2504
        %2506 = vmax.xlane.f32.xlu0 %v2457
        %v2507 = vpop.xlane.xlu0 %2506
        %2508 = vmax.xlane.f32.xlu0 %v2462
        %v2509 = vpop.xlane.xlu0 %2508
        %2510 = vmax.xlane.f32.xlu0 %v2465
        %v2511 = vpop.xlane.xlu0 %2510
        %2512 = vmax.xlane.f32.xlu0 %v2470
        %v2513 = vpop.xlane.xlu0 %2512
        %2514 = vmax.xlane.f32.xlu0 %v2473
        %v2515 = vpop.xlane.xlu0 %2514
        %2516 = vmax.xlane.f32.xlu0 %v2478
        %v2517 = vpop.xlane.xlu0 %2516
        %2518 = vmax.xlane.f32.xlu0 %v2481
        %v2519 = vpop.xlane.xlu0 %2518
        %2520 = vmax.xlane.f32.xlu0 %v2486
        %v2521 = vpop.xlane.xlu0 %2520
        %2522 = vmax.xlane.f32.xlu0 %v2489
        %v2523 = vpop.xlane.xlu0 %2522
        %v2524 = vsub.f32 %v2430, %v2493
        %v2525 = vsub.f32 %v2433, %v2495
        %v2526 = vsub.f32 %v2438, %v2497
        %v2527 = vsub.f32 %v2441, %v2499
        %v2528 = vsub.f32 %v2446, %v2501
        %v2529 = vsub.f32 %v2449, %v2503
        %v2530 = vsub.f32 %v2454, %v2505
        %v2531 = vsub.f32 %v2457, %v2507
        %v2532 = vsub.f32 %v2462, %v2509
        %v2533 = vsub.f32 %v2465, %v2511
        %v2534 = vsub.f32 %v2470, %v2513
        %v2535 = vsub.f32 %v2473, %v2515
        %v2536 = vsub.f32 %v2478, %v2517
        %v2537 = vsub.f32 %v2481, %v2519
        %v2538 = vsub.f32 %v2486, %v2521
        %v2539 = vsub.f32 %v2489, %v2523
        %v2540 = vmul.f32 %v2524, 1.442695
        %v2541 = vpow.pop %v2540
        %v2542 = vmul.f32 %v2525, 1.442695
        %v2543 = vpow.pop %v2542
        %v2544 = vmul.f32 %v2526, 1.442695
        %v2545 = vpow.pop %v2544
        %v2546 = vmul.f32 %v2527, 1.442695
        %v2547 = vpow.pop %v2546
        %v2548 = vmul.f32 %v2528, 1.442695
        %v2549 = vpow.pop %v2548
        %v2550 = vmul.f32 %v2529, 1.442695
        %v2551 = vpow.pop %v2550
        %v2552 = vmul.f32 %v2530, 1.442695
        %v2553 = vpow.pop %v2552
        %v2554 = vmul.f32 %v2531, 1.442695
        %v2555 = vpow.pop %v2554
        %v2556 = vmul.f32 %v2532, 1.442695
        %v2557 = vpow.pop %v2556
        %v2558 = vmul.f32 %v2533, 1.442695
        %v2559 = vpow.pop %v2558
        %v2560 = vmul.f32 %v2534, 1.442695
        %v2561 = vpow.pop %v2560
        %v2562 = vmul.f32 %v2535, 1.442695
        %v2563 = vpow.pop %v2562
        %v2564 = vmul.f32 %v2536, 1.442695
        %v2565 = vpow.pop %v2564
        %v2566 = vmul.f32 %v2537, 1.442695
        %v2567 = vpow.pop %v2566
        %v2568 = vmul.f32 %v2538, 1.442695
        %v2569 = vpow.pop %v2568
        %v2570 = vmul.f32 %v2539, 1.442695
        %v2571 = vpow.pop %v2570
        %2572 = vadd.xlane.f32.xlu0 %v2541
        %v2573 = vpop.xlane.xlu0 %2572
        %2574 = vadd.xlane.f32.xlu0 %v2543
        %v2575 = vpop.xlane.xlu0 %2574
        %2576 = vadd.xlane.f32.xlu0 %v2545
        %v2577 = vpop.xlane.xlu0 %2576
        %2578 = vadd.xlane.f32.xlu0 %v2547
        %v2579 = vpop.xlane.xlu0 %2578
        %2580 = vadd.xlane.f32.xlu0 %v2549
        %v2581 = vpop.xlane.xlu0 %2580
        %2582 = vadd.xlane.f32.xlu0 %v2551
        %v2583 = vpop.xlane.xlu0 %2582
        %2584 = vadd.xlane.f32.xlu0 %v2553
        %v2585 = vpop.xlane.xlu0 %2584
        %2586 = vadd.xlane.f32.xlu0 %v2555
        %v2587 = vpop.xlane.xlu0 %2586
        %2588 = vadd.xlane.f32.xlu0 %v2557
        %v2589 = vpop.xlane.xlu0 %2588
        %2590 = vadd.xlane.f32.xlu0 %v2559
        %v2591 = vpop.xlane.xlu0 %2590
        %2592 = vadd.xlane.f32.xlu0 %v2561
        %v2593 = vpop.xlane.xlu0 %2592
        %2594 = vadd.xlane.f32.xlu0 %v2563
        %v2595 = vpop.xlane.xlu0 %2594
        %2596 = vadd.xlane.f32.xlu0 %v2565
        %v2597 = vpop.xlane.xlu0 %2596
        %2598 = vadd.xlane.f32.xlu0 %v2567
        %v2599 = vpop.xlane.xlu0 %2598
        %2600 = vadd.xlane.f32.xlu0 %v2569
        %v2601 = vpop.xlane.xlu0 %2600
        %2602 = vadd.xlane.f32.xlu0 %v2571
        %v2603 = vpop.xlane.xlu0 %2602
        %v2604 = vrcp.pop %v2573
        %v2605 = vrcp.pop %v2575
        %v2606 = vrcp.pop %v2577
        %v2607 = vrcp.pop %v2579
        %v2608 = vrcp.pop %v2581
        %v2609 = vrcp.pop %v2583
        %v2610 = vrcp.pop %v2585
        %v2611 = vrcp.pop %v2587
        %v2612 = vrcp.pop %v2589
        %v2613 = vrcp.pop %v2591
        %v2614 = vrcp.pop %v2593
        %v2615 = vrcp.pop %v2595
        %v2616 = vrcp.pop %v2597
        %v2617 = vrcp.pop %v2599
        %v2618 = vrcp.pop %v2601
        %v2619 = vrcp.pop %v2603
        %v2620 = vmul.f32 %v2541, %v2604
        %v2621 = vmul.f32 %v2543, %v2605
        %v2622 = vmul.f32 %v2545, %v2606
        %v2623 = vmul.f32 %v2547, %v2607
        %v2624 = vmul.f32 %v2549, %v2608
        %v2625 = vmul.f32 %v2551, %v2609
        %v2626 = vmul.f32 %v2553, %v2610
        %v2627 = vmul.f32 %v2555, %v2611
        %v2628 = vmul.f32 %v2557, %v2612
        %v2629 = vmul.f32 %v2559, %v2613
        %v2630 = vmul.f32 %v2561, %v2614
        %v2631 = vmul.f32 %v2563, %v2615
        %v2632 = vmul.f32 %v2565, %v2616
        %v2633 = vmul.f32 %v2567, %v2617
        %v2634 = vmul.f32 %v2569, %v2618
        %v2635 = vmul.f32 %v2571, %v2619
        %v2636 = vpack.c.bf16 %v2621, %v2620
        %v2637 = vpack.c.bf16 %v2623, %v2622
        %v2638 = vpack.c.bf16 %v2625, %v2624
        %v2639 = vpack.c.bf16 %v2627, %v2626
        %v2640 = vpack.c.bf16 %v2629, %v2628
        %v2641 = vpack.c.bf16 %v2631, %v2630
        %v2642 = vpack.c.bf16 %v2633, %v2632
        %v2643 = vpack.c.bf16 %v2635, %v2634
        %2644 = vrot.lane.b32.xlu0 %v1156, 64
        %v2645 = vpop.permute.xlu0 %2644
        %2646 = vrot.lane.b32.xlu0 %v1157, 64
        %v2647 = vpop.permute.xlu0 %2646
        %2648 = vrot.lane.b32.xlu0 %v1158, 64
        %v2649 = vpop.permute.xlu0 %2648
        %2650 = vrot.lane.b32.xlu0 %v1159, 64
        %v2651 = vpop.permute.xlu0 %2650
        %2652 = vrot.lane.b32.xlu0 %v1160, 64
        %v2653 = vpop.permute.xlu0 %2652
        %2654 = vrot.lane.b32.xlu0 %v1161, 64
        %v2655 = vpop.permute.xlu0 %2654
        %2656 = vrot.lane.b32.xlu0 %v1162, 64
        %v2657 = vpop.permute.xlu0 %2656
        %2658 = vrot.lane.b32.xlu0 %v1163, 64
        %v2659 = vpop.permute.xlu0 %2658
        %2668 = vmatprep.subr.bf16.mxu0 0
        %2669 = vmatpush1.bf16.msra.mxu0 %v2659
        %2670 = vmatprep.subr.bf16.mxu0 0
        %2671 = vmatpush1.bf16.msra.mxu0 %v2657
        %2672 = vmatprep.subr.bf16.mxu0 0
        %2673 = vmatpush1.bf16.msra.mxu0 %v2655
        %2674 = vmatprep.subr.bf16.mxu0 0
        %2675 = vmatpush1.bf16.msra.mxu0 %v2653
        %2676 = vmatprep.subr.bf16.mxu0 0
        %2677 = vmatpush1.bf16.msra.mxu0 %v2651
        %2678 = vmatprep.subr.bf16.mxu0 0
        %2679 = vmatpush1.bf16.msra.mxu0 %v2649
        %2680 = vmatprep.subr.bf16.mxu0 0
        %2681 = vmatpush1.bf16.msra.mxu0 %v2647
        %2682 = vmatprep.subr.bf16.mxu0 0
        %2683 = vmatpush1.bf16.msra.mxu0 %v2645
        %2684 = vmatprep.subr.bf16.mxu0 0
        %2685 = vmatpush2.bf16.msra.mxu0 0
        %2686 = vmatprep.subr.bf16.mxu0 0
        %2687 = vmatpush2.bf16.msra.mxu0 0
        %2688 = vmatprep.subr.bf16.mxu0 0
        %2689 = vmatpush2.bf16.msra.mxu0 0
        %2690 = vmatprep.subr.bf16.mxu0 0
        %2691 = vmatpush2.bf16.msra.mxu0 0
        %2692 = vmatprep.subr.bf16.mxu0 0
        %2693 = vmatpush2.bf16.msra.mxu0 0
        %2694 = vmatprep.subr.bf16.mxu0 0
        %2695 = vmatpush2.bf16.msra.mxu0 0
        %2696 = vmatprep.subr.bf16.mxu0 0
        %2697 = vmatpush2.bf16.msra.mxu0 0
        %2698 = vmatprep.subr.bf16.mxu0 0
        %2699 = vmatpush2.bf16.msra.mxu0 0
        %2700 = vmatprep.mubr.bf16.mxu0 0
        %2701 = vmatmul.mubr.bf16.gmra.mxu0 %v2636
        %v2702 = vpop.f32.mrf.mxu0
        %v2703 = vadd.f32 0.0, %v2702
        %v2704 = vpop.f32.mrf.mxu0
        %v2705 = vpop.f32.mrf.mxu0
        %v2706 = vadd.f32 0.0, %v2705
        %v2707 = vpop.f32.mrf.mxu0
        %2708 = vmatprep.mubr.bf16.mxu0 0
        %2709 = vmatmul.mubr.bf16.gmra.mxu0 %v2637
        %v2710 = vpop.f32.mrf.mxu0
        %v2711 = vadd.f32 0.0, %v2710
        %v2712 = vpop.f32.mrf.mxu0
        %v2713 = vpop.f32.mrf.mxu0
        %v2714 = vadd.f32 0.0, %v2713
        %v2715 = vpop.f32.mrf.mxu0
        %2716 = vmatprep.mubr.bf16.mxu0 0
        %2717 = vmatmul.mubr.bf16.gmra.mxu0 %v2638
        %v2718 = vpop.f32.mrf.mxu0
        %v2719 = vadd.f32 0.0, %v2718
        %v2720 = vpop.f32.mrf.mxu0
        %v2721 = vpop.f32.mrf.mxu0
        %v2722 = vadd.f32 0.0, %v2721
        %v2723 = vpop.f32.mrf.mxu0
        %2724 = vmatprep.mubr.bf16.mxu0 0
        %2725 = vmatmul.mubr.bf16.gmra.mxu0 %v2639
        %v2726 = vpop.f32.mrf.mxu0
        %v2727 = vadd.f32 0.0, %v2726
        %v2728 = vpop.f32.mrf.mxu0
        %v2729 = vpop.f32.mrf.mxu0
        %v2730 = vadd.f32 0.0, %v2729
        %v2731 = vpop.f32.mrf.mxu0
        %2732 = vmatprep.mubr.bf16.mxu0 0
        %2733 = vmatmul.mubr.bf16.gmra.mxu0 %v2640
        %v2734 = vpop.f32.mrf.mxu0
        %v2735 = vadd.f32 0.0, %v2734
        %v2736 = vpop.f32.mrf.mxu0
        %v2737 = vpop.f32.mrf.mxu0
        %v2738 = vadd.f32 0.0, %v2737
        %v2739 = vpop.f32.mrf.mxu0
        %2740 = vmatprep.mubr.bf16.mxu0 0
        %2741 = vmatmul.mubr.bf16.gmra.mxu0 %v2641
        %v2742 = vpop.f32.mrf.mxu0
        %v2743 = vadd.f32 0.0, %v2742
        %v2744 = vpop.f32.mrf.mxu0
        %v2745 = vpop.f32.mrf.mxu0
        %v2746 = vadd.f32 0.0, %v2745
        %v2747 = vpop.f32.mrf.mxu0
        %2748 = vmatprep.mubr.bf16.mxu0 0
        %2749 = vmatmul.mubr.bf16.gmra.mxu0 %v2642
        %v2750 = vpop.f32.mrf.mxu0
        %v2751 = vadd.f32 0.0, %v2750
        %v2752 = vpop.f32.mrf.mxu0
        %v2753 = vpop.f32.mrf.mxu0
        %v2754 = vadd.f32 0.0, %v2753
        %v2755 = vpop.f32.mrf.mxu0
        %2756 = vmatprep.mubr.bf16.mxu0 0
        %2757 = vmatmul.mubr.bf16.gmra.mxu0 %v2643
        %v2758 = vpop.f32.mrf.mxu0
        %v2759 = vadd.f32 0.0, %v2758
        %v2760 = vpop.f32.mrf.mxu0
        %v2761 = vpop.f32.mrf.mxu0
        %v2762 = vadd.f32 0.0, %v2761
        %v2763 = vpop.f32.mrf.mxu0
        %2764 = vdwg.mxu0
        %v2765 = vpack.c.bf16 %v2706, %v2703
        %v2766 = vpack.c.bf16 %v2714, %v2711
        %v2767 = vpack.c.bf16 %v2722, %v2719
        %v2768 = vpack.c.bf16 %v2730, %v2727
        %v2769 = vpack.c.bf16 %v2738, %v2735
        %v2770 = vpack.c.bf16 %v2746, %v2743
        %v2771 = vpack.c.bf16 %v2754, %v2751
        %v2772 = vpack.c.bf16 %v2762, %v2759
        %v2777 = vunpack.c.l.b16 %v1132
        %v2778 = vunpack.c.l.b16 %v1133
        %v2779 = vunpack.c.l.b16 %v1134
        %v2780 = vunpack.c.l.b16 %v1135
        %v2781 = vpack.c.b16 %v2778, %v2777
        %v2782 = vpack.c.b16 %v2780, %v2779
        %v2786 = vsel %vm1164, %v2765, 0
        %v2789 = vsel %vm1164, %v2766, 0
        %v2792 = vsel %vm1164, %v2767, 0
        %v2795 = vsel %vm1164, %v2768, 0
        %v2798 = vsel %vm1164, %v2769, 0
        %v2801 = vsel %vm1164, %v2770, 0
        %v2804 = vsel %vm1164, %v2771, 0
        %v2807 = vsel %vm1164, %v2772, 0
        %2809 = vmatprep.subr.bf16.mxu0 0
        %2810 = vmatpush1.bf16.msra.mxu0 0
        %2811 = vmatprep.subr.bf16.mxu0 0
        %2812 = vmatpush1.bf16.msra.mxu0 0
        %2813 = vmatprep.subr.bf16.mxu0 0
        %2814 = vmatpush1.bf16.msra.mxu0 0
        %2815 = vmatprep.subr.bf16.mxu0 0
        %2816 = vmatpush1.bf16.msra.mxu0 0
        %2817 = vmatprep.subr.bf16.mxu0 0
        %2818 = vmatpush1.bf16.msra.mxu0 0
        %2819 = vmatprep.subr.bf16.mxu0 0
        %2820 = vmatpush1.bf16.msra.mxu0 0
        %2821 = vmatprep.subr.bf16.mxu0 0
        %2822 = vmatpush1.bf16.msra.mxu0 %v2782
        %2823 = vmatprep.subr.bf16.mxu0 0
        %2824 = vmatpush1.bf16.msra.mxu0 %v2781
        %2825 = vmatprep.subr.bf16.mxu0 0
        %2826 = vmatpush2.bf16.msra.mxu0 0
        %2827 = vmatprep.subr.bf16.mxu0 0
        %2828 = vmatpush2.bf16.msra.mxu0 0
        %2829 = vmatprep.subr.bf16.mxu0 0
        %2830 = vmatpush2.bf16.msra.mxu0 0
        %2831 = vmatprep.subr.bf16.mxu0 0
        %2832 = vmatpush2.bf16.msra.mxu0 0
        %2833 = vmatprep.subr.bf16.mxu0 0
        %2834 = vmatpush2.bf16.msra.mxu0 0
        %2835 = vmatprep.subr.bf16.mxu0 0
        %2836 = vmatpush2.bf16.msra.mxu0 0
        %2837 = vmatprep.subr.bf16.mxu0 0
        %2838 = vmatpush2.bf16.msra.mxu0 0
        %2839 = vmatprep.subr.bf16.mxu0 0
        %2840 = vmatpush2.bf16.msra.mxu0 0
        %2841 = vmatprep.mubr.bf16.mxu0 0
        %2842 = vmatmul.mubr.bf16.gmra.mxu0 %v2786
        %v2843 = vpop.f32.mrf.mxu0
        %v2844 = vadd.f32 0.0, %v2843
        %v2845 = vpop.f32.mrf.mxu0
        %v2846 = vpop.f32.mrf.mxu0
        %v2847 = vadd.f32 0.0, %v2846
        %v2848 = vpop.f32.mrf.mxu0
        %2849 = vmatprep.mubr.bf16.mxu0 0
        %2850 = vmatmul.mubr.bf16.gmra.mxu0 %v2789
        %v2851 = vpop.f32.mrf.mxu0
        %v2852 = vadd.f32 0.0, %v2851
        %v2853 = vpop.f32.mrf.mxu0
        %v2854 = vpop.f32.mrf.mxu0
        %v2855 = vadd.f32 0.0, %v2854
        %v2856 = vpop.f32.mrf.mxu0
        %2857 = vmatprep.mubr.bf16.mxu0 0
        %2858 = vmatmul.mubr.bf16.gmra.mxu0 %v2792
        %v2859 = vpop.f32.mrf.mxu0
        %v2860 = vadd.f32 0.0, %v2859
        %v2861 = vpop.f32.mrf.mxu0
        %v2862 = vpop.f32.mrf.mxu0
        %v2863 = vadd.f32 0.0, %v2862
        %v2864 = vpop.f32.mrf.mxu0
        %2865 = vmatprep.mubr.bf16.mxu0 0
        %2866 = vmatmul.mubr.bf16.gmra.mxu0 %v2795
        %v2867 = vpop.f32.mrf.mxu0
        %v2868 = vadd.f32 0.0, %v2867
        %v2869 = vpop.f32.mrf.mxu0
        %v2870 = vpop.f32.mrf.mxu0
        %v2871 = vadd.f32 0.0, %v2870
        %v2872 = vpop.f32.mrf.mxu0
        %2873 = vmatprep.mubr.bf16.mxu0 0
        %2874 = vmatmul.mubr.bf16.gmra.mxu0 %v2798
        %v2875 = vpop.f32.mrf.mxu0
        %v2876 = vadd.f32 0.0, %v2875
        %v2877 = vpop.f32.mrf.mxu0
        %v2878 = vpop.f32.mrf.mxu0
        %v2879 = vadd.f32 0.0, %v2878
        %v2880 = vpop.f32.mrf.mxu0
        %2881 = vmatprep.mubr.bf16.mxu0 0
        %2882 = vmatmul.mubr.bf16.gmra.mxu0 %v2801
        %v2883 = vpop.f32.mrf.mxu0
        %v2884 = vadd.f32 0.0, %v2883
        %v2885 = vpop.f32.mrf.mxu0
        %v2886 = vpop.f32.mrf.mxu0
        %v2887 = vadd.f32 0.0, %v2886
        %v2888 = vpop.f32.mrf.mxu0
        %2889 = vmatprep.mubr.bf16.mxu0 0
        %2890 = vmatmul.mubr.bf16.gmra.mxu0 %v2804
        %v2891 = vpop.f32.mrf.mxu0
        %v2892 = vadd.f32 0.0, %v2891
        %v2893 = vpop.f32.mrf.mxu0
        %v2894 = vpop.f32.mrf.mxu0
        %v2895 = vadd.f32 0.0, %v2894
        %v2896 = vpop.f32.mrf.mxu0
        %2897 = vmatprep.mubr.bf16.mxu0 0
        %2898 = vmatmul.mubr.bf16.gmra.mxu0 %v2807
        %v2899 = vpop.f32.mrf.mxu0
        %v2900 = vadd.f32 0.0, %v2899
        %v2901 = vpop.f32.mrf.mxu0
        %v2902 = vpop.f32.mrf.mxu0
        %v2903 = vadd.f32 0.0, %v2902
        %v2904 = vpop.f32.mrf.mxu0
        %2905 = vdwg.mxu0
        %v2906 = vadd.f32 %v2253, %v2844
        %v2907 = vadd.f32 %v2256, %v2847
        %v2908 = vadd.f32 %v2261, %v2852
        %v2909 = vadd.f32 %v2264, %v2855
        %v2910 = vadd.f32 %v2269, %v2860
        %v2911 = vadd.f32 %v2272, %v2863
        %v2912 = vadd.f32 %v2277, %v2868
        %v2913 = vadd.f32 %v2280, %v2871
        %v2914 = vadd.f32 %v2285, %v2876
        %v2915 = vadd.f32 %v2288, %v2879
        %v2916 = vadd.f32 %v2293, %v2884
        %v2917 = vadd.f32 %v2296, %v2887
        %v2918 = vadd.f32 %v2301, %v2892
        %v2919 = vadd.f32 %v2304, %v2895
        %v2920 = vadd.f32 %v2309, %v2900
        %v2921 = vadd.f32 %v2312, %v2903
        %2922 = vrot.lane.b32.xlu0 %v1140, 32
        %v2923 = vpop.permute.xlu0 %2922
        %2924 = vrot.lane.b32.xlu0 %v1141, 32
        %v2925 = vpop.permute.xlu0 %2924
        %2926 = vrot.lane.b32.xlu0 %v1142, 32
        %v2927 = vpop.permute.xlu0 %2926
        %2928 = vrot.lane.b32.xlu0 %v1143, 32
        %v2929 = vpop.permute.xlu0 %2928
        %2930 = vrot.lane.b32.xlu0 %v1144, 32
        %v2931 = vpop.permute.xlu0 %2930
        %2932 = vrot.lane.b32.xlu0 %v1145, 32
        %v2933 = vpop.permute.xlu0 %2932
        %2934 = vrot.lane.b32.xlu0 %v1146, 32
        %v2935 = vpop.permute.xlu0 %2934
        %2936 = vrot.lane.b32.xlu0 %v1147, 32
        %v2937 = vpop.permute.xlu0 %2936
        %2938 = vrot.lane.b32.xlu0 %v1148, 32
        %v2939 = vpop.permute.xlu0 %2938
        %2940 = vrot.lane.b32.xlu0 %v1149, 32
        %v2941 = vpop.permute.xlu0 %2940
        %2942 = vrot.lane.b32.xlu0 %v1150, 32
        %v2943 = vpop.permute.xlu0 %2942
        %2944 = vrot.lane.b32.xlu0 %v1151, 32
        %v2945 = vpop.permute.xlu0 %2944
        %2946 = vrot.lane.b32.xlu0 %v1152, 32
        %v2947 = vpop.permute.xlu0 %2946
        %2948 = vrot.lane.b32.xlu0 %v1153, 32
        %v2949 = vpop.permute.xlu0 %2948
        %2950 = vrot.lane.b32.xlu0 %v1154, 32
        %v2951 = vpop.permute.xlu0 %2950
        %2952 = vrot.lane.b32.xlu0 %v1155, 32
        %v2953 = vpop.permute.xlu0 %2952
        %v2955 = vsel %vm1164, %v2923, 0
        %v2958 = vsel %vm1164, %v2925, 0
        %v2961 = vsel %vm1164, %v2927, 0
        %v2964 = vsel %vm1164, %v2929, 0
        %v2967 = vsel %vm1164, %v2931, 0
        %v2970 = vsel %vm1164, %v2933, 0
        %v2973 = vsel %vm1164, %v2935, 0
        %v2976 = vsel %vm1164, %v2937, 0
        %v2979 = vsel %vm1164, %v2939, 0
        %v2982 = vsel %vm1164, %v2941, 0
        %v2985 = vsel %vm1164, %v2943, 0
        %v2988 = vsel %vm1164, %v2945, 0
        %v2991 = vsel %vm1164, %v2947, 0
        %v2994 = vsel %vm1164, %v2949, 0
        %v2997 = vsel %vm1164, %v2951, 0
        %v3000 = vsel %vm1164, %v2953, 0
        %3002 = vmatprep.subr.bf16.mxu0 0
        %3003 = vmatpush1.bf16.xpose.msra.mxu0 %v3000
        %3004 = vmatprep.subr.bf16.mxu0 0
        %3005 = vmatpush1.bf16.xpose.msra.mxu0 %v2997
        %3006 = vmatprep.subr.bf16.mxu0 0
        %3007 = vmatpush1.bf16.xpose.msra.mxu0 %v2994
        %3008 = vmatprep.subr.bf16.mxu0 0
        %3009 = vmatpush1.bf16.xpose.msra.mxu0 %v2991
        %3010 = vmatprep.subr.bf16.mxu0 0
        %3011 = vmatpush1.bf16.xpose.msra.mxu0 %v2988
        %3012 = vmatprep.subr.bf16.mxu0 0
        %3013 = vmatpush1.bf16.xpose.msra.mxu0 %v2985
        %3014 = vmatprep.subr.bf16.mxu0 0
        %3015 = vmatpush1.bf16.xpose.msra.mxu0 %v2982
        %3016 = vmatprep.subr.bf16.mxu0 0
        %3017 = vmatpush1.bf16.xpose.msra.mxu0 %v2979
        %3018 = vmatprep.subr.bf16.mxu0 0
        %3019 = vmatpush2.bf16.xpose.msra.mxu0 0
        %3020 = vmatprep.subr.bf16.mxu0 0
        %3021 = vmatpush2.bf16.xpose.msra.mxu0 0
        %3022 = vmatprep.subr.bf16.mxu0 0
        %3023 = vmatpush2.bf16.xpose.msra.mxu0 0
        %3024 = vmatprep.subr.bf16.mxu0 0
        %3025 = vmatpush2.bf16.xpose.msra.mxu0 0
        %3026 = vmatprep.subr.bf16.mxu0 0
        %3027 = vmatpush2.bf16.xpose.msra.mxu0 0
        %3028 = vmatprep.subr.bf16.mxu0 0
        %3029 = vmatpush2.bf16.xpose.msra.mxu0 0
        %3030 = vmatprep.subr.bf16.mxu0 0
        %3031 = vmatpush2.bf16.xpose.msra.mxu0 0
        %3032 = vmatprep.subr.bf16.mxu0 0
        %3033 = vmatpush2.bf16.xpose.msra.mxu0 0
        %3034 = vmatprep.mubr.bf16.mxu0 0
        %3035 = vmatmul.mubr.bf16.gmra.mxu0 %v2955
        %v3036 = vpop.f32.mrf.mxu0
        %v3037 = vadd.f32 0.0, %v3036
        %v3038 = vpop.f32.mrf.mxu0
        %v3039 = vpop.f32.mrf.mxu0
        %v3040 = vadd.f32 0.0, %v3039
        %v3041 = vpop.f32.mrf.mxu0
        %3042 = vmatprep.mubr.bf16.mxu0 0
        %3043 = vmatmul.mubr.bf16.gmra.mxu0 %v2958
        %v3044 = vpop.f32.mrf.mxu0
        %v3045 = vadd.f32 0.0, %v3044
        %v3046 = vpop.f32.mrf.mxu0
        %v3047 = vpop.f32.mrf.mxu0
        %v3048 = vadd.f32 0.0, %v3047
        %v3049 = vpop.f32.mrf.mxu0
        %3050 = vmatprep.mubr.bf16.mxu0 0
        %3051 = vmatmul.mubr.bf16.gmra.mxu0 %v2961
        %v3052 = vpop.f32.mrf.mxu0
        %v3053 = vadd.f32 0.0, %v3052
        %v3054 = vpop.f32.mrf.mxu0
        %v3055 = vpop.f32.mrf.mxu0
        %v3056 = vadd.f32 0.0, %v3055
        %v3057 = vpop.f32.mrf.mxu0
        %3058 = vmatprep.mubr.bf16.mxu0 0
        %3059 = vmatmul.mubr.bf16.gmra.mxu0 %v2964
        %v3060 = vpop.f32.mrf.mxu0
        %v3061 = vadd.f32 0.0, %v3060
        %v3062 = vpop.f32.mrf.mxu0
        %v3063 = vpop.f32.mrf.mxu0
        %v3064 = vadd.f32 0.0, %v3063
        %v3065 = vpop.f32.mrf.mxu0
        %3066 = vmatprep.mubr.bf16.mxu0 0
        %3067 = vmatmul.mubr.bf16.gmra.mxu0 %v2967
        %v3068 = vpop.f32.mrf.mxu0
        %v3069 = vadd.f32 0.0, %v3068
        %v3070 = vpop.f32.mrf.mxu0
        %v3071 = vpop.f32.mrf.mxu0
        %v3072 = vadd.f32 0.0, %v3071
        %v3073 = vpop.f32.mrf.mxu0
        %3074 = vmatprep.mubr.bf16.mxu0 0
        %3075 = vmatmul.mubr.bf16.gmra.mxu0 %v2970
        %v3076 = vpop.f32.mrf.mxu0
        %v3077 = vadd.f32 0.0, %v3076
        %v3078 = vpop.f32.mrf.mxu0
        %v3079 = vpop.f32.mrf.mxu0
        %v3080 = vadd.f32 0.0, %v3079
        %v3081 = vpop.f32.mrf.mxu0
        %3082 = vmatprep.mubr.bf16.mxu0 0
        %3083 = vmatmul.mubr.bf16.gmra.mxu0 %v2973
        %v3084 = vpop.f32.mrf.mxu0
        %v3085 = vadd.f32 0.0, %v3084
        %v3086 = vpop.f32.mrf.mxu0
        %v3087 = vpop.f32.mrf.mxu0
        %v3088 = vadd.f32 0.0, %v3087
        %v3089 = vpop.f32.mrf.mxu0
        %3090 = vmatprep.mubr.bf16.mxu0 0
        %3091 = vmatmul.mubr.bf16.gmra.mxu0 %v2976
        %v3092 = vpop.f32.mrf.mxu0
        %v3093 = vadd.f32 0.0, %v3092
        %v3094 = vpop.f32.mrf.mxu0
        %v3095 = vpop.f32.mrf.mxu0
        %v3096 = vadd.f32 0.0, %v3095
        %v3097 = vpop.f32.mrf.mxu0
        %3098 = vdwg.mxu0
        %3099 = vmax.xlane.f32.xlu0 %v3037
        %v3100 = vpop.xlane.xlu0 %3099
        %3101 = vmax.xlane.f32.xlu0 %v3040
        %v3102 = vpop.xlane.xlu0 %3101
        %3103 = vmax.xlane.f32.xlu0 %v3045
        %v3104 = vpop.xlane.xlu0 %3103
        %3105 = vmax.xlane.f32.xlu0 %v3048
        %v3106 = vpop.xlane.xlu0 %3105
        %3107 = vmax.xlane.f32.xlu0 %v3053
        %v3108 = vpop.xlane.xlu0 %3107
        %3109 = vmax.xlane.f32.xlu0 %v3056
        %v3110 = vpop.xlane.xlu0 %3109
        %3111 = vmax.xlane.f32.xlu0 %v3061
        %v3112 = vpop.xlane.xlu0 %3111
        %3113 = vmax.xlane.f32.xlu0 %v3064
        %v3114 = vpop.xlane.xlu0 %3113
        %3115 = vmax.xlane.f32.xlu0 %v3069
        %v3116 = vpop.xlane.xlu0 %3115
        %3117 = vmax.xlane.f32.xlu0 %v3072
        %v3118 = vpop.xlane.xlu0 %3117
        %3119 = vmax.xlane.f32.xlu0 %v3077
        %v3120 = vpop.xlane.xlu0 %3119
        %3121 = vmax.xlane.f32.xlu0 %v3080
        %v3122 = vpop.xlane.xlu0 %3121
        %3123 = vmax.xlane.f32.xlu0 %v3085
        %v3124 = vpop.xlane.xlu0 %3123
        %3125 = vmax.xlane.f32.xlu0 %v3088
        %v3126 = vpop.xlane.xlu0 %3125
        %3127 = vmax.xlane.f32.xlu0 %v3093
        %v3128 = vpop.xlane.xlu0 %3127
        %3129 = vmax.xlane.f32.xlu0 %v3096
        %v3130 = vpop.xlane.xlu0 %3129
        %v3131 = vsub.f32 %v3037, %v3100
        %v3132 = vsub.f32 %v3040, %v3102
        %v3133 = vsub.f32 %v3045, %v3104
        %v3134 = vsub.f32 %v3048, %v3106
        %v3135 = vsub.f32 %v3053, %v3108
        %v3136 = vsub.f32 %v3056, %v3110
        %v3137 = vsub.f32 %v3061, %v3112
        %v3138 = vsub.f32 %v3064, %v3114
        %v3139 = vsub.f32 %v3069, %v3116
        %v3140 = vsub.f32 %v3072, %v3118
        %v3141 = vsub.f32 %v3077, %v3120
        %v3142 = vsub.f32 %v3080, %v3122
        %v3143 = vsub.f32 %v3085, %v3124
        %v3144 = vsub.f32 %v3088, %v3126
        %v3145 = vsub.f32 %v3093, %v3128
        %v3146 = vsub.f32 %v3096, %v3130
        %v3147 = vmul.f32 %v3131, 1.442695
        %v3148 = vpow.pop %v3147
        %v3149 = vmul.f32 %v3132, 1.442695
        %v3150 = vpow.pop %v3149
        %v3151 = vmul.f32 %v3133, 1.442695
        %v3152 = vpow.pop %v3151
        %v3153 = vmul.f32 %v3134, 1.442695
        %v3154 = vpow.pop %v3153
        %v3155 = vmul.f32 %v3135, 1.442695
        %v3156 = vpow.pop %v3155
        %v3157 = vmul.f32 %v3136, 1.442695
        %v3158 = vpow.pop %v3157
        %v3159 = vmul.f32 %v3137, 1.442695
        %v3160 = vpow.pop %v3159
        %v3161 = vmul.f32 %v3138, 1.442695
        %v3162 = vpow.pop %v3161
        %v3163 = vmul.f32 %v3139, 1.442695
        %v3164 = vpow.pop %v3163
        %v3165 = vmul.f32 %v3140, 1.442695
        %v3166 = vpow.pop %v3165
        %v3167 = vmul.f32 %v3141, 1.442695
        %v3168 = vpow.pop %v3167
        %v3169 = vmul.f32 %v3142, 1.442695
        %v3170 = vpow.pop %v3169
        %v3171 = vmul.f32 %v3143, 1.442695
        %v3172 = vpow.pop %v3171
        %v3173 = vmul.f32 %v3144, 1.442695
        %v3174 = vpow.pop %v3173
        %v3175 = vmul.f32 %v3145, 1.442695
        %v3176 = vpow.pop %v3175
        %v3177 = vmul.f32 %v3146, 1.442695
        %v3178 = vpow.pop %v3177
        %3179 = vadd.xlane.f32.xlu0 %v3148
        %v3180 = vpop.xlane.xlu0 %3179
        %3181 = vadd.xlane.f32.xlu0 %v3150
        %v3182 = vpop.xlane.xlu0 %3181
        %3183 = vadd.xlane.f32.xlu0 %v3152
        %v3184 = vpop.xlane.xlu0 %3183
        %3185 = vadd.xlane.f32.xlu0 %v3154
        %v3186 = vpop.xlane.xlu0 %3185
        %3187 = vadd.xlane.f32.xlu0 %v3156
        %v3188 = vpop.xlane.xlu0 %3187
        %3189 = vadd.xlane.f32.xlu0 %v3158
        %v3190 = vpop.xlane.xlu0 %3189
        %3191 = vadd.xlane.f32.xlu0 %v3160
        %v3192 = vpop.xlane.xlu0 %3191
        %3193 = vadd.xlane.f32.xlu0 %v3162
        %v3194 = vpop.xlane.xlu0 %3193
        %3195 = vadd.xlane.f32.xlu0 %v3164
        %v3196 = vpop.xlane.xlu0 %3195
        %3197 = vadd.xlane.f32.xlu0 %v3166
        %v3198 = vpop.xlane.xlu0 %3197
        %3199 = vadd.xlane.f32.xlu0 %v3168
        %v3200 = vpop.xlane.xlu0 %3199
        %3201 = vadd.xlane.f32.xlu0 %v3170
        %v3202 = vpop.xlane.xlu0 %3201
        %3203 = vadd.xlane.f32.xlu0 %v3172
        %v3204 = vpop.xlane.xlu0 %3203
        %3205 = vadd.xlane.f32.xlu0 %v3174
        %v3206 = vpop.xlane.xlu0 %3205
        %3207 = vadd.xlane.f32.xlu0 %v3176
        %v3208 = vpop.xlane.xlu0 %3207
        %3209 = vadd.xlane.f32.xlu0 %v3178
        %v3210 = vpop.xlane.xlu0 %3209
        %v3211 = vrcp.pop %v3180
        %v3212 = vrcp.pop %v3182
        %v3213 = vrcp.pop %v3184
        %v3214 = vrcp.pop %v3186
        %v3215 = vrcp.pop %v3188
        %v3216 = vrcp.pop %v3190
        %v3217 = vrcp.pop %v3192
        %v3218 = vrcp.pop %v3194
        %v3219 = vrcp.pop %v3196
        %v3220 = vrcp.pop %v3198
        %v3221 = vrcp.pop %v3200
        %v3222 = vrcp.pop %v3202
        %v3223 = vrcp.pop %v3204
        %v3224 = vrcp.pop %v3206
        %v3225 = vrcp.pop %v3208
        %v3226 = vrcp.pop %v3210
        %v3227 = vmul.f32 %v3148, %v3211
        %v3228 = vmul.f32 %v3150, %v3212
        %v3229 = vmul.f32 %v3152, %v3213
        %v3230 = vmul.f32 %v3154, %v3214
        %v3231 = vmul.f32 %v3156, %v3215
        %v3232 = vmul.f32 %v3158, %v3216
        %v3233 = vmul.f32 %v3160, %v3217
        %v3234 = vmul.f32 %v3162, %v3218
        %v3235 = vmul.f32 %v3164, %v3219
        %v3236 = vmul.f32 %v3166, %v3220
        %v3237 = vmul.f32 %v3168, %v3221
        %v3238 = vmul.f32 %v3170, %v3222
        %v3239 = vmul.f32 %v3172, %v3223
        %v3240 = vmul.f32 %v3174, %v3224
        %v3241 = vmul.f32 %v3176, %v3225
        %v3242 = vmul.f32 %v3178, %v3226
        %v3243 = vpack.c.bf16 %v3228, %v3227
        %v3244 = vpack.c.bf16 %v3230, %v3229
        %v3245 = vpack.c.bf16 %v3232, %v3231
        %v3246 = vpack.c.bf16 %v3234, %v3233
        %v3247 = vpack.c.bf16 %v3236, %v3235
        %v3248 = vpack.c.bf16 %v3238, %v3237
        %v3249 = vpack.c.bf16 %v3240, %v3239
        %v3250 = vpack.c.bf16 %v3242, %v3241
        %3251 = vrot.lane.b32.xlu0 %v1156, 32
        %v3252 = vpop.permute.xlu0 %3251
        %3253 = vrot.lane.b32.xlu0 %v1157, 32
        %v3254 = vpop.permute.xlu0 %3253
        %3255 = vrot.lane.b32.xlu0 %v1158, 32
        %v3256 = vpop.permute.xlu0 %3255
        %3257 = vrot.lane.b32.xlu0 %v1159, 32
        %v3258 = vpop.permute.xlu0 %3257
        %3259 = vrot.lane.b32.xlu0 %v1160, 32
        %v3260 = vpop.permute.xlu0 %3259
        %3261 = vrot.lane.b32.xlu0 %v1161, 32
        %v3262 = vpop.permute.xlu0 %3261
        %3263 = vrot.lane.b32.xlu0 %v1162, 32
        %v3264 = vpop.permute.xlu0 %3263
        %3265 = vrot.lane.b32.xlu0 %v1163, 32
        %v3266 = vpop.permute.xlu0 %3265
        %3275 = vmatprep.subr.bf16.mxu0 0
        %3276 = vmatpush1.bf16.msra.mxu0 %v3266
        %3277 = vmatprep.subr.bf16.mxu0 0
        %3278 = vmatpush1.bf16.msra.mxu0 %v3264
        %3279 = vmatprep.subr.bf16.mxu0 0
        %3280 = vmatpush1.bf16.msra.mxu0 %v3262
        %3281 = vmatprep.subr.bf16.mxu0 0
        %3282 = vmatpush1.bf16.msra.mxu0 %v3260
        %3283 = vmatprep.subr.bf16.mxu0 0
        %3284 = vmatpush1.bf16.msra.mxu0 %v3258
        %3285 = vmatprep.subr.bf16.mxu0 0
        %3286 = vmatpush1.bf16.msra.mxu0 %v3256
        %3287 = vmatprep.subr.bf16.mxu0 0
        %3288 = vmatpush1.bf16.msra.mxu0 %v3254
        %3289 = vmatprep.subr.bf16.mxu0 0
        %3290 = vmatpush1.bf16.msra.mxu0 %v3252
        %3291 = vmatprep.subr.bf16.mxu0 0
        %3292 = vmatpush2.bf16.msra.mxu0 0
        %3293 = vmatprep.subr.bf16.mxu0 0
        %3294 = vmatpush2.bf16.msra.mxu0 0
        %3295 = vmatprep.subr.bf16.mxu0 0
        %3296 = vmatpush2.bf16.msra.mxu0 0
        %3297 = vmatprep.subr.bf16.mxu0 0
        %3298 = vmatpush2.bf16.msra.mxu0 0
        %3299 = vmatprep.subr.bf16.mxu0 0
        %3300 = vmatpush2.bf16.msra.mxu0 0
        %3301 = vmatprep.subr.bf16.mxu0 0
        %3302 = vmatpush2.bf16.msra.mxu0 0
        %3303 = vmatprep.subr.bf16.mxu0 0
        %3304 = vmatpush2.bf16.msra.mxu0 0
        %3305 = vmatprep.subr.bf16.mxu0 0
        %3306 = vmatpush2.bf16.msra.mxu0 0
        %3307 = vmatprep.mubr.bf16.mxu0 0
        %3308 = vmatmul.mubr.bf16.gmra.mxu0 %v3243
        %v3309 = vpop.f32.mrf.mxu0
        %v3310 = vadd.f32 0.0, %v3309
        %v3311 = vpop.f32.mrf.mxu0
        %v3312 = vpop.f32.mrf.mxu0
        %v3313 = vadd.f32 0.0, %v3312
        %v3314 = vpop.f32.mrf.mxu0
        %3315 = vmatprep.mubr.bf16.mxu0 0
        %3316 = vmatmul.mubr.bf16.gmra.mxu0 %v3244
        %v3317 = vpop.f32.mrf.mxu0
        %v3318 = vadd.f32 0.0, %v3317
        %v3319 = vpop.f32.mrf.mxu0
        %v3320 = vpop.f32.mrf.mxu0
        %v3321 = vadd.f32 0.0, %v3320
        %v3322 = vpop.f32.mrf.mxu0
        %3323 = vmatprep.mubr.bf16.mxu0 0
        %3324 = vmatmul.mubr.bf16.gmra.mxu0 %v3245
        %v3325 = vpop.f32.mrf.mxu0
        %v3326 = vadd.f32 0.0, %v3325
        %v3327 = vpop.f32.mrf.mxu0
        %v3328 = vpop.f32.mrf.mxu0
        %v3329 = vadd.f32 0.0, %v3328
        %v3330 = vpop.f32.mrf.mxu0
        %3331 = vmatprep.mubr.bf16.mxu0 0
        %3332 = vmatmul.mubr.bf16.gmra.mxu0 %v3246
        %v3333 = vpop.f32.mrf.mxu0
        %v3334 = vadd.f32 0.0, %v3333
        %v3335 = vpop.f32.mrf.mxu0
        %v3336 = vpop.f32.mrf.mxu0
        %v3337 = vadd.f32 0.0, %v3336
        %v3338 = vpop.f32.mrf.mxu0
        %3339 = vmatprep.mubr.bf16.mxu0 0
        %3340 = vmatmul.mubr.bf16.gmra.mxu0 %v3247
        %v3341 = vpop.f32.mrf.mxu0
        %v3342 = vadd.f32 0.0, %v3341
        %v3343 = vpop.f32.mrf.mxu0
        %v3344 = vpop.f32.mrf.mxu0
        %v3345 = vadd.f32 0.0, %v3344
        %v3346 = vpop.f32.mrf.mxu0
        %3347 = vmatprep.mubr.bf16.mxu0 0
        %3348 = vmatmul.mubr.bf16.gmra.mxu0 %v3248
        %v3349 = vpop.f32.mrf.mxu0
        %v3350 = vadd.f32 0.0, %v3349
        %v3351 = vpop.f32.mrf.mxu0
        %v3352 = vpop.f32.mrf.mxu0
        %v3353 = vadd.f32 0.0, %v3352
        %v3354 = vpop.f32.mrf.mxu0
        %3355 = vmatprep.mubr.bf16.mxu0 0
        %3356 = vmatmul.mubr.bf16.gmra.mxu0 %v3249
        %v3357 = vpop.f32.mrf.mxu0
        %v3358 = vadd.f32 0.0, %v3357
        %v3359 = vpop.f32.mrf.mxu0
        %v3360 = vpop.f32.mrf.mxu0
        %v3361 = vadd.f32 0.0, %v3360
        %v3362 = vpop.f32.mrf.mxu0
        %3363 = vmatprep.mubr.bf16.mxu0 0
        %3364 = vmatmul.mubr.bf16.gmra.mxu0 %v3250
        %v3365 = vpop.f32.mrf.mxu0
        %v3366 = vadd.f32 0.0, %v3365
        %v3367 = vpop.f32.mrf.mxu0
        %v3368 = vpop.f32.mrf.mxu0
        %v3369 = vadd.f32 0.0, %v3368
        %v3370 = vpop.f32.mrf.mxu0
        %3371 = vdwg.mxu0
        %v3372 = vpack.c.bf16 %v3313, %v3310
        %v3373 = vpack.c.bf16 %v3321, %v3318
        %v3374 = vpack.c.bf16 %v3329, %v3326
        %v3375 = vpack.c.bf16 %v3337, %v3334
        %v3376 = vpack.c.bf16 %v3345, %v3342
        %v3377 = vpack.c.bf16 %v3353, %v3350
        %v3378 = vpack.c.bf16 %v3361, %v3358
        %v3379 = vpack.c.bf16 %v3369, %v3366
        %v3384 = vunpack.c.l.b16 %v1136
        %v3385 = vunpack.c.l.b16 %v1137
        %v3386 = vunpack.c.l.b16 %v1138
        %v3387 = vunpack.c.l.b16 %v1139
        %v3388 = vpack.c.b16 %v3385, %v3384
        %v3389 = vpack.c.b16 %v3387, %v3386
        %v3393 = vsel %vm1164, %v3372, 0
        %v3396 = vsel %vm1164, %v3373, 0
        %v3399 = vsel %vm1164, %v3374, 0
        %v3402 = vsel %vm1164, %v3375, 0
        %v3405 = vsel %vm1164, %v3376, 0
        %v3408 = vsel %vm1164, %v3377, 0
        %v3411 = vsel %vm1164, %v3378, 0
        %v3414 = vsel %vm1164, %v3379, 0
        %3416 = vmatprep.subr.bf16.mxu0 0
        %3417 = vmatpush1.bf16.msra.mxu0 0
        %3418 = vmatprep.subr.bf16.mxu0 0
        %3419 = vmatpush1.bf16.msra.mxu0 0
        %3420 = vmatprep.subr.bf16.mxu0 0
        %3421 = vmatpush1.bf16.msra.mxu0 0
        %3422 = vmatprep.subr.bf16.mxu0 0
        %3423 = vmatpush1.bf16.msra.mxu0 0
        %3424 = vmatprep.subr.bf16.mxu0 0
        %3425 = vmatpush1.bf16.msra.mxu0 0
        %3426 = vmatprep.subr.bf16.mxu0 0
        %3427 = vmatpush1.bf16.msra.mxu0 0
        %3428 = vmatprep.subr.bf16.mxu0 0
        %3429 = vmatpush1.bf16.msra.mxu0 %v3389
        %3430 = vmatprep.subr.bf16.mxu0 0
        %3431 = vmatpush1.bf16.msra.mxu0 %v3388
        %3432 = vmatprep.subr.bf16.mxu0 0
        %3433 = vmatpush2.bf16.msra.mxu0 0
        %3434 = vmatprep.subr.bf16.mxu0 0
        %3435 = vmatpush2.bf16.msra.mxu0 0
        %3436 = vmatprep.subr.bf16.mxu0 0
        %3437 = vmatpush2.bf16.msra.mxu0 0
        %3438 = vmatprep.subr.bf16.mxu0 0
        %3439 = vmatpush2.bf16.msra.mxu0 0
        %3440 = vmatprep.subr.bf16.mxu0 0
        %3441 = vmatpush2.bf16.msra.mxu0 0
        %3442 = vmatprep.subr.bf16.mxu0 0
        %3443 = vmatpush2.bf16.msra.mxu0 0
        %3444 = vmatprep.subr.bf16.mxu0 0
        %3445 = vmatpush2.bf16.msra.mxu0 0
        %3446 = vmatprep.subr.bf16.mxu0 0
        %3447 = vmatpush2.bf16.msra.mxu0 0
        %3448 = vmatprep.mubr.bf16.mxu0 0
        %3449 = vmatmul.mubr.bf16.gmra.mxu0 %v3393
        %v3450 = vpop.f32.mrf.mxu0
        %v3451 = vadd.f32 0.0, %v3450
        %v3452 = vpop.f32.mrf.mxu0
        %v3453 = vpop.f32.mrf.mxu0
        %v3454 = vadd.f32 0.0, %v3453
        %v3455 = vpop.f32.mrf.mxu0
        %3456 = vmatprep.mubr.bf16.mxu0 0
        %3457 = vmatmul.mubr.bf16.gmra.mxu0 %v3396
        %v3458 = vpop.f32.mrf.mxu0
        %v3459 = vadd.f32 0.0, %v3458
        %v3460 = vpop.f32.mrf.mxu0
        %v3461 = vpop.f32.mrf.mxu0
        %v3462 = vadd.f32 0.0, %v3461
        %v3463 = vpop.f32.mrf.mxu0
        %3464 = vmatprep.mubr.bf16.mxu0 0
        %3465 = vmatmul.mubr.bf16.gmra.mxu0 %v3399
        %v3466 = vpop.f32.mrf.mxu0
        %v3467 = vadd.f32 0.0, %v3466
        %v3468 = vpop.f32.mrf.mxu0
        %v3469 = vpop.f32.mrf.mxu0
        %v3470 = vadd.f32 0.0, %v3469
        %v3471 = vpop.f32.mrf.mxu0
        %3472 = vmatprep.mubr.bf16.mxu0 0
        %3473 = vmatmul.mubr.bf16.gmra.mxu0 %v3402
        %v3474 = vpop.f32.mrf.mxu0
        %v3475 = vadd.f32 0.0, %v3474
        %v3476 = vpop.f32.mrf.mxu0
        %v3477 = vpop.f32.mrf.mxu0
        %v3478 = vadd.f32 0.0, %v3477
        %v3479 = vpop.f32.mrf.mxu0
        %3480 = vmatprep.mubr.bf16.mxu0 0
        %3481 = vmatmul.mubr.bf16.gmra.mxu0 %v3405
        %v3482 = vpop.f32.mrf.mxu0
        %v3483 = vadd.f32 0.0, %v3482
        %v3484 = vpop.f32.mrf.mxu0
        %v3485 = vpop.f32.mrf.mxu0
        %v3486 = vadd.f32 0.0, %v3485
        %v3487 = vpop.f32.mrf.mxu0
        %3488 = vmatprep.mubr.bf16.mxu0 0
        %3489 = vmatmul.mubr.bf16.gmra.mxu0 %v3408
        %v3490 = vpop.f32.mrf.mxu0
        %v3491 = vadd.f32 0.0, %v3490
        %v3492 = vpop.f32.mrf.mxu0
        %v3493 = vpop.f32.mrf.mxu0
        %v3494 = vadd.f32 0.0, %v3493
        %v3495 = vpop.f32.mrf.mxu0
        %3496 = vmatprep.mubr.bf16.mxu0 0
        %3497 = vmatmul.mubr.bf16.gmra.mxu0 %v3411
        %v3498 = vpop.f32.mrf.mxu0
        %v3499 = vadd.f32 0.0, %v3498
        %v3500 = vpop.f32.mrf.mxu0
        %v3501 = vpop.f32.mrf.mxu0
        %v3502 = vadd.f32 0.0, %v3501
        %v3503 = vpop.f32.mrf.mxu0
        %3504 = vmatprep.mubr.bf16.mxu0 0
        %3505 = vmatmul.mubr.bf16.gmra.mxu0 %v3414
        %v3506 = vpop.f32.mrf.mxu0
        %v3507 = vadd.f32 0.0, %v3506
        %v3508 = vpop.f32.mrf.mxu0
        %v3509 = vpop.f32.mrf.mxu0
        %v3510 = vadd.f32 0.0, %v3509
        %v3511 = vpop.f32.mrf.mxu0
        %3512 = vdwg.mxu0
        %v3513 = vadd.f32 %v2906, %v3451
        %v3514 = vadd.f32 %v2907, %v3454
        %v3515 = vadd.f32 %v2908, %v3459
        %v3516 = vadd.f32 %v2909, %v3462
        %v3517 = vadd.f32 %v2910, %v3467
        %v3518 = vadd.f32 %v2911, %v3470
        %v3519 = vadd.f32 %v2912, %v3475
        %v3520 = vadd.f32 %v2913, %v3478
        %v3521 = vadd.f32 %v2914, %v3483
        %v3522 = vadd.f32 %v2915, %v3486
        %v3523 = vadd.f32 %v2916, %v3491
        %v3524 = vadd.f32 %v2917, %v3494
        %v3525 = vadd.f32 %v2918, %v3499
        %v3526 = vadd.f32 %v2919, %v3502
        %v3527 = vadd.f32 %v2920, %v3507
        %v3528 = vadd.f32 %v2921, %v3510
        %v3529 = vadd.f32 %v491, %v3513
        %v3530 = vadd.f32 %v492, %v3514
        %v3531 = vadd.f32 %v493, %v3515
        %v3532 = vadd.f32 %v494, %v3516
        %v3533 = vadd.f32 %v495, %v3517
        %v3534 = vadd.f32 %v496, %v3518
        %v3535 = vadd.f32 %v497, %v3519
        %v3536 = vadd.f32 %v498, %v3520
        %v3537 = vadd.f32 %v499, %v3521
        %v3538 = vadd.f32 %v500, %v3522
        %v3539 = vadd.f32 %v501, %v3523
        %v3540 = vadd.f32 %v502, %v3524
        %v3541 = vadd.f32 %v503, %v3525
        %v3542 = vadd.f32 %v504, %v3526
        %v3543 = vadd.f32 %v505, %v3527
        %v3544 = vadd.f32 %v506, %v3528
        %v3545 = vld [vmem:[%s5] sm:$0x1]
        %v3547 = vlaneseq
        %v3548 = vshrl.u32 %v3547, 7
        %v3549 = vsub.s32 0, %v3548
        %v3550 = vrot.slane %v3545, %v3549
        %v3552 = vadd.f32 %v3529, %v3550
        %v3553 = vadd.f32 %v3530, %v3550
        %v3554 = vadd.f32 %v3531, %v3550
        %v3555 = vadd.f32 %v3532, %v3550
        %v3556 = vadd.f32 %v3533, %v3550
        %v3557 = vadd.f32 %v3534, %v3550
        %v3558 = vadd.f32 %v3535, %v3550
        %v3559 = vadd.f32 %v3536, %v3550
        %v3560 = vadd.f32 %v3537, %v3550
        %v3561 = vadd.f32 %v3538, %v3550
        %v3562 = vadd.f32 %v3539, %v3550
        %v3563 = vadd.f32 %v3540, %v3550
        %v3564 = vadd.f32 %v3541, %v3550
        %v3565 = vadd.f32 %v3542, %v3550
        %v3566 = vadd.f32 %v3543, %v3550
        %v3567 = vadd.f32 %v3544, %v3550
        %v3568 = vld [vmem:[%s6] sm:$0x1]
        %v3569 = vld [vmem:[%s7] sm:$0x1]
        %3570 = vadd.xlane.f32.xlu0 %v3552
        %v3571 = vpop.xlane.xlu0 %3570
        %3572 = vadd.xlane.f32.xlu0 %v3553
        %v3573 = vpop.xlane.xlu0 %3572
        %3574 = vadd.xlane.f32.xlu0 %v3554
        %v3575 = vpop.xlane.xlu0 %3574
        %3576 = vadd.xlane.f32.xlu0 %v3555
        %v3577 = vpop.xlane.xlu0 %3576
        %3578 = vadd.xlane.f32.xlu0 %v3556
        %v3579 = vpop.xlane.xlu0 %3578
        %3580 = vadd.xlane.f32.xlu0 %v3557
        %v3581 = vpop.xlane.xlu0 %3580
        %3582 = vadd.xlane.f32.xlu0 %v3558
        %v3583 = vpop.xlane.xlu0 %3582
        %3584 = vadd.xlane.f32.xlu0 %v3559
        %v3585 = vpop.xlane.xlu0 %3584
        %3586 = vadd.xlane.f32.xlu0 %v3560
        %v3587 = vpop.xlane.xlu0 %3586
        %3588 = vadd.xlane.f32.xlu0 %v3561
        %v3589 = vpop.xlane.xlu0 %3588
        %3590 = vadd.xlane.f32.xlu0 %v3562
        %v3591 = vpop.xlane.xlu0 %3590
        %3592 = vadd.xlane.f32.xlu0 %v3563
        %v3593 = vpop.xlane.xlu0 %3592
        %3594 = vadd.xlane.f32.xlu0 %v3564
        %v3595 = vpop.xlane.xlu0 %3594
        %3596 = vadd.xlane.f32.xlu0 %v3565
        %v3597 = vpop.xlane.xlu0 %3596
        %3598 = vadd.xlane.f32.xlu0 %v3566
        %v3599 = vpop.xlane.xlu0 %3598
        %3600 = vadd.xlane.f32.xlu0 %v3567
        %v3601 = vpop.xlane.xlu0 %3600
        %v3602 = vmul.f32 %v3571, %v541
        %v3603 = vmul.f32 %v3573, %v541
        %v3604 = vmul.f32 %v3575, %v541
        %v3605 = vmul.f32 %v3577, %v541
        %v3606 = vmul.f32 %v3579, %v541
        %v3607 = vmul.f32 %v3581, %v541
        %v3608 = vmul.f32 %v3583, %v541
        %v3609 = vmul.f32 %v3585, %v541
        %v3610 = vmul.f32 %v3587, %v541
        %v3611 = vmul.f32 %v3589, %v541
        %v3612 = vmul.f32 %v3591, %v541
        %v3613 = vmul.f32 %v3593, %v541
        %v3614 = vmul.f32 %v3595, %v541
        %v3615 = vmul.f32 %v3597, %v541
        %v3616 = vmul.f32 %v3599, %v541
        %v3617 = vmul.f32 %v3601, %v541
        %v3618 = vsub.f32 %v3552, %v3602
        %v3619 = vsub.f32 %v3553, %v3603
        %v3620 = vsub.f32 %v3554, %v3604
        %v3621 = vsub.f32 %v3555, %v3605
        %v3622 = vsub.f32 %v3556, %v3606
        %v3623 = vsub.f32 %v3557, %v3607
        %v3624 = vsub.f32 %v3558, %v3608
        %v3625 = vsub.f32 %v3559, %v3609
        %v3626 = vsub.f32 %v3560, %v3610
        %v3627 = vsub.f32 %v3561, %v3611
        %v3628 = vsub.f32 %v3562, %v3612
        %v3629 = vsub.f32 %v3563, %v3613
        %v3630 = vsub.f32 %v3564, %v3614
        %v3631 = vsub.f32 %v3565, %v3615
        %v3632 = vsub.f32 %v3566, %v3616
        %v3633 = vsub.f32 %v3567, %v3617
        %v3634 = vmul.f32 %v3618, %v3618
        %v3635 = vmul.f32 %v3619, %v3619
        %v3636 = vmul.f32 %v3620, %v3620
        %v3637 = vmul.f32 %v3621, %v3621
        %v3638 = vmul.f32 %v3622, %v3622
        %v3639 = vmul.f32 %v3623, %v3623
        %v3640 = vmul.f32 %v3624, %v3624
        %v3641 = vmul.f32 %v3625, %v3625
        %v3642 = vmul.f32 %v3626, %v3626
        %v3643 = vmul.f32 %v3627, %v3627
        %v3644 = vmul.f32 %v3628, %v3628
        %v3645 = vmul.f32 %v3629, %v3629
        %v3646 = vmul.f32 %v3630, %v3630
        %v3647 = vmul.f32 %v3631, %v3631
        %v3648 = vmul.f32 %v3632, %v3632
        %v3649 = vmul.f32 %v3633, %v3633
        %3650 = vadd.xlane.f32.xlu0 %v3634
        %v3651 = vpop.xlane.xlu0 %3650
        %3652 = vadd.xlane.f32.xlu0 %v3635
        %v3653 = vpop.xlane.xlu0 %3652
        %3654 = vadd.xlane.f32.xlu0 %v3636
        %v3655 = vpop.xlane.xlu0 %3654
        %3656 = vadd.xlane.f32.xlu0 %v3637
        %v3657 = vpop.xlane.xlu0 %3656
        %3658 = vadd.xlane.f32.xlu0 %v3638
        %v3659 = vpop.xlane.xlu0 %3658
        %3660 = vadd.xlane.f32.xlu0 %v3639
        %v3661 = vpop.xlane.xlu0 %3660
        %3662 = vadd.xlane.f32.xlu0 %v3640
        %v3663 = vpop.xlane.xlu0 %3662
        %3664 = vadd.xlane.f32.xlu0 %v3641
        %v3665 = vpop.xlane.xlu0 %3664
        %3666 = vadd.xlane.f32.xlu0 %v3642
        %v3667 = vpop.xlane.xlu0 %3666
        %3668 = vadd.xlane.f32.xlu0 %v3643
        %v3669 = vpop.xlane.xlu0 %3668
        %3670 = vadd.xlane.f32.xlu0 %v3644
        %v3671 = vpop.xlane.xlu0 %3670
        %3672 = vadd.xlane.f32.xlu0 %v3645
        %v3673 = vpop.xlane.xlu0 %3672
        %3674 = vadd.xlane.f32.xlu0 %v3646
        %v3675 = vpop.xlane.xlu0 %3674
        %3676 = vadd.xlane.f32.xlu0 %v3647
        %v3677 = vpop.xlane.xlu0 %3676
        %3678 = vadd.xlane.f32.xlu0 %v3648
        %v3679 = vpop.xlane.xlu0 %3678
        %3680 = vadd.xlane.f32.xlu0 %v3649
        %v3681 = vpop.xlane.xlu0 %3680
        %v3682 = vmul.f32 %v3651, %v541
        %v3683 = vmul.f32 %v3653, %v541
        %v3684 = vmul.f32 %v3655, %v541
        %v3685 = vmul.f32 %v3657, %v541
        %v3686 = vmul.f32 %v3659, %v541
        %v3687 = vmul.f32 %v3661, %v541
        %v3688 = vmul.f32 %v3663, %v541
        %v3689 = vmul.f32 %v3665, %v541
        %v3690 = vmul.f32 %v3667, %v541
        %v3691 = vmul.f32 %v3669, %v541
        %v3692 = vmul.f32 %v3671, %v541
        %v3693 = vmul.f32 %v3673, %v541
        %v3694 = vmul.f32 %v3675, %v541
        %v3695 = vmul.f32 %v3677, %v541
        %v3696 = vmul.f32 %v3679, %v541
        %v3697 = vmul.f32 %v3681, %v541
        %v3698 = vadd.f32 %v3682, 1e-05
        %v3699 = vadd.f32 %v3683, 1e-05
        %v3700 = vadd.f32 %v3684, 1e-05
        %v3701 = vadd.f32 %v3685, 1e-05
        %v3702 = vadd.f32 %v3686, 1e-05
        %v3703 = vadd.f32 %v3687, 1e-05
        %v3704 = vadd.f32 %v3688, 1e-05
        %v3705 = vadd.f32 %v3689, 1e-05
        %v3706 = vadd.f32 %v3690, 1e-05
        %v3707 = vadd.f32 %v3691, 1e-05
        %v3708 = vadd.f32 %v3692, 1e-05
        %v3709 = vadd.f32 %v3693, 1e-05
        %v3710 = vadd.f32 %v3694, 1e-05
        %v3711 = vadd.f32 %v3695, 1e-05
        %v3712 = vadd.f32 %v3696, 1e-05
        %v3713 = vadd.f32 %v3697, 1e-05
        %v3714 = vrsqrt.pop %v3698
        %v3715 = vrsqrt.pop %v3699
        %v3716 = vrsqrt.pop %v3700
        %v3717 = vrsqrt.pop %v3701
        %v3718 = vrsqrt.pop %v3702
        %v3719 = vrsqrt.pop %v3703
        %v3720 = vrsqrt.pop %v3704
        %v3721 = vrsqrt.pop %v3705
        %v3722 = vrsqrt.pop %v3706
        %v3723 = vrsqrt.pop %v3707
        %v3724 = vrsqrt.pop %v3708
        %v3725 = vrsqrt.pop %v3709
        %v3726 = vrsqrt.pop %v3710
        %v3727 = vrsqrt.pop %v3711
        %v3728 = vrsqrt.pop %v3712
        %v3729 = vrsqrt.pop %v3713
        %v3730 = vmul.f32 %v3618, %v3714
        %v3731 = vmul.f32 %v3619, %v3715
        %v3732 = vmul.f32 %v3620, %v3716
        %v3733 = vmul.f32 %v3621, %v3717
        %v3734 = vmul.f32 %v3622, %v3718
        %v3735 = vmul.f32 %v3623, %v3719
        %v3736 = vmul.f32 %v3624, %v3720
        %v3737 = vmul.f32 %v3625, %v3721
        %v3738 = vmul.f32 %v3626, %v3722
        %v3739 = vmul.f32 %v3627, %v3723
        %v3740 = vmul.f32 %v3628, %v3724
        %v3741 = vmul.f32 %v3629, %v3725
        %v3742 = vmul.f32 %v3630, %v3726
        %v3743 = vmul.f32 %v3631, %v3727
        %v3744 = vmul.f32 %v3632, %v3728
        %v3745 = vmul.f32 %v3633, %v3729
        %v3747 = vlaneseq
        %v3748 = vshrl.u32 %v3747, 7
        %v3749 = vsub.s32 0, %v3748
        %v3750 = vrot.slane %v3568, %v3749
        %v3752 = vmul.f32 %v3730, %v3750
        %v3753 = vmul.f32 %v3731, %v3750
        %v3754 = vmul.f32 %v3732, %v3750
        %v3755 = vmul.f32 %v3733, %v3750
        %v3756 = vmul.f32 %v3734, %v3750
        %v3757 = vmul.f32 %v3735, %v3750
        %v3758 = vmul.f32 %v3736, %v3750
        %v3759 = vmul.f32 %v3737, %v3750
        %v3760 = vmul.f32 %v3738, %v3750
        %v3761 = vmul.f32 %v3739, %v3750
        %v3762 = vmul.f32 %v3740, %v3750
        %v3763 = vmul.f32 %v3741, %v3750
        %v3764 = vmul.f32 %v3742, %v3750
        %v3765 = vmul.f32 %v3743, %v3750
        %v3766 = vmul.f32 %v3744, %v3750
        %v3767 = vmul.f32 %v3745, %v3750
        %v3769 = vlaneseq
        %v3770 = vshrl.u32 %v3769, 7
        %v3771 = vsub.s32 0, %v3770
        %v3772 = vrot.slane %v3569, %v3771
        %v3774 = vadd.f32 %v3752, %v3772
        %v3775 = vadd.f32 %v3753, %v3772
        %v3776 = vadd.f32 %v3754, %v3772
        %v3777 = vadd.f32 %v3755, %v3772
        %v3778 = vadd.f32 %v3756, %v3772
        %v3779 = vadd.f32 %v3757, %v3772
        %v3780 = vadd.f32 %v3758, %v3772
        %v3781 = vadd.f32 %v3759, %v3772
        %v3782 = vadd.f32 %v3760, %v3772
        %v3783 = vadd.f32 %v3761, %v3772
        %v3784 = vadd.f32 %v3762, %v3772
        %v3785 = vadd.f32 %v3763, %v3772
        %v3786 = vadd.f32 %v3764, %v3772
        %v3787 = vadd.f32 %v3765, %v3772
        %v3788 = vadd.f32 %v3766, %v3772
        %v3789 = vadd.f32 %v3767, %v3772
        %v3790 = vpack.c.bf16 %v3775, %v3774
        %v3791 = vpack.c.bf16 %v3777, %v3776
        %v3792 = vpack.c.bf16 %v3779, %v3778
        %v3793 = vpack.c.bf16 %v3781, %v3780
        %v3794 = vpack.c.bf16 %v3783, %v3782
        %v3795 = vpack.c.bf16 %v3785, %v3784
        %v3796 = vpack.c.bf16 %v3787, %v3786
        %v3797 = vpack.c.bf16 %v3789, %v3788
        %v3798 = vld [vmem:[#allocation8] sm:$0xff]
        %v3799 = vld [vmem:[#allocation8 + $0x8] sm:$0xff]
        %v3800 = vld [vmem:[#allocation8 + $0x10] sm:$0xff]
        %v3801 = vld [vmem:[#allocation8 + $0x18] sm:$0xff]
        %v3802 = vld [vmem:[#allocation8 + $0x20] sm:$0xff]
        %v3803 = vld [vmem:[#allocation8 + $0x28] sm:$0xff]
        %v3804 = vld [vmem:[#allocation8 + $0x30] sm:$0xff]
        %v3805 = vld [vmem:[#allocation8 + $0x38] sm:$0xff]
        %v3806 = vld [vmem:[#allocation8 + $0x40] sm:$0xff]
        %v3807 = vld [vmem:[#allocation8 + $0x48] sm:$0xff]
        %v3808 = vld [vmem:[#allocation8 + $0x50] sm:$0xff]
        %v3809 = vld [vmem:[#allocation8 + $0x58] sm:$0xff]
        %v3810 = vld [vmem:[#allocation8 + $0x60] sm:$0xff]
        %v3811 = vld [vmem:[#allocation8 + $0x68] sm:$0xff]
        %v3812 = vld [vmem:[#allocation8 + $0x70] sm:$0xff]
        %v3813 = vld [vmem:[#allocation8 + $0x78] sm:$0xff]
        %v3814 = vld [vmem:[#allocation8 + $0x80] sm:$0xff]
        %v3815 = vld [vmem:[#allocation8 + $0x88] sm:$0xff]
        %v3816 = vld [vmem:[#allocation8 + $0x90] sm:$0xff]
        %v3817 = vld [vmem:[#allocation8 + $0x98] sm:$0xff]
        %v3818 = vld [vmem:[#allocation8 + $0xa0] sm:$0xff]
        %v3819 = vld [vmem:[#allocation8 + $0xa8] sm:$0xff]
        %v3820 = vld [vmem:[#allocation8 + $0xb0] sm:$0xff]
        %v3821 = vld [vmem:[#allocation8 + $0xb8] sm:$0xff]
        %v3822 = vld [vmem:[#allocation8 + $0xc0] sm:$0xff]
        %v3823 = vld [vmem:[#allocation8 + $0xc8] sm:$0xff]
        %v3824 = vld [vmem:[#allocation8 + $0xd0] sm:$0xff]
        %v3825 = vld [vmem:[#allocation8 + $0xd8] sm:$0xff]
        %v3826 = vld [vmem:[#allocation8 + $0xe0] sm:$0xff]
        %v3827 = vld [vmem:[#allocation8 + $0xe8] sm:$0xff]
        %v3828 = vld [vmem:[#allocation8 + $0xf0] sm:$0xff]
        %v3829 = vld [vmem:[#allocation8 + $0xf8] sm:$0xff]
        %v3830 = vld [vmem:[%s9] sm:$0xf]
        %v3832 = vlaneseq
        %v3833 = vshrl.u32 %v3832, 7
        %v3834 = vsub.s32 0, %v3833
        %v3835 = vrot.slane %v3830, %v3834
        %v3836 = vlaneseq
        %v3837 = vshrl.u32 %v3836, 7
        %v3838 = vsub.s32 1, %v3837
        %v3839 = vrot.slane %v3830, %v3838
        %v3840 = vlaneseq
        %v3841 = vshrl.u32 %v3840, 7
        %v3842 = vsub.s32 2, %v3841
        %v3843 = vrot.slane %v3830, %v3842
        %v3844 = vlaneseq
        %v3845 = vshrl.u32 %v3844, 7
        %v3846 = vsub.s32 3, %v3845
        %v3847 = vrot.slane %v3830, %v3846
        %v3884 = vunpack.c.l.b16 %v3798
        %v3885 = vunpack.c.h.b16 %v3798
        %v3886 = vunpack.c.l.b16 %v3799
        %v3887 = vunpack.c.h.b16 %v3799
        %v3888 = vunpack.c.l.b16 %v3800
        %v3889 = vunpack.c.h.b16 %v3800
        %v3890 = vunpack.c.l.b16 %v3801
        %v3891 = vunpack.c.h.b16 %v3801
        %v3892 = vunpack.c.l.b16 %v3802
        %v3893 = vunpack.c.h.b16 %v3802
        %v3894 = vunpack.c.l.b16 %v3803
        %v3895 = vunpack.c.h.b16 %v3803
        %v3896 = vunpack.c.l.b16 %v3804
        %v3897 = vunpack.c.h.b16 %v3804
        %v3898 = vunpack.c.l.b16 %v3805
        %v3899 = vunpack.c.h.b16 %v3805
        %v3900 = vunpack.c.l.b16 %v3806
        %v3901 = vunpack.c.h.b16 %v3806
        %v3902 = vunpack.c.l.b16 %v3807
        %v3903 = vunpack.c.h.b16 %v3807
        %v3904 = vunpack.c.l.b16 %v3808
        %v3905 = vunpack.c.h.b16 %v3808
        %v3906 = vunpack.c.l.b16 %v3809
        %v3907 = vunpack.c.h.b16 %v3809
        %v3908 = vunpack.c.l.b16 %v3810
        %v3909 = vunpack.c.h.b16 %v3810
        %v3910 = vunpack.c.l.b16 %v3811
        %v3911 = vunpack.c.h.b16 %v3811
        %v3912 = vunpack.c.l.b16 %v3812
        %v3913 = vunpack.c.h.b16 %v3812
        %v3914 = vunpack.c.l.b16 %v3813
        %v3915 = vunpack.c.h.b16 %v3813
        %v3916 = vunpack.c.l.b16 %v3814
        %v3917 = vunpack.c.h.b16 %v3814
        %v3918 = vunpack.c.l.b16 %v3815
        %v3919 = vunpack.c.h.b16 %v3815
        %v3920 = vunpack.c.l.b16 %v3816
        %v3921 = vunpack.c.h.b16 %v3816
        %v3922 = vunpack.c.l.b16 %v3817
        %v3923 = vunpack.c.h.b16 %v3817
        %v3924 = vunpack.c.l.b16 %v3818
        %v3925 = vunpack.c.h.b16 %v3818
        %v3926 = vunpack.c.l.b16 %v3819
        %v3927 = vunpack.c.h.b16 %v3819
        %v3928 = vunpack.c.l.b16 %v3820
        %v3929 = vunpack.c.h.b16 %v3820
        %v3930 = vunpack.c.l.b16 %v3821
        %v3931 = vunpack.c.h.b16 %v3821
        %v3932 = vunpack.c.l.b16 %v3822
        %v3933 = vunpack.c.h.b16 %v3822
        %v3934 = vunpack.c.l.b16 %v3823
        %v3935 = vunpack.c.h.b16 %v3823
        %v3936 = vunpack.c.l.b16 %v3824
        %v3937 = vunpack.c.h.b16 %v3824
        %v3938 = vunpack.c.l.b16 %v3825
        %v3939 = vunpack.c.h.b16 %v3825
        %v3940 = vunpack.c.l.b16 %v3826
        %v3941 = vunpack.c.h.b16 %v3826
        %v3942 = vunpack.c.l.b16 %v3827
        %v3943 = vunpack.c.h.b16 %v3827
        %v3944 = vunpack.c.l.b16 %v3828
        %v3945 = vunpack.c.h.b16 %v3828
        %v3946 = vunpack.c.l.b16 %v3829
        %v3947 = vunpack.c.h.b16 %v3829
        %v3948 = vpack.c.b16 %v3888, %v3884
        %v3949 = vpack.c.b16 %v3889, %v3885
        %v3950 = vpack.c.b16 %v3890, %v3886
        %v3951 = vpack.c.b16 %v3891, %v3887
        %v3952 = vpack.c.b16 %v3896, %v3892
        %v3953 = vpack.c.b16 %v3897, %v3893
        %v3954 = vpack.c.b16 %v3898, %v3894
        %v3955 = vpack.c.b16 %v3899, %v3895
        %v3956 = vpack.c.b16 %v3904, %v3900
        %v3957 = vpack.c.b16 %v3905, %v3901
        %v3958 = vpack.c.b16 %v3906, %v3902
        %v3959 = vpack.c.b16 %v3907, %v3903
        %v3960 = vpack.c.b16 %v3912, %v3908
        %v3961 = vpack.c.b16 %v3913, %v3909
        %v3962 = vpack.c.b16 %v3914, %v3910
        %v3963 = vpack.c.b16 %v3915, %v3911
        %v3964 = vpack.c.b16 %v3920, %v3916
        %v3965 = vpack.c.b16 %v3921, %v3917
        %v3966 = vpack.c.b16 %v3922, %v3918
        %v3967 = vpack.c.b16 %v3923, %v3919
        %v3968 = vpack.c.b16 %v3928, %v3924
        %v3969 = vpack.c.b16 %v3929, %v3925
        %v3970 = vpack.c.b16 %v3930, %v3926
        %v3971 = vpack.c.b16 %v3931, %v3927
        %v3972 = vpack.c.b16 %v3936, %v3932
        %v3973 = vpack.c.b16 %v3937, %v3933
        %v3974 = vpack.c.b16 %v3938, %v3934
        %v3975 = vpack.c.b16 %v3939, %v3935
        %v3976 = vpack.c.b16 %v3944, %v3940
        %v3977 = vpack.c.b16 %v3945, %v3941
        %v3978 = vpack.c.b16 %v3946, %v3942
        %v3979 = vpack.c.b16 %v3947, %v3943
        %4012 = vmatprep.subr.bf16.mxu0 %v3977
        %4013 = vmatpush1.bf16.msra.mxu0 %v3976
        %4014 = vmatprep.subr.bf16.mxu0 %v3973
        %4015 = vmatpush1.bf16.msra.mxu0 %v3972
        %4016 = vmatprep.subr.bf16.mxu0 %v3969
        %4017 = vmatpush1.bf16.msra.mxu0 %v3968
        %4018 = vmatprep.subr.bf16.mxu0 %v3965
        %4019 = vmatpush1.bf16.msra.mxu0 %v3964
        %4020 = vmatprep.subr.bf16.mxu0 %v3961
        %4021 = vmatpush1.bf16.msra.mxu0 %v3960
        %4022 = vmatprep.subr.bf16.mxu0 %v3957
        %4023 = vmatpush1.bf16.msra.mxu0 %v3956
        %4024 = vmatprep.subr.bf16.mxu0 %v3953
        %4025 = vmatpush1.bf16.msra.mxu0 %v3952
        %4026 = vmatprep.subr.bf16.mxu0 %v3949
        %4027 = vmatpush1.bf16.msra.mxu0 %v3948
        %4028 = vmatprep.subr.bf16.mxu0 0
        %4029 = vmatpush2.bf16.msra.mxu0 0
        %4030 = vmatprep.subr.bf16.mxu0 0
        %4031 = vmatpush2.bf16.msra.mxu0 0
        %4032 = vmatprep.subr.bf16.mxu0 0
        %4033 = vmatpush2.bf16.msra.mxu0 0
        %4034 = vmatprep.subr.bf16.mxu0 0
        %4035 = vmatpush2.bf16.msra.mxu0 0
        %4036 = vmatprep.subr.bf16.mxu0 0
        %4037 = vmatpush2.bf16.msra.mxu0 0
        %4038 = vmatprep.subr.bf16.mxu0 0
        %4039 = vmatpush2.bf16.msra.mxu0 0
        %4040 = vmatprep.subr.bf16.mxu0 0
        %4041 = vmatpush2.bf16.msra.mxu0 0
        %4042 = vmatprep.subr.bf16.mxu0 0
        %4043 = vmatpush2.bf16.msra.mxu0 0
        %4044 = vmatprep.mubr.bf16.mxu0 0
        %4045 = vmatmul.mubr.bf16.gmra.mxu0 %v3790
        %v4046 = vpop.f32.mrf.mxu0
        %v4047 = vadd.f32 %v3835, %v4046
        %v4048 = vpop.f32.mrf.mxu0
        %v4049 = vadd.f32 %v3839, %v4048
        %v4050 = vpop.f32.mrf.mxu0
        %v4051 = vadd.f32 %v3835, %v4050
        %v4052 = vpop.f32.mrf.mxu0
        %v4053 = vadd.f32 %v3839, %v4052
        %4054 = vmatprep.mubr.bf16.mxu0 0
        %4055 = vmatmul.mubr.bf16.gmra.mxu0 %v3791
        %v4056 = vpop.f32.mrf.mxu0
        %v4057 = vadd.f32 %v3835, %v4056
        %v4058 = vpop.f32.mrf.mxu0
        %v4059 = vadd.f32 %v3839, %v4058
        %v4060 = vpop.f32.mrf.mxu0
        %v4061 = vadd.f32 %v3835, %v4060
        %v4062 = vpop.f32.mrf.mxu0
        %v4063 = vadd.f32 %v3839, %v4062
        %4064 = vmatprep.mubr.bf16.mxu0 0
        %4065 = vmatmul.mubr.bf16.gmra.mxu0 %v3792
        %v4066 = vpop.f32.mrf.mxu0
        %v4067 = vadd.f32 %v3835, %v4066
        %v4068 = vpop.f32.mrf.mxu0
        %v4069 = vadd.f32 %v3839, %v4068
        %v4070 = vpop.f32.mrf.mxu0
        %v4071 = vadd.f32 %v3835, %v4070
        %v4072 = vpop.f32.mrf.mxu0
        %v4073 = vadd.f32 %v3839, %v4072
        %4074 = vmatprep.mubr.bf16.mxu0 0
        %4075 = vmatmul.mubr.bf16.gmra.mxu0 %v3793
        %v4076 = vpop.f32.mrf.mxu0
        %v4077 = vadd.f32 %v3835, %v4076
        %v4078 = vpop.f32.mrf.mxu0
        %v4079 = vadd.f32 %v3839, %v4078
        %v4080 = vpop.f32.mrf.mxu0
        %v4081 = vadd.f32 %v3835, %v4080
        %v4082 = vpop.f32.mrf.mxu0
        %v4083 = vadd.f32 %v3839, %v4082
        %4084 = vmatprep.mubr.bf16.mxu0 0
        %4085 = vmatmul.mubr.bf16.gmra.mxu0 %v3794
        %v4086 = vpop.f32.mrf.mxu0
        %v4087 = vadd.f32 %v3835, %v4086
        %v4088 = vpop.f32.mrf.mxu0
        %v4089 = vadd.f32 %v3839, %v4088
        %v4090 = vpop.f32.mrf.mxu0
        %v4091 = vadd.f32 %v3835, %v4090
        %v4092 = vpop.f32.mrf.mxu0
        %v4093 = vadd.f32 %v3839, %v4092
        %4094 = vmatprep.mubr.bf16.mxu0 0
        %4095 = vmatmul.mubr.bf16.gmra.mxu0 %v3795
        %v4096 = vpop.f32.mrf.mxu0
        %v4097 = vadd.f32 %v3835, %v4096
        %v4098 = vpop.f32.mrf.mxu0
        %v4099 = vadd.f32 %v3839, %v4098
        %v4100 = vpop.f32.mrf.mxu0
        %v4101 = vadd.f32 %v3835, %v4100
        %v4102 = vpop.f32.mrf.mxu0
        %v4103 = vadd.f32 %v3839, %v4102
        %4104 = vmatprep.mubr.bf16.mxu0 0
        %4105 = vmatmul.mubr.bf16.gmra.mxu0 %v3796
        %v4106 = vpop.f32.mrf.mxu0
        %v4107 = vadd.f32 %v3835, %v4106
        %v4108 = vpop.f32.mrf.mxu0
        %v4109 = vadd.f32 %v3839, %v4108
        %v4110 = vpop.f32.mrf.mxu0
        %v4111 = vadd.f32 %v3835, %v4110
        %v4112 = vpop.f32.mrf.mxu0
        %v4113 = vadd.f32 %v3839, %v4112
        %4114 = vmatprep.mubr.bf16.mxu0 0
        %4115 = vmatmul.mubr.bf16.gmra.mxu0 %v3797
        %v4116 = vpop.f32.mrf.mxu0
        %v4117 = vadd.f32 %v3835, %v4116
        %v4118 = vpop.f32.mrf.mxu0
        %v4119 = vadd.f32 %v3839, %v4118
        %v4120 = vpop.f32.mrf.mxu0
        %v4121 = vadd.f32 %v3835, %v4120
        %v4122 = vpop.f32.mrf.mxu0
        %v4123 = vadd.f32 %v3839, %v4122
        %4124 = vdwg.mxu0
        %4125 = vmatprep.subr.bf16.mxu0 %v3979
        %4126 = vmatpush1.bf16.msra.mxu0 %v3978
        %4127 = vmatprep.subr.bf16.mxu0 %v3975
        %4128 = vmatpush1.bf16.msra.mxu0 %v3974
        %4129 = vmatprep.subr.bf16.mxu0 %v3971
        %4130 = vmatpush1.bf16.msra.mxu0 %v3970
        %4131 = vmatprep.subr.bf16.mxu0 %v3967
        %4132 = vmatpush1.bf16.msra.mxu0 %v3966
        %4133 = vmatprep.subr.bf16.mxu0 %v3963
        %4134 = vmatpush1.bf16.msra.mxu0 %v3962
        %4135 = vmatprep.subr.bf16.mxu0 %v3959
        %4136 = vmatpush1.bf16.msra.mxu0 %v3958
        %4137 = vmatprep.subr.bf16.mxu0 %v3955
        %4138 = vmatpush1.bf16.msra.mxu0 %v3954
        %4139 = vmatprep.subr.bf16.mxu0 %v3951
        %4140 = vmatpush1.bf16.msra.mxu0 %v3950
        %4141 = vmatprep.subr.bf16.mxu0 0
        %4142 = vmatpush2.bf16.msra.mxu0 0
        %4143 = vmatprep.subr.bf16.mxu0 0
        %4144 = vmatpush2.bf16.msra.mxu0 0
        %4145 = vmatprep.subr.bf16.mxu0 0
        %4146 = vmatpush2.bf16.msra.mxu0 0
        %4147 = vmatprep.subr.bf16.mxu0 0
        %4148 = vmatpush2.bf16.msra.mxu0 0
        %4149 = vmatprep.subr.bf16.mxu0 0
        %4150 = vmatpush2.bf16.msra.mxu0 0
        %4151 = vmatprep.subr.bf16.mxu0 0
        %4152 = vmatpush2.bf16.msra.mxu0 0
        %4153 = vmatprep.subr.bf16.mxu0 0
        %4154 = vmatpush2.bf16.msra.mxu0 0
        %4155 = vmatprep.subr.bf16.mxu0 0
        %4156 = vmatpush2.bf16.msra.mxu0 0
        %4157 = vmatprep.mubr.bf16.mxu0 0
        %4158 = vmatmul.mubr.bf16.gmra.mxu0 %v3790
        %v4159 = vpop.f32.mrf.mxu0
        %v4160 = vadd.f32 %v3843, %v4159
        %v4161 = vpop.f32.mrf.mxu0
        %v4162 = vadd.f32 %v3847, %v4161
        %v4163 = vpop.f32.mrf.mxu0
        %v4164 = vadd.f32 %v3843, %v4163
        %v4165 = vpop.f32.mrf.mxu0
        %v4166 = vadd.f32 %v3847, %v4165
        %4167 = vmatprep.mubr.bf16.mxu0 0
        %4168 = vmatmul.mubr.bf16.gmra.mxu0 %v3791
        %v4169 = vpop.f32.mrf.mxu0
        %v4170 = vadd.f32 %v3843, %v4169
        %v4171 = vpop.f32.mrf.mxu0
        %v4172 = vadd.f32 %v3847, %v4171
        %v4173 = vpop.f32.mrf.mxu0
        %v4174 = vadd.f32 %v3843, %v4173
        %v4175 = vpop.f32.mrf.mxu0
        %v4176 = vadd.f32 %v3847, %v4175
        %4177 = vmatprep.mubr.bf16.mxu0 0
        %4178 = vmatmul.mubr.bf16.gmra.mxu0 %v3792
        %v4179 = vpop.f32.mrf.mxu0
        %v4180 = vadd.f32 %v3843, %v4179
        %v4181 = vpop.f32.mrf.mxu0
        %v4182 = vadd.f32 %v3847, %v4181
        %v4183 = vpop.f32.mrf.mxu0
        %v4184 = vadd.f32 %v3843, %v4183
        %v4185 = vpop.f32.mrf.mxu0
        %v4186 = vadd.f32 %v3847, %v4185
        %4187 = vmatprep.mubr.bf16.mxu0 0
        %4188 = vmatmul.mubr.bf16.gmra.mxu0 %v3793
        %v4189 = vpop.f32.mrf.mxu0
        %v4190 = vadd.f32 %v3843, %v4189
        %v4191 = vpop.f32.mrf.mxu0
        %v4192 = vadd.f32 %v3847, %v4191
        %v4193 = vpop.f32.mrf.mxu0
        %v4194 = vadd.f32 %v3843, %v4193
        %v4195 = vpop.f32.mrf.mxu0
        %v4196 = vadd.f32 %v3847, %v4195
        %4197 = vmatprep.mubr.bf16.mxu0 0
        %4198 = vmatmul.mubr.bf16.gmra.mxu0 %v3794
        %v4199 = vpop.f32.mrf.mxu0
        %v4200 = vadd.f32 %v3843, %v4199
        %v4201 = vpop.f32.mrf.mxu0
        %v4202 = vadd.f32 %v3847, %v4201
        %v4203 = vpop.f32.mrf.mxu0
        %v4204 = vadd.f32 %v3843, %v4203
        %v4205 = vpop.f32.mrf.mxu0
        %v4206 = vadd.f32 %v3847, %v4205
        %4207 = vmatprep.mubr.bf16.mxu0 0
        %4208 = vmatmul.mubr.bf16.gmra.mxu0 %v3795
        %v4209 = vpop.f32.mrf.mxu0
        %v4210 = vadd.f32 %v3843, %v4209
        %v4211 = vpop.f32.mrf.mxu0
        %v4212 = vadd.f32 %v3847, %v4211
        %v4213 = vpop.f32.mrf.mxu0
        %v4214 = vadd.f32 %v3843, %v4213
        %v4215 = vpop.f32.mrf.mxu0
        %v4216 = vadd.f32 %v3847, %v4215
        %4217 = vmatprep.mubr.bf16.mxu0 0
        %4218 = vmatmul.mubr.bf16.gmra.mxu0 %v3796
        %v4219 = vpop.f32.mrf.mxu0
        %v4220 = vadd.f32 %v3843, %v4219
        %v4221 = vpop.f32.mrf.mxu0
        %v4222 = vadd.f32 %v3847, %v4221
        %v4223 = vpop.f32.mrf.mxu0
        %v4224 = vadd.f32 %v3843, %v4223
        %v4225 = vpop.f32.mrf.mxu0
        %v4226 = vadd.f32 %v3847, %v4225
        %4227 = vmatprep.mubr.bf16.mxu0 0
        %4228 = vmatmul.mubr.bf16.gmra.mxu0 %v3797
        %v4229 = vpop.f32.mrf.mxu0
        %v4230 = vadd.f32 %v3843, %v4229
        %v4231 = vpop.f32.mrf.mxu0
        %v4232 = vadd.f32 %v3847, %v4231
        %v4233 = vpop.f32.mrf.mxu0
        %v4234 = vadd.f32 %v3843, %v4233
        %v4235 = vpop.f32.mrf.mxu0
        %v4236 = vadd.f32 %v3847, %v4235
        %4237 = vdwg.mxu0
        %v4238 = vmul.f32 %v4047, 0.5
        %v4239 = vmul.f32 %v4049, 0.5
        %v4240 = vmul.f32 %v4160, 0.5
        %v4241 = vmul.f32 %v4162, 0.5
        %v4242 = vmul.f32 %v4051, 0.5
        %v4243 = vmul.f32 %v4053, 0.5
        %v4244 = vmul.f32 %v4164, 0.5
        %v4245 = vmul.f32 %v4166, 0.5
        %v4246 = vmul.f32 %v4057, 0.5
        %v4247 = vmul.f32 %v4059, 0.5
        %v4248 = vmul.f32 %v4170, 0.5
        %v4249 = vmul.f32 %v4172, 0.5
        %v4250 = vmul.f32 %v4061, 0.5
        %v4251 = vmul.f32 %v4063, 0.5
        %v4252 = vmul.f32 %v4174, 0.5
        %v4253 = vmul.f32 %v4176, 0.5
        %v4254 = vmul.f32 %v4067, 0.5
        %v4255 = vmul.f32 %v4069, 0.5
        %v4256 = vmul.f32 %v4180, 0.5
        %v4257 = vmul.f32 %v4182, 0.5
        %v4258 = vmul.f32 %v4071, 0.5
        %v4259 = vmul.f32 %v4073, 0.5
        %v4260 = vmul.f32 %v4184, 0.5
        %v4261 = vmul.f32 %v4186, 0.5
        %v4262 = vmul.f32 %v4077, 0.5
        %v4263 = vmul.f32 %v4079, 0.5
        %v4264 = vmul.f32 %v4190, 0.5
        %v4265 = vmul.f32 %v4192, 0.5
        %v4266 = vmul.f32 %v4081, 0.5
        %v4267 = vmul.f32 %v4083, 0.5
        %v4268 = vmul.f32 %v4194, 0.5
        %v4269 = vmul.f32 %v4196, 0.5
        %v4270 = vmul.f32 %v4087, 0.5
        %v4271 = vmul.f32 %v4089, 0.5
        %v4272 = vmul.f32 %v4200, 0.5
        %v4273 = vmul.f32 %v4202, 0.5
        %v4274 = vmul.f32 %v4091, 0.5
        %v4275 = vmul.f32 %v4093, 0.5
        %v4276 = vmul.f32 %v4204, 0.5
        %v4277 = vmul.f32 %v4206, 0.5
        %v4278 = vmul.f32 %v4097, 0.5
        %v4279 = vmul.f32 %v4099, 0.5
        %v4280 = vmul.f32 %v4210, 0.5
        %v4281 = vmul.f32 %v4212, 0.5
        %v4282 = vmul.f32 %v4101, 0.5
        %v4283 = vmul.f32 %v4103, 0.5
        %v4284 = vmul.f32 %v4214, 0.5
        %v4285 = vmul.f32 %v4216, 0.5
        %v4286 = vmul.f32 %v4107, 0.5
        %v4287 = vmul.f32 %v4109, 0.5
        %v4288 = vmul.f32 %v4220, 0.5
        %v4289 = vmul.f32 %v4222, 0.5
        %v4290 = vmul.f32 %v4111, 0.5
        %v4291 = vmul.f32 %v4113, 0.5
        %v4292 = vmul.f32 %v4224, 0.5
        %v4293 = vmul.f32 %v4226, 0.5
        %v4294 = vmul.f32 %v4117, 0.5
        %v4295 = vmul.f32 %v4119, 0.5
        %v4296 = vmul.f32 %v4230, 0.5
        %v4297 = vmul.f32 %v4232, 0.5
        %v4298 = vmul.f32 %v4121, 0.5
        %v4299 = vmul.f32 %v4123, 0.5
        %v4300 = vmul.f32 %v4234, 0.5
        %v4301 = vmul.f32 %v4236, 0.5
        %v4302 = vmul.f32 %v4047, 0.044715
        %v4303 = vmul.f32 %v4049, 0.044715
        %v4304 = vmul.f32 %v4160, 0.044715
        %v4305 = vmul.f32 %v4162, 0.044715
        %v4306 = vmul.f32 %v4051, 0.044715
        %v4307 = vmul.f32 %v4053, 0.044715
        %v4308 = vmul.f32 %v4164, 0.044715
        %v4309 = vmul.f32 %v4166, 0.044715
        %v4310 = vmul.f32 %v4057, 0.044715
        %v4311 = vmul.f32 %v4059, 0.044715
        %v4312 = vmul.f32 %v4170, 0.044715
        %v4313 = vmul.f32 %v4172, 0.044715
        %v4314 = vmul.f32 %v4061, 0.044715
        %v4315 = vmul.f32 %v4063, 0.044715
        %v4316 = vmul.f32 %v4174, 0.044715
        %v4317 = vmul.f32 %v4176, 0.044715
        %v4318 = vmul.f32 %v4067, 0.044715
        %v4319 = vmul.f32 %v4069, 0.044715
        %v4320 = vmul.f32 %v4180, 0.044715
        %v4321 = vmul.f32 %v4182, 0.044715
        %v4322 = vmul.f32 %v4071, 0.044715
        %v4323 = vmul.f32 %v4073, 0.044715
        %v4324 = vmul.f32 %v4184, 0.044715
        %v4325 = vmul.f32 %v4186, 0.044715
        %v4326 = vmul.f32 %v4077, 0.044715
        %v4327 = vmul.f32 %v4079, 0.044715
        %v4328 = vmul.f32 %v4190, 0.044715
        %v4329 = vmul.f32 %v4192, 0.044715
        %v4330 = vmul.f32 %v4081, 0.044715
        %v4331 = vmul.f32 %v4083, 0.044715
        %v4332 = vmul.f32 %v4194, 0.044715
        %v4333 = vmul.f32 %v4196, 0.044715
        %v4334 = vmul.f32 %v4087, 0.044715
        %v4335 = vmul.f32 %v4089, 0.044715
        %v4336 = vmul.f32 %v4200, 0.044715
        %v4337 = vmul.f32 %v4202, 0.044715
        %v4338 = vmul.f32 %v4091, 0.044715
        %v4339 = vmul.f32 %v4093, 0.044715
        %v4340 = vmul.f32 %v4204, 0.044715
        %v4341 = vmul.f32 %v4206, 0.044715
        %v4342 = vmul.f32 %v4097, 0.044715
        %v4343 = vmul.f32 %v4099, 0.044715
        %v4344 = vmul.f32 %v4210, 0.044715
        %v4345 = vmul.f32 %v4212, 0.044715
        %v4346 = vmul.f32 %v4101, 0.044715
        %v4347 = vmul.f32 %v4103, 0.044715
        %v4348 = vmul.f32 %v4214, 0.044715
        %v4349 = vmul.f32 %v4216, 0.044715
        %v4350 = vmul.f32 %v4107, 0.044715
        %v4351 = vmul.f32 %v4109, 0.044715
        %v4352 = vmul.f32 %v4220, 0.044715
        %v4353 = vmul.f32 %v4222, 0.044715
        %v4354 = vmul.f32 %v4111, 0.044715
        %v4355 = vmul.f32 %v4113, 0.044715
        %v4356 = vmul.f32 %v4224, 0.044715
        %v4357 = vmul.f32 %v4226, 0.044715
        %v4358 = vmul.f32 %v4117, 0.044715
        %v4359 = vmul.f32 %v4119, 0.044715
        %v4360 = vmul.f32 %v4230, 0.044715
        %v4361 = vmul.f32 %v4232, 0.044715
        %v4362 = vmul.f32 %v4121, 0.044715
        %v4363 = vmul.f32 %v4123, 0.044715
        %v4364 = vmul.f32 %v4234, 0.044715
        %v4365 = vmul.f32 %v4236, 0.044715
        %v4366 = vmul.f32 %v4302, %v4047
        %v4367 = vmul.f32 %v4303, %v4049
        %v4368 = vmul.f32 %v4304, %v4160
        %v4369 = vmul.f32 %v4305, %v4162
        %v4370 = vmul.f32 %v4306, %v4051
        %v4371 = vmul.f32 %v4307, %v4053
        %v4372 = vmul.f32 %v4308, %v4164
        %v4373 = vmul.f32 %v4309, %v4166
        %v4374 = vmul.f32 %v4310, %v4057
        %v4375 = vmul.f32 %v4311, %v4059
        %v4376 = vmul.f32 %v4312, %v4170
        %v4377 = vmul.f32 %v4313, %v4172
        %v4378 = vmul.f32 %v4314, %v4061
        %v4379 = vmul.f32 %v4315, %v4063
        %v4380 = vmul.f32 %v4316, %v4174
        %v4381 = vmul.f32 %v4317, %v4176
        %v4382 = vmul.f32 %v4318, %v4067
        %v4383 = vmul.f32 %v4319, %v4069
        %v4384 = vmul.f32 %v4320, %v4180
        %v4385 = vmul.f32 %v4321, %v4182
        %v4386 = vmul.f32 %v4322, %v4071
        %v4387 = vmul.f32 %v4323, %v4073
        %v4388 = vmul.f32 %v4324, %v4184
        %v4389 = vmul.f32 %v4325, %v4186
        %v4390 = vmul.f32 %v4326, %v4077
        %v4391 = vmul.f32 %v4327, %v4079
        %v4392 = vmul.f32 %v4328, %v4190
        %v4393 = vmul.f32 %v4329, %v4192
        %v4394 = vmul.f32 %v4330, %v4081
        %v4395 = vmul.f32 %v4331, %v4083
        %v4396 = vmul.f32 %v4332, %v4194
        %v4397 = vmul.f32 %v4333, %v4196
        %v4398 = vmul.f32 %v4334, %v4087
        %v4399 = vmul.f32 %v4335, %v4089
        %v4400 = vmul.f32 %v4336, %v4200
        %v4401 = vmul.f32 %v4337, %v4202
        %v4402 = vmul.f32 %v4338, %v4091
        %v4403 = vmul.f32 %v4339, %v4093
        %v4404 = vmul.f32 %v4340, %v4204
        %v4405 = vmul.f32 %v4341, %v4206
        %v4406 = vmul.f32 %v4342, %v4097
        %v4407 = vmul.f32 %v4343, %v4099
        %v4408 = vmul.f32 %v4344, %v4210
        %v4409 = vmul.f32 %v4345, %v4212
        %v4410 = vmul.f32 %v4346, %v4101
        %v4411 = vmul.f32 %v4347, %v4103
        %v4412 = vmul.f32 %v4348, %v4214
        %v4413 = vmul.f32 %v4349, %v4216
        %v4414 = vmul.f32 %v4350, %v4107
        %v4415 = vmul.f32 %v4351, %v4109
        %v4416 = vmul.f32 %v4352, %v4220
        %v4417 = vmul.f32 %v4353, %v4222
        %v4418 = vmul.f32 %v4354, %v4111
        %v4419 = vmul.f32 %v4355, %v4113
        %v4420 = vmul.f32 %v4356, %v4224
        %v4421 = vmul.f32 %v4357, %v4226
        %v4422 = vmul.f32 %v4358, %v4117
        %v4423 = vmul.f32 %v4359, %v4119
        %v4424 = vmul.f32 %v4360, %v4230
        %v4425 = vmul.f32 %v4361, %v4232
        %v4426 = vmul.f32 %v4362, %v4121
        %v4427 = vmul.f32 %v4363, %v4123
        %v4428 = vmul.f32 %v4364, %v4234
        %v4429 = vmul.f32 %v4365, %v4236
        %v4430 = vmul.f32 %v4366, %v4047
        %v4431 = vmul.f32 %v4367, %v4049
        %v4432 = vmul.f32 %v4368, %v4160
        %v4433 = vmul.f32 %v4369, %v4162
        %v4434 = vmul.f32 %v4370, %v4051
        %v4435 = vmul.f32 %v4371, %v4053
        %v4436 = vmul.f32 %v4372, %v4164
        %v4437 = vmul.f32 %v4373, %v4166
        %v4438 = vmul.f32 %v4374, %v4057
        %v4439 = vmul.f32 %v4375, %v4059
        %v4440 = vmul.f32 %v4376, %v4170
        %v4441 = vmul.f32 %v4377, %v4172
        %v4442 = vmul.f32 %v4378, %v4061
        %v4443 = vmul.f32 %v4379, %v4063
        %v4444 = vmul.f32 %v4380, %v4174
        %v4445 = vmul.f32 %v4381, %v4176
        %v4446 = vmul.f32 %v4382, %v4067
        %v4447 = vmul.f32 %v4383, %v4069
        %v4448 = vmul.f32 %v4384, %v4180
        %v4449 = vmul.f32 %v4385, %v4182
        %v4450 = vmul.f32 %v4386, %v4071
        %v4451 = vmul.f32 %v4387, %v4073
        %v4452 = vmul.f32 %v4388, %v4184
        %v4453 = vmul.f32 %v4389, %v4186
        %v4454 = vmul.f32 %v4390, %v4077
        %v4455 = vmul.f32 %v4391, %v4079
        %v4456 = vmul.f32 %v4392, %v4190
        %v4457 = vmul.f32 %v4393, %v4192
        %v4458 = vmul.f32 %v4394, %v4081
        %v4459 = vmul.f32 %v4395, %v4083
        %v4460 = vmul.f32 %v4396, %v4194
        %v4461 = vmul.f32 %v4397, %v4196
        %v4462 = vmul.f32 %v4398, %v4087
        %v4463 = vmul.f32 %v4399, %v4089
        %v4464 = vmul.f32 %v4400, %v4200
        %v4465 = vmul.f32 %v4401, %v4202
        %v4466 = vmul.f32 %v4402, %v4091
        %v4467 = vmul.f32 %v4403, %v4093
        %v4468 = vmul.f32 %v4404, %v4204
        %v4469 = vmul.f32 %v4405, %v4206
        %v4470 = vmul.f32 %v4406, %v4097
        %v4471 = vmul.f32 %v4407, %v4099
        %v4472 = vmul.f32 %v4408, %v4210
        %v4473 = vmul.f32 %v4409, %v4212
        %v4474 = vmul.f32 %v4410, %v4101
        %v4475 = vmul.f32 %v4411, %v4103
        %v4476 = vmul.f32 %v4412, %v4214
        %v4477 = vmul.f32 %v4413, %v4216
        %v4478 = vmul.f32 %v4414, %v4107
        %v4479 = vmul.f32 %v4415, %v4109
        %v4480 = vmul.f32 %v4416, %v4220
        %v4481 = vmul.f32 %v4417, %v4222
        %v4482 = vmul.f32 %v4418, %v4111
        %v4483 = vmul.f32 %v4419, %v4113
        %v4484 = vmul.f32 %v4420, %v4224
        %v4485 = vmul.f32 %v4421, %v4226
        %v4486 = vmul.f32 %v4422, %v4117
        %v4487 = vmul.f32 %v4423, %v4119
        %v4488 = vmul.f32 %v4424, %v4230
        %v4489 = vmul.f32 %v4425, %v4232
        %v4490 = vmul.f32 %v4426, %v4121
        %v4491 = vmul.f32 %v4427, %v4123
        %v4492 = vmul.f32 %v4428, %v4234
        %v4493 = vmul.f32 %v4429, %v4236
        %v4494 = vadd.f32 %v4047, %v4430
        %v4495 = vadd.f32 %v4049, %v4431
        %v4496 = vadd.f32 %v4160, %v4432
        %v4497 = vadd.f32 %v4162, %v4433
        %v4498 = vadd.f32 %v4051, %v4434
        %v4499 = vadd.f32 %v4053, %v4435
        %v4500 = vadd.f32 %v4164, %v4436
        %v4501 = vadd.f32 %v4166, %v4437
        %v4502 = vadd.f32 %v4057, %v4438
        %v4503 = vadd.f32 %v4059, %v4439
        %v4504 = vadd.f32 %v4170, %v4440
        %v4505 = vadd.f32 %v4172, %v4441
        %v4506 = vadd.f32 %v4061, %v4442
        %v4507 = vadd.f32 %v4063, %v4443
        %v4508 = vadd.f32 %v4174, %v4444
        %v4509 = vadd.f32 %v4176, %v4445
        %v4510 = vadd.f32 %v4067, %v4446
        %v4511 = vadd.f32 %v4069, %v4447
        %v4512 = vadd.f32 %v4180, %v4448
        %v4513 = vadd.f32 %v4182, %v4449
        %v4514 = vadd.f32 %v4071, %v4450
        %v4515 = vadd.f32 %v4073, %v4451
        %v4516 = vadd.f32 %v4184, %v4452
        %v4517 = vadd.f32 %v4186, %v4453
        %v4518 = vadd.f32 %v4077, %v4454
        %v4519 = vadd.f32 %v4079, %v4455
        %v4520 = vadd.f32 %v4190, %v4456
        %v4521 = vadd.f32 %v4192, %v4457
        %v4522 = vadd.f32 %v4081, %v4458
        %v4523 = vadd.f32 %v4083, %v4459
        %v4524 = vadd.f32 %v4194, %v4460
        %v4525 = vadd.f32 %v4196, %v4461
        %v4526 = vadd.f32 %v4087, %v4462
        %v4527 = vadd.f32 %v4089, %v4463
        %v4528 = vadd.f32 %v4200, %v4464
        %v4529 = vadd.f32 %v4202, %v4465
        %v4530 = vadd.f32 %v4091, %v4466
        %v4531 = vadd.f32 %v4093, %v4467
        %v4532 = vadd.f32 %v4204, %v4468
        %v4533 = vadd.f32 %v4206, %v4469
        %v4534 = vadd.f32 %v4097, %v4470
        %v4535 = vadd.f32 %v4099, %v4471
        %v4536 = vadd.f32 %v4210, %v4472
        %v4537 = vadd.f32 %v4212, %v4473
        %v4538 = vadd.f32 %v4101, %v4474
        %v4539 = vadd.f32 %v4103, %v4475
        %v4540 = vadd.f32 %v4214, %v4476
        %v4541 = vadd.f32 %v4216, %v4477
        %v4542 = vadd.f32 %v4107, %v4478
        %v4543 = vadd.f32 %v4109, %v4479
        %v4544 = vadd.f32 %v4220, %v4480
        %v4545 = vadd.f32 %v4222, %v4481
        %v4546 = vadd.f32 %v4111, %v4482
        %v4547 = vadd.f32 %v4113, %v4483
        %v4548 = vadd.f32 %v4224, %v4484
        %v4549 = vadd.f32 %v4226, %v4485
        %v4550 = vadd.f32 %v4117, %v4486
        %v4551 = vadd.f32 %v4119, %v4487
        %v4552 = vadd.f32 %v4230, %v4488
        %v4553 = vadd.f32 %v4232, %v4489
        %v4554 = vadd.f32 %v4121, %v4490
        %v4555 = vadd.f32 %v4123, %v4491
        %v4556 = vadd.f32 %v4234, %v4492
        %v4557 = vadd.f32 %v4236, %v4493
        %v4558 = vmul.f32 %v4494, 0.7978846
        %v4559 = vmul.f32 %v4495, 0.7978846
        %v4560 = vmul.f32 %v4496, 0.7978846
        %v4561 = vmul.f32 %v4497, 0.7978846
        %v4562 = vmul.f32 %v4498, 0.7978846
        %v4563 = vmul.f32 %v4499, 0.7978846
        %v4564 = vmul.f32 %v4500, 0.7978846
        %v4565 = vmul.f32 %v4501, 0.7978846
        %v4566 = vmul.f32 %v4502, 0.7978846
        %v4567 = vmul.f32 %v4503, 0.7978846
        %v4568 = vmul.f32 %v4504, 0.7978846
        %v4569 = vmul.f32 %v4505, 0.7978846
        %v4570 = vmul.f32 %v4506, 0.7978846
        %v4571 = vmul.f32 %v4507, 0.7978846
        %v4572 = vmul.f32 %v4508, 0.7978846
        %v4573 = vmul.f32 %v4509, 0.7978846
        %v4574 = vmul.f32 %v4510, 0.7978846
        %v4575 = vmul.f32 %v4511, 0.7978846
        %v4576 = vmul.f32 %v4512, 0.7978846
        %v4577 = vmul.f32 %v4513, 0.7978846
        %v4578 = vmul.f32 %v4514, 0.7978846
        %v4579 = vmul.f32 %v4515, 0.7978846
        %v4580 = vmul.f32 %v4516, 0.7978846
        %v4581 = vmul.f32 %v4517, 0.7978846
        %v4582 = vmul.f32 %v4518, 0.7978846
        %v4583 = vmul.f32 %v4519, 0.7978846
        %v4584 = vmul.f32 %v4520, 0.7978846
        %v4585 = vmul.f32 %v4521, 0.7978846
        %v4586 = vmul.f32 %v4522, 0.7978846
        %v4587 = vmul.f32 %v4523, 0.7978846
        %v4588 = vmul.f32 %v4524, 0.7978846
        %v4589 = vmul.f32 %v4525, 0.7978846
        %v4590 = vmul.f32 %v4526, 0.7978846
        %v4591 = vmul.f32 %v4527, 0.7978846
        %v4592 = vmul.f32 %v4528, 0.7978846
        %v4593 = vmul.f32 %v4529, 0.7978846
        %v4594 = vmul.f32 %v4530, 0.7978846
        %v4595 = vmul.f32 %v4531, 0.7978846
        %v4596 = vmul.f32 %v4532, 0.7978846
        %v4597 = vmul.f32 %v4533, 0.7978846
        %v4598 = vmul.f32 %v4534, 0.7978846
        %v4599 = vmul.f32 %v4535, 0.7978846
        %v4600 = vmul.f32 %v4536, 0.7978846
        %v4601 = vmul.f32 %v4537, 0.7978846
        %v4602 = vmul.f32 %v4538, 0.7978846
        %v4603 = vmul.f32 %v4539, 0.7978846
        %v4604 = vmul.f32 %v4540, 0.7978846
        %v4605 = vmul.f32 %v4541, 0.7978846
        %v4606 = vmul.f32 %v4542, 0.7978846
        %v4607 = vmul.f32 %v4543, 0.7978846
        %v4608 = vmul.f32 %v4544, 0.7978846
        %v4609 = vmul.f32 %v4545, 0.7978846
        %v4610 = vmul.f32 %v4546, 0.7978846
        %v4611 = vmul.f32 %v4547, 0.7978846
        %v4612 = vmul.f32 %v4548, 0.7978846
        %v4613 = vmul.f32 %v4549, 0.7978846
        %v4614 = vmul.f32 %v4550, 0.7978846
        %v4615 = vmul.f32 %v4551, 0.7978846
        %v4616 = vmul.f32 %v4552, 0.7978846
        %v4617 = vmul.f32 %v4553, 0.7978846
        %v4618 = vmul.f32 %v4554, 0.7978846
        %v4619 = vmul.f32 %v4555, 0.7978846
        %v4620 = vmul.f32 %v4556, 0.7978846
        %v4621 = vmul.f32 %v4557, 0.7978846
        %v4622 = vtanh.pop %v4558
        %v4623 = vtanh.pop %v4559
        %v4624 = vtanh.pop %v4560
        %v4625 = vtanh.pop %v4561
        %v4626 = vtanh.pop %v4562
        %v4627 = vtanh.pop %v4563
        %v4628 = vtanh.pop %v4564
        %v4629 = vtanh.pop %v4565
        %v4630 = vtanh.pop %v4566
        %v4631 = vtanh.pop %v4567
        %v4632 = vtanh.pop %v4568
        %v4633 = vtanh.pop %v4569
        %v4634 = vtanh.pop %v4570
        %v4635 = vtanh.pop %v4571
        %v4636 = vtanh.pop %v4572
        %v4637 = vtanh.pop %v4573
        %v4638 = vtanh.pop %v4574
        %v4639 = vtanh.pop %v4575
        %v4640 = vtanh.pop %v4576
        %v4641 = vtanh.pop %v4577
        %v4642 = vtanh.pop %v4578
        %v4643 = vtanh.pop %v4579
        %v4644 = vtanh.pop %v4580
        %v4645 = vtanh.pop %v4581
        %v4646 = vtanh.pop %v4582
        %v4647 = vtanh.pop %v4583
        %v4648 = vtanh.pop %v4584
        %v4649 = vtanh.pop %v4585
        %v4650 = vtanh.pop %v4586
        %v4651 = vtanh.pop %v4587
        %v4652 = vtanh.pop %v4588
        %v4653 = vtanh.pop %v4589
        %v4654 = vtanh.pop %v4590
        %v4655 = vtanh.pop %v4591
        %v4656 = vtanh.pop %v4592
        %v4657 = vtanh.pop %v4593
        %v4658 = vtanh.pop %v4594
        %v4659 = vtanh.pop %v4595
        %v4660 = vtanh.pop %v4596
        %v4661 = vtanh.pop %v4597
        %v4662 = vtanh.pop %v4598
        %v4663 = vtanh.pop %v4599
        %v4664 = vtanh.pop %v4600
        %v4665 = vtanh.pop %v4601
        %v4666 = vtanh.pop %v4602
        %v4667 = vtanh.pop %v4603
        %v4668 = vtanh.pop %v4604
        %v4669 = vtanh.pop %v4605
        %v4670 = vtanh.pop %v4606
        %v4671 = vtanh.pop %v4607
        %v4672 = vtanh.pop %v4608
        %v4673 = vtanh.pop %v4609
        %v4674 = vtanh.pop %v4610
        %v4675 = vtanh.pop %v4611
        %v4676 = vtanh.pop %v4612
        %v4677 = vtanh.pop %v4613
        %v4678 = vtanh.pop %v4614
        %v4679 = vtanh.pop %v4615
        %v4680 = vtanh.pop %v4616
        %v4681 = vtanh.pop %v4617
        %v4682 = vtanh.pop %v4618
        %v4683 = vtanh.pop %v4619
        %v4684 = vtanh.pop %v4620
        %v4685 = vtanh.pop %v4621
        %v4686 = vadd.f32 %v4622, 1.0
        %v4687 = vadd.f32 %v4623, 1.0
        %v4688 = vadd.f32 %v4624, 1.0
        %v4689 = vadd.f32 %v4625, 1.0
        %v4690 = vadd.f32 %v4626, 1.0
        %v4691 = vadd.f32 %v4627, 1.0
        %v4692 = vadd.f32 %v4628, 1.0
        %v4693 = vadd.f32 %v4629, 1.0
        %v4694 = vadd.f32 %v4630, 1.0
        %v4695 = vadd.f32 %v4631, 1.0
        %v4696 = vadd.f32 %v4632, 1.0
        %v4697 = vadd.f32 %v4633, 1.0
        %v4698 = vadd.f32 %v4634, 1.0
        %v4699 = vadd.f32 %v4635, 1.0
        %v4700 = vadd.f32 %v4636, 1.0
        %v4701 = vadd.f32 %v4637, 1.0
        %v4702 = vadd.f32 %v4638, 1.0
        %v4703 = vadd.f32 %v4639, 1.0
        %v4704 = vadd.f32 %v4640, 1.0
        %v4705 = vadd.f32 %v4641, 1.0
        %v4706 = vadd.f32 %v4642, 1.0
        %v4707 = vadd.f32 %v4643, 1.0
        %v4708 = vadd.f32 %v4644, 1.0
        %v4709 = vadd.f32 %v4645, 1.0
        %v4710 = vadd.f32 %v4646, 1.0
        %v4711 = vadd.f32 %v4647, 1.0
        %v4712 = vadd.f32 %v4648, 1.0
        %v4713 = vadd.f32 %v4649, 1.0
        %v4714 = vadd.f32 %v4650, 1.0
        %v4715 = vadd.f32 %v4651, 1.0
        %v4716 = vadd.f32 %v4652, 1.0
        %v4717 = vadd.f32 %v4653, 1.0
        %v4718 = vadd.f32 %v4654, 1.0
        %v4719 = vadd.f32 %v4655, 1.0
        %v4720 = vadd.f32 %v4656, 1.0
        %v4721 = vadd.f32 %v4657, 1.0
        %v4722 = vadd.f32 %v4658, 1.0
        %v4723 = vadd.f32 %v4659, 1.0
        %v4724 = vadd.f32 %v4660, 1.0
        %v4725 = vadd.f32 %v4661, 1.0
        %v4726 = vadd.f32 %v4662, 1.0
        %v4727 = vadd.f32 %v4663, 1.0
        %v4728 = vadd.f32 %v4664, 1.0
        %v4729 = vadd.f32 %v4665, 1.0
        %v4730 = vadd.f32 %v4666, 1.0
        %v4731 = vadd.f32 %v4667, 1.0
        %v4732 = vadd.f32 %v4668, 1.0
        %v4733 = vadd.f32 %v4669, 1.0
        %v4734 = vadd.f32 %v4670, 1.0
        %v4735 = vadd.f32 %v4671, 1.0
        %v4736 = vadd.f32 %v4672, 1.0
        %v4737 = vadd.f32 %v4673, 1.0
        %v4738 = vadd.f32 %v4674, 1.0
        %v4739 = vadd.f32 %v4675, 1.0
        %v4740 = vadd.f32 %v4676, 1.0
        %v4741 = vadd.f32 %v4677, 1.0
        %v4742 = vadd.f32 %v4678, 1.0
        %v4743 = vadd.f32 %v4679, 1.0
        %v4744 = vadd.f32 %v4680, 1.0
        %v4745 = vadd.f32 %v4681, 1.0
        %v4746 = vadd.f32 %v4682, 1.0
        %v4747 = vadd.f32 %v4683, 1.0
        %v4748 = vadd.f32 %v4684, 1.0
        %v4749 = vadd.f32 %v4685, 1.0
        %v4750 = vmul.f32 %v4238, %v4686
        %v4751 = vmul.f32 %v4239, %v4687
        %v4752 = vmul.f32 %v4240, %v4688
        %v4753 = vmul.f32 %v4241, %v4689
        %v4754 = vmul.f32 %v4242, %v4690
        %v4755 = vmul.f32 %v4243, %v4691
        %v4756 = vmul.f32 %v4244, %v4692
        %v4757 = vmul.f32 %v4245, %v4693
        %v4758 = vmul.f32 %v4246, %v4694
        %v4759 = vmul.f32 %v4247, %v4695
        %v4760 = vmul.f32 %v4248, %v4696
        %v4761 = vmul.f32 %v4249, %v4697
        %v4762 = vmul.f32 %v4250, %v4698
        %v4763 = vmul.f32 %v4251, %v4699
        %v4764 = vmul.f32 %v4252, %v4700
        %v4765 = vmul.f32 %v4253, %v4701
        %v4766 = vmul.f32 %v4254, %v4702
        %v4767 = vmul.f32 %v4255, %v4703
        %v4768 = vmul.f32 %v4256, %v4704
        %v4769 = vmul.f32 %v4257, %v4705
        %v4770 = vmul.f32 %v4258, %v4706
        %v4771 = vmul.f32 %v4259, %v4707
        %v4772 = vmul.f32 %v4260, %v4708
        %v4773 = vmul.f32 %v4261, %v4709
        %v4774 = vmul.f32 %v4262, %v4710
        %v4775 = vmul.f32 %v4263, %v4711
        %v4776 = vmul.f32 %v4264, %v4712
        %v4777 = vmul.f32 %v4265, %v4713
        %v4778 = vmul.f32 %v4266, %v4714
        %v4779 = vmul.f32 %v4267, %v4715
        %v4780 = vmul.f32 %v4268, %v4716
        %v4781 = vmul.f32 %v4269, %v4717
        %v4782 = vmul.f32 %v4270, %v4718
        %v4783 = vmul.f32 %v4271, %v4719
        %v4784 = vmul.f32 %v4272, %v4720
        %v4785 = vmul.f32 %v4273, %v4721
        %v4786 = vmul.f32 %v4274, %v4722
        %v4787 = vmul.f32 %v4275, %v4723
        %v4788 = vmul.f32 %v4276, %v4724
        %v4789 = vmul.f32 %v4277, %v4725
        %v4790 = vmul.f32 %v4278, %v4726
        %v4791 = vmul.f32 %v4279, %v4727
        %v4792 = vmul.f32 %v4280, %v4728
        %v4793 = vmul.f32 %v4281, %v4729
        %v4794 = vmul.f32 %v4282, %v4730
        %v4795 = vmul.f32 %v4283, %v4731
        %v4796 = vmul.f32 %v4284, %v4732
        %v4797 = vmul.f32 %v4285, %v4733
        %v4798 = vmul.f32 %v4286, %v4734
        %v4799 = vmul.f32 %v4287, %v4735
        %v4800 = vmul.f32 %v4288, %v4736
        %v4801 = vmul.f32 %v4289, %v4737
        %v4802 = vmul.f32 %v4290, %v4738
        %v4803 = vmul.f32 %v4291, %v4739
        %v4804 = vmul.f32 %v4292, %v4740
        %v4805 = vmul.f32 %v4293, %v4741
        %v4806 = vmul.f32 %v4294, %v4742
        %v4807 = vmul.f32 %v4295, %v4743
        %v4808 = vmul.f32 %v4296, %v4744
        %v4809 = vmul.f32 %v4297, %v4745
        %v4810 = vmul.f32 %v4298, %v4746
        %v4811 = vmul.f32 %v4299, %v4747
        %v4812 = vmul.f32 %v4300, %v4748
        %v4813 = vmul.f32 %v4301, %v4749
        %v4814 = vpack.c.bf16 %v4754, %v4750
        %v4815 = vpack.c.bf16 %v4755, %v4751
        %v4816 = vpack.c.bf16 %v4756, %v4752
        %v4817 = vpack.c.bf16 %v4757, %v4753
        %v4818 = vpack.c.bf16 %v4762, %v4758
        %v4819 = vpack.c.bf16 %v4763, %v4759
        %v4820 = vpack.c.bf16 %v4764, %v4760
        %v4821 = vpack.c.bf16 %v4765, %v4761
        %v4822 = vpack.c.bf16 %v4770, %v4766
        %v4823 = vpack.c.bf16 %v4771, %v4767
        %v4824 = vpack.c.bf16 %v4772, %v4768
        %v4825 = vpack.c.bf16 %v4773, %v4769
        %v4826 = vpack.c.bf16 %v4778, %v4774
        %v4827 = vpack.c.bf16 %v4779, %v4775
        %v4828 = vpack.c.bf16 %v4780, %v4776
        %v4829 = vpack.c.bf16 %v4781, %v4777
        %v4830 = vpack.c.bf16 %v4786, %v4782
        %v4831 = vpack.c.bf16 %v4787, %v4783
        %v4832 = vpack.c.bf16 %v4788, %v4784
        %v4833 = vpack.c.bf16 %v4789, %v4785
        %v4834 = vpack.c.bf16 %v4794, %v4790
        %v4835 = vpack.c.bf16 %v4795, %v4791
        %v4836 = vpack.c.bf16 %v4796, %v4792
        %v4837 = vpack.c.bf16 %v4797, %v4793
        %v4838 = vpack.c.bf16 %v4802, %v4798
        %v4839 = vpack.c.bf16 %v4803, %v4799
        %v4840 = vpack.c.bf16 %v4804, %v4800
        %v4841 = vpack.c.bf16 %v4805, %v4801
        %v4842 = vpack.c.bf16 %v4810, %v4806
        %v4843 = vpack.c.bf16 %v4811, %v4807
        %v4844 = vpack.c.bf16 %v4812, %v4808
        %v4845 = vpack.c.bf16 %v4813, %v4809
        %v4846 = vld [vmem:[#allocation10] sm:$0xf]
        %v4847 = vld [vmem:[#allocation10 + $0x4] sm:$0xf]
        %v4848 = vld [vmem:[#allocation10 + $0x8] sm:$0xf]
        %v4849 = vld [vmem:[#allocation10 + $0xc] sm:$0xf]
        %v4850 = vld [vmem:[#allocation10 + $0x10] sm:$0xf]
        %v4851 = vld [vmem:[#allocation10 + $0x14] sm:$0xf]
        %v4852 = vld [vmem:[#allocation10 + $0x18] sm:$0xf]
        %v4853 = vld [vmem:[#allocation10 + $0x1c] sm:$0xf]
        %v4854 = vld [vmem:[#allocation10 + $0x20] sm:$0xf]
        %v4855 = vld [vmem:[#allocation10 + $0x24] sm:$0xf]
        %v4856 = vld [vmem:[#allocation10 + $0x28] sm:$0xf]
        %v4857 = vld [vmem:[#allocation10 + $0x2c] sm:$0xf]
        %v4858 = vld [vmem:[#allocation10 + $0x30] sm:$0xf]
        %v4859 = vld [vmem:[#allocation10 + $0x34] sm:$0xf]
        %v4860 = vld [vmem:[#allocation10 + $0x38] sm:$0xf]
        %v4861 = vld [vmem:[#allocation10 + $0x3c] sm:$0xf]
        %v4862 = vld [vmem:[#allocation10 + $0x40] sm:$0xf]
        %v4863 = vld [vmem:[#allocation10 + $0x44] sm:$0xf]
        %v4864 = vld [vmem:[#allocation10 + $0x48] sm:$0xf]
        %v4865 = vld [vmem:[#allocation10 + $0x4c] sm:$0xf]
        %v4866 = vld [vmem:[#allocation10 + $0x50] sm:$0xf]
        %v4867 = vld [vmem:[#allocation10 + $0x54] sm:$0xf]
        %v4868 = vld [vmem:[#allocation10 + $0x58] sm:$0xf]
        %v4869 = vld [vmem:[#allocation10 + $0x5c] sm:$0xf]
        %v4870 = vld [vmem:[#allocation10 + $0x60] sm:$0xf]
        %v4871 = vld [vmem:[#allocation10 + $0x64] sm:$0xf]
        %v4872 = vld [vmem:[#allocation10 + $0x68] sm:$0xf]
        %v4873 = vld [vmem:[#allocation10 + $0x6c] sm:$0xf]
        %v4874 = vld [vmem:[#allocation10 + $0x70] sm:$0xf]
        %v4875 = vld [vmem:[#allocation10 + $0x74] sm:$0xf]
        %v4876 = vld [vmem:[#allocation10 + $0x78] sm:$0xf]
        %v4877 = vld [vmem:[#allocation10 + $0x7c] sm:$0xf]
        %v4878 = vld [vmem:[#allocation10 + $0x80] sm:$0xf]
        %v4879 = vld [vmem:[#allocation10 + $0x84] sm:$0xf]
        %v4880 = vld [vmem:[#allocation10 + $0x88] sm:$0xf]
        %v4881 = vld [vmem:[#allocation10 + $0x8c] sm:$0xf]
        %v4882 = vld [vmem:[#allocation10 + $0x90] sm:$0xf]
        %v4883 = vld [vmem:[#allocation10 + $0x94] sm:$0xf]
        %v4884 = vld [vmem:[#allocation10 + $0x98] sm:$0xf]
        %v4885 = vld [vmem:[#allocation10 + $0x9c] sm:$0xf]
        %v4886 = vld [vmem:[#allocation10 + $0xa0] sm:$0xf]
        %v4887 = vld [vmem:[#allocation10 + $0xa4] sm:$0xf]
        %v4888 = vld [vmem:[#allocation10 + $0xa8] sm:$0xf]
        %v4889 = vld [vmem:[#allocation10 + $0xac] sm:$0xf]
        %v4890 = vld [vmem:[#allocation10 + $0xb0] sm:$0xf]
        %v4891 = vld [vmem:[#allocation10 + $0xb4] sm:$0xf]
        %v4892 = vld [vmem:[#allocation10 + $0xb8] sm:$0xf]
        %v4893 = vld [vmem:[#allocation10 + $0xbc] sm:$0xf]
        %v4894 = vld [vmem:[#allocation10 + $0xc0] sm:$0xf]
        %v4895 = vld [vmem:[#allocation10 + $0xc4] sm:$0xf]
        %v4896 = vld [vmem:[#allocation10 + $0xc8] sm:$0xf]
        %v4897 = vld [vmem:[#allocation10 + $0xcc] sm:$0xf]
        %v4898 = vld [vmem:[#allocation10 + $0xd0] sm:$0xf]
        %v4899 = vld [vmem:[#allocation10 + $0xd4] sm:$0xf]
        %v4900 = vld [vmem:[#allocation10 + $0xd8] sm:$0xf]
        %v4901 = vld [vmem:[#allocation10 + $0xdc] sm:$0xf]
        %v4902 = vld [vmem:[#allocation10 + $0xe0] sm:$0xf]
        %v4903 = vld [vmem:[#allocation10 + $0xe4] sm:$0xf]
        %v4904 = vld [vmem:[#allocation10 + $0xe8] sm:$0xf]
        %v4905 = vld [vmem:[#allocation10 + $0xec] sm:$0xf]
        %v4906 = vld [vmem:[#allocation10 + $0xf0] sm:$0xf]
        %v4907 = vld [vmem:[#allocation10 + $0xf4] sm:$0xf]
        %v4908 = vld [vmem:[#allocation10 + $0xf8] sm:$0xf]
        %v4909 = vld [vmem:[#allocation10 + $0xfc] sm:$0xf]
        %v4910 = vld [vmem:[%s11] sm:$0x1]
        %v4912 = vlaneseq
        %v4913 = vshrl.u32 %v4912, 7
        %v4914 = vsub.s32 0, %v4913
        %v4915 = vrot.slane %v4910, %v4914
        %v4981 = vunpack.c.l.b16 %v4846
        %v4982 = vunpack.c.l.b16 %v4847
        %v4983 = vunpack.c.l.b16 %v4848
        %v4984 = vunpack.c.l.b16 %v4849
        %v4985 = vunpack.c.l.b16 %v4850
        %v4986 = vunpack.c.l.b16 %v4851
        %v4987 = vunpack.c.l.b16 %v4852
        %v4988 = vunpack.c.l.b16 %v4853
        %v4989 = vunpack.c.l.b16 %v4854
        %v4990 = vunpack.c.l.b16 %v4855
        %v4991 = vunpack.c.l.b16 %v4856
        %v4992 = vunpack.c.l.b16 %v4857
        %v4993 = vunpack.c.l.b16 %v4858
        %v4994 = vunpack.c.l.b16 %v4859
        %v4995 = vunpack.c.l.b16 %v4860
        %v4996 = vunpack.c.l.b16 %v4861
        %v4997 = vunpack.c.l.b16 %v4862
        %v4998 = vunpack.c.l.b16 %v4863
        %v4999 = vunpack.c.l.b16 %v4864
        %v5000 = vunpack.c.l.b16 %v4865
        %v5001 = vunpack.c.l.b16 %v4866
        %v5002 = vunpack.c.l.b16 %v4867
        %v5003 = vunpack.c.l.b16 %v4868
        %v5004 = vunpack.c.l.b16 %v4869
        %v5005 = vunpack.c.l.b16 %v4870
        %v5006 = vunpack.c.l.b16 %v4871
        %v5007 = vunpack.c.l.b16 %v4872
        %v5008 = vunpack.c.l.b16 %v4873
        %v5009 = vunpack.c.l.b16 %v4874
        %v5010 = vunpack.c.l.b16 %v4875
        %v5011 = vunpack.c.l.b16 %v4876
        %v5012 = vunpack.c.l.b16 %v4877
        %v5013 = vunpack.c.l.b16 %v4878
        %v5014 = vunpack.c.l.b16 %v4879
        %v5015 = vunpack.c.l.b16 %v4880
        %v5016 = vunpack.c.l.b16 %v4881
        %v5017 = vunpack.c.l.b16 %v4882
        %v5018 = vunpack.c.l.b16 %v4883
        %v5019 = vunpack.c.l.b16 %v4884
        %v5020 = vunpack.c.l.b16 %v4885
        %v5021 = vunpack.c.l.b16 %v4886
        %v5022 = vunpack.c.l.b16 %v4887
        %v5023 = vunpack.c.l.b16 %v4888
        %v5024 = vunpack.c.l.b16 %v4889
        %v5025 = vunpack.c.l.b16 %v4890
        %v5026 = vunpack.c.l.b16 %v4891
        %v5027 = vunpack.c.l.b16 %v4892
        %v5028 = vunpack.c.l.b16 %v4893
        %v5029 = vunpack.c.l.b16 %v4894
        %v5030 = vunpack.c.l.b16 %v4895
        %v5031 = vunpack.c.l.b16 %v4896
        %v5032 = vunpack.c.l.b16 %v4897
        %v5033 = vunpack.c.l.b16 %v4898
        %v5034 = vunpack.c.l.b16 %v4899
        %v5035 = vunpack.c.l.b16 %v4900
        %v5036 = vunpack.c.l.b16 %v4901
        %v5037 = vunpack.c.l.b16 %v4902
        %v5038 = vunpack.c.l.b16 %v4903
        %v5039 = vunpack.c.l.b16 %v4904
        %v5040 = vunpack.c.l.b16 %v4905
        %v5041 = vunpack.c.l.b16 %v4906
        %v5042 = vunpack.c.l.b16 %v4907
        %v5043 = vunpack.c.l.b16 %v4908
        %v5044 = vunpack.c.l.b16 %v4909
        %v5045 = vpack.c.b16 %v4982, %v4981
        %v5046 = vpack.c.b16 %v4984, %v4983
        %v5047 = vpack.c.b16 %v4986, %v4985
        %v5048 = vpack.c.b16 %v4988, %v4987
        %v5049 = vpack.c.b16 %v4990, %v4989
        %v5050 = vpack.c.b16 %v4992, %v4991
        %v5051 = vpack.c.b16 %v4994, %v4993
        %v5052 = vpack.c.b16 %v4996, %v4995
        %v5053 = vpack.c.b16 %v4998, %v4997
        %v5054 = vpack.c.b16 %v5000, %v4999
        %v5055 = vpack.c.b16 %v5002, %v5001
        %v5056 = vpack.c.b16 %v5004, %v5003
        %v5057 = vpack.c.b16 %v5006, %v5005
        %v5058 = vpack.c.b16 %v5008, %v5007
        %v5059 = vpack.c.b16 %v5010, %v5009
        %v5060 = vpack.c.b16 %v5012, %v5011
        %v5061 = vpack.c.b16 %v5014, %v5013
        %v5062 = vpack.c.b16 %v5016, %v5015
        %v5063 = vpack.c.b16 %v5018, %v5017
        %v5064 = vpack.c.b16 %v5020, %v5019
        %v5065 = vpack.c.b16 %v5022, %v5021
        %v5066 = vpack.c.b16 %v5024, %v5023
        %v5067 = vpack.c.b16 %v5026, %v5025
        %v5068 = vpack.c.b16 %v5028, %v5027
        %v5069 = vpack.c.b16 %v5030, %v5029
        %v5070 = vpack.c.b16 %v5032, %v5031
        %v5071 = vpack.c.b16 %v5034, %v5033
        %v5072 = vpack.c.b16 %v5036, %v5035
        %v5073 = vpack.c.b16 %v5038, %v5037
        %v5074 = vpack.c.b16 %v5040, %v5039
        %v5075 = vpack.c.b16 %v5042, %v5041
        %v5076 = vpack.c.b16 %v5044, %v5043
        %5109 = vmatprep.subr.bf16.mxu0 0
        %5110 = vmatpush1.bf16.msra.mxu0 %v5052
        %5111 = vmatprep.subr.bf16.mxu0 0
        %5112 = vmatpush1.bf16.msra.mxu0 %v5051
        %5113 = vmatprep.subr.bf16.mxu0 0
        %5114 = vmatpush1.bf16.msra.mxu0 %v5050
        %5115 = vmatprep.subr.bf16.mxu0 0
        %5116 = vmatpush1.bf16.msra.mxu0 %v5049
        %5117 = vmatprep.subr.bf16.mxu0 0
        %5118 = vmatpush1.bf16.msra.mxu0 %v5048
        %5119 = vmatprep.subr.bf16.mxu0 0
        %5120 = vmatpush1.bf16.msra.mxu0 %v5047
        %5121 = vmatprep.subr.bf16.mxu0 0
        %5122 = vmatpush1.bf16.msra.mxu0 %v5046
        %5123 = vmatprep.subr.bf16.mxu0 0
        %5124 = vmatpush1.bf16.msra.mxu0 %v5045
        %5125 = vmatprep.subr.bf16.mxu0 0
        %5126 = vmatpush2.bf16.msra.mxu0 %v5060
        %5127 = vmatprep.subr.bf16.mxu0 0
        %5128 = vmatpush2.bf16.msra.mxu0 %v5059
        %5129 = vmatprep.subr.bf16.mxu0 0
        %5130 = vmatpush2.bf16.msra.mxu0 %v5058
        %5131 = vmatprep.subr.bf16.mxu0 0
        %5132 = vmatpush2.bf16.msra.mxu0 %v5057
        %5133 = vmatprep.subr.bf16.mxu0 0
        %5134 = vmatpush2.bf16.msra.mxu0 %v5056
        %5135 = vmatprep.subr.bf16.mxu0 0
        %5136 = vmatpush2.bf16.msra.mxu0 %v5055
        %5137 = vmatprep.subr.bf16.mxu0 0
        %5138 = vmatpush2.bf16.msra.mxu0 %v5054
        %5139 = vmatprep.subr.bf16.mxu0 0
        %5140 = vmatpush2.bf16.msra.mxu0 %v5053
        %5141 = vmatprep.mubr.bf16.mxu0 %v4815
        %5142 = vmatmul.mubr.bf16.gmra.mxu0 %v4814
        %v5143 = vpop.f32.mrf.mxu0
        %v5144 = vadd.f32 %v4915, %v5143
        %v5145 = vpop.f32.mrf.mxu0
        %v5146 = vpop.f32.mrf.mxu0
        %v5147 = vadd.f32 %v4915, %v5146
        %v5148 = vpop.f32.mrf.mxu0
        %5149 = vmatprep.mubr.bf16.mxu0 %v4819
        %5150 = vmatmul.mubr.bf16.gmra.mxu0 %v4818
        %v5151 = vpop.f32.mrf.mxu0
        %v5152 = vadd.f32 %v4915, %v5151
        %v5153 = vpop.f32.mrf.mxu0
        %v5154 = vpop.f32.mrf.mxu0
        %v5155 = vadd.f32 %v4915, %v5154
        %v5156 = vpop.f32.mrf.mxu0
        %5157 = vmatprep.mubr.bf16.mxu0 %v4823
        %5158 = vmatmul.mubr.bf16.gmra.mxu0 %v4822
        %v5159 = vpop.f32.mrf.mxu0
        %v5160 = vadd.f32 %v4915, %v5159
        %v5161 = vpop.f32.mrf.mxu0
        %v5162 = vpop.f32.mrf.mxu0
        %v5163 = vadd.f32 %v4915, %v5162
        %v5164 = vpop.f32.mrf.mxu0
        %5165 = vmatprep.mubr.bf16.mxu0 %v4827
        %5166 = vmatmul.mubr.bf16.gmra.mxu0 %v4826
        %v5167 = vpop.f32.mrf.mxu0
        %v5168 = vadd.f32 %v4915, %v5167
        %v5169 = vpop.f32.mrf.mxu0
        %v5170 = vpop.f32.mrf.mxu0
        %v5171 = vadd.f32 %v4915, %v5170
        %v5172 = vpop.f32.mrf.mxu0
        %5173 = vmatprep.mubr.bf16.mxu0 %v4831
        %5174 = vmatmul.mubr.bf16.gmra.mxu0 %v4830
        %v5175 = vpop.f32.mrf.mxu0
        %v5176 = vadd.f32 %v4915, %v5175
        %v5177 = vpop.f32.mrf.mxu0
        %v5178 = vpop.f32.mrf.mxu0
        %v5179 = vadd.f32 %v4915, %v5178
        %v5180 = vpop.f32.mrf.mxu0
        %5181 = vmatprep.mubr.bf16.mxu0 %v4835
        %5182 = vmatmul.mubr.bf16.gmra.mxu0 %v4834
        %v5183 = vpop.f32.mrf.mxu0
        %v5184 = vadd.f32 %v4915, %v5183
        %v5185 = vpop.f32.mrf.mxu0
        %v5186 = vpop.f32.mrf.mxu0
        %v5187 = vadd.f32 %v4915, %v5186
        %v5188 = vpop.f32.mrf.mxu0
        %5189 = vmatprep.mubr.bf16.mxu0 %v4839
        %5190 = vmatmul.mubr.bf16.gmra.mxu0 %v4838
        %v5191 = vpop.f32.mrf.mxu0
        %v5192 = vadd.f32 %v4915, %v5191
        %v5193 = vpop.f32.mrf.mxu0
        %v5194 = vpop.f32.mrf.mxu0
        %v5195 = vadd.f32 %v4915, %v5194
        %v5196 = vpop.f32.mrf.mxu0
        %5197 = vmatprep.mubr.bf16.mxu0 %v4843
        %5198 = vmatmul.mubr.bf16.gmra.mxu0 %v4842
        %v5199 = vpop.f32.mrf.mxu0
        %v5200 = vadd.f32 %v4915, %v5199
        %v5201 = vpop.f32.mrf.mxu0
        %v5202 = vpop.f32.mrf.mxu0
        %v5203 = vadd.f32 %v4915, %v5202
        %v5204 = vpop.f32.mrf.mxu0
        %5205 = vdwg.mxu0
        %5206 = vmatprep.subr.bf16.mxu0 0
        %5207 = vmatpush1.bf16.msra.mxu0 %v5068
        %5208 = vmatprep.subr.bf16.mxu0 0
        %5209 = vmatpush1.bf16.msra.mxu0 %v5067
        %5210 = vmatprep.subr.bf16.mxu0 0
        %5211 = vmatpush1.bf16.msra.mxu0 %v5066
        %5212 = vmatprep.subr.bf16.mxu0 0
        %5213 = vmatpush1.bf16.msra.mxu0 %v5065
        %5214 = vmatprep.subr.bf16.mxu0 0
        %5215 = vmatpush1.bf16.msra.mxu0 %v5064
        %5216 = vmatprep.subr.bf16.mxu0 0
        %5217 = vmatpush1.bf16.msra.mxu0 %v5063
        %5218 = vmatprep.subr.bf16.mxu0 0
        %5219 = vmatpush1.bf16.msra.mxu0 %v5062
        %5220 = vmatprep.subr.bf16.mxu0 0
        %5221 = vmatpush1.bf16.msra.mxu0 %v5061
        %5222 = vmatprep.subr.bf16.mxu0 0
        %5223 = vmatpush2.bf16.msra.mxu0 %v5076
        %5224 = vmatprep.subr.bf16.mxu0 0
        %5225 = vmatpush2.bf16.msra.mxu0 %v5075
        %5226 = vmatprep.subr.bf16.mxu0 0
        %5227 = vmatpush2.bf16.msra.mxu0 %v5074
        %5228 = vmatprep.subr.bf16.mxu0 0
        %5229 = vmatpush2.bf16.msra.mxu0 %v5073
        %5230 = vmatprep.subr.bf16.mxu0 0
        %5231 = vmatpush2.bf16.msra.mxu0 %v5072
        %5232 = vmatprep.subr.bf16.mxu0 0
        %5233 = vmatpush2.bf16.msra.mxu0 %v5071
        %5234 = vmatprep.subr.bf16.mxu0 0
        %5235 = vmatpush2.bf16.msra.mxu0 %v5070
        %5236 = vmatprep.subr.bf16.mxu0 0
        %5237 = vmatpush2.bf16.msra.mxu0 %v5069
        %5238 = vmatprep.mubr.bf16.mxu0 %v4817
        %5239 = vmatmul.mubr.bf16.gmra.mxu0 %v4816
        %v5240 = vpop.f32.mrf.mxu0
        %v5241 = vadd.f32 %v5144, %v5240
        %v5242 = vpop.f32.mrf.mxu0
        %v5243 = vpop.f32.mrf.mxu0
        %v5244 = vadd.f32 %v5147, %v5243
        %v5245 = vpop.f32.mrf.mxu0
        %5246 = vmatprep.mubr.bf16.mxu0 %v4821
        %5247 = vmatmul.mubr.bf16.gmra.mxu0 %v4820
        %v5248 = vpop.f32.mrf.mxu0
        %v5249 = vadd.f32 %v5152, %v5248
        %v5250 = vpop.f32.mrf.mxu0
        %v5251 = vpop.f32.mrf.mxu0
        %v5252 = vadd.f32 %v5155, %v5251
        %v5253 = vpop.f32.mrf.mxu0
        %5254 = vmatprep.mubr.bf16.mxu0 %v4825
        %5255 = vmatmul.mubr.bf16.gmra.mxu0 %v4824
        %v5256 = vpop.f32.mrf.mxu0
        %v5257 = vadd.f32 %v5160, %v5256
        %v5258 = vpop.f32.mrf.mxu0
        %v5259 = vpop.f32.mrf.mxu0
        %v5260 = vadd.f32 %v5163, %v5259
        %v5261 = vpop.f32.mrf.mxu0
        %5262 = vmatprep.mubr.bf16.mxu0 %v4829
        %5263 = vmatmul.mubr.bf16.gmra.mxu0 %v4828
        %v5264 = vpop.f32.mrf.mxu0
        %v5265 = vadd.f32 %v5168, %v5264
        %v5266 = vpop.f32.mrf.mxu0
        %v5267 = vpop.f32.mrf.mxu0
        %v5268 = vadd.f32 %v5171, %v5267
        %v5269 = vpop.f32.mrf.mxu0
        %5270 = vmatprep.mubr.bf16.mxu0 %v4833
        %5271 = vmatmul.mubr.bf16.gmra.mxu0 %v4832
        %v5272 = vpop.f32.mrf.mxu0
        %v5273 = vadd.f32 %v5176, %v5272
        %v5274 = vpop.f32.mrf.mxu0
        %v5275 = vpop.f32.mrf.mxu0
        %v5276 = vadd.f32 %v5179, %v5275
        %v5277 = vpop.f32.mrf.mxu0
        %5278 = vmatprep.mubr.bf16.mxu0 %v4837
        %5279 = vmatmul.mubr.bf16.gmra.mxu0 %v4836
        %v5280 = vpop.f32.mrf.mxu0
        %v5281 = vadd.f32 %v5184, %v5280
        %v5282 = vpop.f32.mrf.mxu0
        %v5283 = vpop.f32.mrf.mxu0
        %v5284 = vadd.f32 %v5187, %v5283
        %v5285 = vpop.f32.mrf.mxu0
        %5286 = vmatprep.mubr.bf16.mxu0 %v4841
        %5287 = vmatmul.mubr.bf16.gmra.mxu0 %v4840
        %v5288 = vpop.f32.mrf.mxu0
        %v5289 = vadd.f32 %v5192, %v5288
        %v5290 = vpop.f32.mrf.mxu0
        %v5291 = vpop.f32.mrf.mxu0
        %v5292 = vadd.f32 %v5195, %v5291
        %v5293 = vpop.f32.mrf.mxu0
        %5294 = vmatprep.mubr.bf16.mxu0 %v4845
        %5295 = vmatmul.mubr.bf16.gmra.mxu0 %v4844
        %v5296 = vpop.f32.mrf.mxu0
        %v5297 = vadd.f32 %v5200, %v5296
        %v5298 = vpop.f32.mrf.mxu0
        %v5299 = vpop.f32.mrf.mxu0
        %v5300 = vadd.f32 %v5203, %v5299
        %v5301 = vpop.f32.mrf.mxu0
        %5302 = vdwg.mxu0
        %v5303 = vadd.f32 %v3552, %v5241
        %v5304 = vadd.f32 %v3553, %v5244
        %v5305 = vadd.f32 %v3554, %v5249
        %v5306 = vadd.f32 %v3555, %v5252
        %v5307 = vadd.f32 %v3556, %v5257
        %v5308 = vadd.f32 %v3557, %v5260
        %v5309 = vadd.f32 %v3558, %v5265
        %v5310 = vadd.f32 %v3559, %v5268
        %v5311 = vadd.f32 %v3560, %v5273
        %v5312 = vadd.f32 %v3561, %v5276
        %v5313 = vadd.f32 %v3562, %v5281
        %v5314 = vadd.f32 %v3563, %v5284
        %v5315 = vadd.f32 %v3564, %v5289
        %v5316 = vadd.f32 %v3565, %v5292
        %v5317 = vadd.f32 %v3566, %v5297
        %v5318 = vadd.f32 %v3567, %v5300
        %5319 = vst [vmem:[%s489] sm:$0xff] %v5303
        %5320 = vst [vmem:[%s489 + $0x8] sm:$0xff] %v5304
        %5321 = vst [vmem:[%s489 + $0x10] sm:$0xff] %v5305
        %5322 = vst [vmem:[%s489 + $0x18] sm:$0xff] %v5306
        %5323 = vst [vmem:[%s489 + $0x20] sm:$0xff] %v5307
        %5324 = vst [vmem:[%s489 + $0x28] sm:$0xff] %v5308
        %5325 = vst [vmem:[%s489 + $0x30] sm:$0xff] %v5309
        %5326 = vst [vmem:[%s489 + $0x38] sm:$0xff] %v5310
        %5327 = vst [vmem:[%s489 + $0x40] sm:$0xff] %v5311
        %5328 = vst [vmem:[%s489 + $0x48] sm:$0xff] %v5312
        %5329 = vst [vmem:[%s489 + $0x50] sm:$0xff] %v5313
        %5330 = vst [vmem:[%s489 + $0x58] sm:$0xff] %v5314
        %5331 = vst [vmem:[%s489 + $0x60] sm:$0xff] %v5315
        %5332 = vst [vmem:[%s489 + $0x68] sm:$0xff] %v5316
        %5333 = vst [vmem:[%s489 + $0x70] sm:$0xff] %v5317
        %5334 = vst [vmem:[%s489 + $0x78] sm:$0xff] %v5318
        %s5335 = sand.u32 %s296, 1
        %s5336 = scalar_lea.sflag [#allocation4], %s5335
        %s5337 = sand.u32 %s296, 1
        %s5338 = smul.addr %s5337, 128
        %s5339 = scalar_lea.vmem [#allocation11], %s5338
        // Predicated region
        $region89: #{tpu_custom_call.1} parent=67 // pred_check
          %p5340 = pneg %p306
        $region90: #{tpu_custom_call.1} parent=67 // pred_check_branch
          %5342 = sbr.rel (%p5340) target = $region92
        $region91: #{tpu_custom_call.1} parent=67 // pred_region
          %s5344 = ssub.s32 2048, 2048
          %5345 = vsyncadd %s5336, %s5344
          %s5346 = smul.addr %s31, 16
          %s5347 = smul.addr %s5346, 128
          %s5348 = scalar_lea.hbm %s12, %s5347
          %s5349 = sshll.u32 %s5339, 4
          %s5350 = int_to_ptr.vmem [resolvable:$true] %s5349
          %5355 = dma.vmem_to_hbm [thread:$0]  %s5350, 2048, %s5348, %s5336, 128, 128, 8
        $region92: #{tpu_custom_call.1} parent=67 // pred_fallthru
          _
      $region68: #{tpu_custom_call.1} parent=5 // pred_fallthru
        _
      %p5356 = scmp.le.s32.totalorder 2, %s26
      // Predicated region
      $region93: #{tpu_custom_call.1} parent=5 // pred_check
        %p5357 = pneg %p5356
      $region94: #{tpu_custom_call.1} parent=5 // pred_check_branch
        %5359 = sbr.rel (%p5357) target = $region96
      $region95: #{tpu_custom_call.1} parent=5 // pred_region
        %s5360 = ssub.s32 %s26, 2
        // Predicated region
        $region97: #{tpu_custom_call.1} parent=95 // pred_check
          %p5361 = pneg %p312
        $region98: #{tpu_custom_call.1} parent=95 // pred_check_branch
          %5363 = sbr.rel (%p5361) target = $region100
        $region99: #{tpu_custom_call.1} parent=95 // pred_region
          %s5364 = sand.u32 %s297, 1
          %s5365 = scalar_lea.sflag [#allocation4], %s5364
          %s5366 = sand.u32 %s297, 1
          %s5367 = smul.addr %s5366, 128
          %s5368 = scalar_lea.vmem [#allocation11], %s5367
          %5369 = dma.done %s5365, 2048
        $region100: #{tpu_custom_call.1} parent=95 // pred_fallthru
          _
      $region96: #{tpu_custom_call.1} parent=5 // pred_fallthru
        _
    $region6: #{tpu_custom_call.1} parent=1 // loop_footer
      %s30 = sadd.s32 1, %s26
    $region7: #{tpu_custom_call.1} parent=1 // loop_footer_branch
      %25 = sbr.rel target = $region3
    $region8: #{tpu_custom_call.1} parent=1 // loop_exit
      _
    %5370 = vsyncpa [#allocation3], 1
    %s5371 = scalar_lea.sflag [#allocation3], 1
    %5372 = vsyncpa %s5371, 1
    %5373 = vsyncpa [#allocation6], 1
    %5374 = vsyncpa [#allocation9], 1
    %5375 = vsyncpa [#allocation4], 1
    %s5376 = scalar_lea.sflag [#allocation4], 1
    %5377 = vsyncpa %s5376, 1

</llo_original>
